<compile_context>
chip_gen: v6e
topology: v6e:2x2x1
jax: 0.10.0
libtpu: 0.0.40
codegen_flags: <defaults>
</compile_context>

<pallas_src>
from functools import partial

import jax
import jax.numpy as jnp
from jax import lax
from jax.experimental import pallas as pl
from jax.experimental.pallas import tpu as pltpu


def _sigmoid(v):
    return 1.0 / (1.0 + jnp.exp(-v))


# --------------------------- packed-weight layout -----------------------------

def _round8(n):
    return (n + 7) // 8 * 8


def _pack_layout(cfg):
    m, Ck = cfg["d_int"], cfg["CNN_kernel"]
    hidC, hidR, hidS = cfg["hidCNN"], cfg["hidRNN"], cfg["hidSkip"]
    skip, d_out = cfg["skip"], cfg["d_out"]
    entries = [
        ("w_conv2", Ck * m, hidC),            # im2col conv weight
        ("b_conv", 1, hidC),
        ("w_ih1", hidC, 3 * hidR),            # GRU1 fused input-gate weight
        ("b_gi1", 1, 3 * hidR),               # b_ih + [b_hr, b_hz, 0] (folded)
        ("b_hn1", 1, hidR),                   # stays inside r ⊙ (·)
        ("w_hr1", hidR, hidR),                # per-gate hidden weights (lane-aligned)
        ("w_hz1", hidR, hidR),
        ("w_hn1", hidR, hidR),
        ("w_ihs", hidC, 3 * hidS),            # skip-GRU
        ("b_gis", 1, 3 * hidS),
        ("b_hns", 1, hidS),
        ("w_hrs", hidS, hidS),
        ("w_hzs", hidS, hidS),
        ("w_hns", hidS, hidS),
        ("w_lin", hidR + skip * hidS, d_out),
        ("b_lin", 1, d_out),
    ]
    offs, r, width = {}, 0, 0
    for name, nr, nc in entries:
        offs[name] = (r, nr, nc)
        r += _round8(nr)                      # 8-aligned row offsets: free static slices
        width = max(width, nc)
    return offs, _round8(r), width


def pack_params(params, cfg):
    """Wrapper-side, one-time weight packing (layout only, zero runtime cost)."""
    m, Ck = cfg["d_int"], cfg["CNN_kernel"]
    hidC, hidR, hidS = cfg["hidCNN"], cfg["hidRNN"], cfg["hidSkip"]
    hw = cfg["highway_window"]
    offs, rows, width = _pack_layout(cfg)

    def split_hh(w, hid):
        return w[:, :hid], w[:, hid:2 * hid], w[:, 2 * hid:]

    w_hr1, w_hz1, w_hn1 = split_hh(params["w_hh1"], hidR)
    w_hrs, w_hzs, w_hns = split_hh(params["w_hhs"], hidS)
    # fold b_ih and the r/z hidden-side biases into the gi precompute
    b_gi1 = params["b_ih1"] + jnp.concatenate(
        [params["b_hh1"][:, :2 * hidR], jnp.zeros((1, hidR), jnp.float32)], axis=1)
    b_gis = params["b_ihs"] + jnp.concatenate(
        [params["b_hhs"][:, :2 * hidS], jnp.zeros((1, hidS), jnp.float32)], axis=1)

    pieces = dict(
        w_conv2=params["w_conv"].reshape(Ck * m, hidC),
        b_conv=params["b_conv"],
        w_ih1=params["w_ih1"], b_gi1=b_gi1, b_hn1=params["b_hh1"][:, 2 * hidR:],
        w_hr1=w_hr1, w_hz1=w_hz1, w_hn1=w_hn1,
        w_ihs=params["w_ihs"], b_gis=b_gis, b_hns=params["b_hhs"][:, 2 * hidS:],
        w_hrs=w_hrs, w_hzs=w_hzs, w_hns=w_hns,
        w_lin=params["w_lin"], b_lin=params["b_lin"],
    )
    buf = jnp.zeros((rows, width), jnp.float32)
    for name, (r0, nr, nc) in offs.items():
        buf = buf.at[r0:r0 + nr, 0:nc].set(jnp.asarray(pieces[name], jnp.float32))

    if hw > 0:
        hwp = jnp.concatenate([params["w_hw"][0], params["b_hw"][0]]).astype(jnp.float32)
    else:
        hwp = jnp.zeros((1,), jnp.float32)
    return buf, hwp


# ------------------------------- Pallas kernel --------------------------------

def _lstnet_kernel(xc_ref, x_ref, w_ref, hwp_ref, out_ref, *,
                   B, P, T, m, hidR, hidS, skip, pt, hw, offs, out_act):
    f32 = jnp.float32

    def wslab(name):
        r0, nr, nc = offs[name]
        return w_ref[r0:r0 + nr, 0:nc]        # static, 8-aligned slice of packed buffer

    # ---- Conv2d(1,hidC,(Ck,m)) + ReLU as one im2col matmul --------------------
    # xc rows are time-major (row = t*B + b); c: [T*B, hidC]
    c = jnp.maximum(
        jnp.dot(xc_ref[...], wslab("w_conv2"), preferred_element_type=f32)
        + wslab("b_conv"), 0.0)
    # dropout: identity (inference mode)

    def run_gru(seq, rows, hid, names, n_steps):
        # PyTorch GRU cell, gate order (r, z, n).  Input-side gate pre-activations
        # (incl. b_ih + b_hr/b_hz) are one fused matmul outside the recurrence.
        wih, bgi, bhn, whr, whz, whn = (wslab(n) for n in names)
        gi = jnp.dot(seq, wih, preferred_element_type=f32) + bgi     # [steps*rows, 3*hid]
        gi_r, gi_z, gi_n = gi[:, :hid], gi[:, hid:2 * hid], gi[:, 2 * hid:3 * hid]
        bhn_b = bhn + jnp.zeros((rows, hid), f32)     # broadcast hoisted out of the loop
        h = jnp.zeros((rows, hid), f32)
        for s in range(n_steps):
            lo = s * rows
            gr = jnp.dot(h, whr, preferred_element_type=f32)   # lane-aligned per-gate dots
            gz = jnp.dot(h, whz, preferred_element_type=f32)
            gn = jnp.dot(h, whn, preferred_element_type=f32)
            r = _sigmoid(gi_r[lo:lo + rows, :] + gr)
            z = _sigmoid(gi_z[lo:lo + rows, :] + gz)
            n = jnp.tanh(gi_n[lo:lo + rows, :] + r * (gn + bhn_b))
            h = (1.0 - z) * n + z * h
        return h

    # ---- GRU1 over T conv outputs, all B batch rows at once -------------------
    h1 = run_gru(c, B, hidR,
                 ("w_ih1", "b_gi1", "b_hn1", "w_hr1", "w_hz1", "w_hn1"), T)   # [B, hidR]

    # ---- linear1 as a sum of dots against row-slices of w_lin (no lane concat) -
    w_lin = wslab("w_lin")
    res = jnp.dot(h1, w_lin[0:hidR, :], preferred_element_type=f32) + wslab("b_lin")

    # ---- skip GRU: `skip` phase-offset sequences of length pt, rows = B*skip ---
    if skip > 0:
        base = T - pt * skip
        hs = run_gru(c[base * B:(base + pt * skip) * B, :], skip * B, hidS,
                     ("w_ihs", "b_gis", "b_hns", "w_hrs", "w_hzs", "w_hns"), pt)
        # hs row index = j*B + b  (phase j, batch b)
        for j in range(skip):
            res = res + jnp.dot(hs[j * B:(j + 1) * B, :],
                                w_lin[hidR + j * hidS: hidR + (j + 1) * hidS, :],
                                preferred_element_type=f32)

    # ---- highway AR component: hw scalar-broadcast FMAs on the VPU -------------
    if hw > 0:
        xv = x_ref[...]                               # [B, P, m]
        res = res + hwp_ref[hw]                       # scalar bias (SMEM)
        for k in range(hw):
            res = res + hwp_ref[k] * xv[:, P - hw + k, :]

    if out_act == "sigmoid":
        res = _sigmoid(res)
    elif out_act == "tanh":
        res = jnp.tanh(res)

    out_ref[...] = res


# --------------------------------- wrapper ------------------------------------

def make_lstnet_forward(cfg, B):
    P, m, d_out = cfg["window"], cfg["d_int"], cfg["d_out"]
    Ck = cfg["CNN_kernel"]
    hidR, hidS = cfg["hidRNN"], cfg["hidSkip"]
    skip, hw = cfg["skip"], cfg["highway_window"]
    T = P - Ck + 1
    pt = (P - Ck) // (skip + 1) if skip > 0 else 0   # formula exactly as in the spec
    if hw > 0:
        assert d_out == m, "highway add requires d_out == m (as in original LSTNet)"
    if skip > 0:
        assert 0 < pt * skip <= T

    offs, _, _ = _pack_layout(cfg)
    kernel = partial(_lstnet_kernel, B=B, P=P, T=T, m=m, hidR=hidR, hidS=hidS,
                     skip=skip, pt=pt, hw=hw, offs=offs, out_act=cfg["output_fun"])

    vmem = pltpu.MemorySpace.VMEM
    smem = pltpu.MemorySpace.SMEM
    call = pl.pallas_call(
        kernel,
        in_specs=[pl.BlockSpec(memory_space=vmem),    # xc: im2col input, time-major
                  pl.BlockSpec(memory_space=vmem),    # x : raw input (highway)
                  pl.BlockSpec(memory_space=vmem),    # packed weights (single DMA)
                  pl.BlockSpec(memory_space=smem)],   # highway scalars
        out_specs=pl.BlockSpec(memory_space=vmem),
        out_shape=jax.ShapeDtypeStruct((B, d_out), jnp.float32),
    )

    def fwd(wbuf, hwp, x):
        # im2col, time-major rows (t*B + b); tiny layout-only op fused by XLA.
        xw = jnp.stack([x[:, k:k + T, :] for k in range(Ck)], axis=2)  # [B, T, Ck, m]
        xc = jnp.transpose(xw, (1, 0, 2, 3)).reshape(T * B, Ck * m)
        return call(xc, x, wbuf, hwp)

    return fwd


# ------------------------- pure-JAX reference (for checking) ------------------

def lstnet_reference(params, x, cfg):
    hp = lax.Precision.HIGHEST
    P, m = cfg["window"], cfg["d_int"]
    Ck, hidC = cfg["CNN_kernel"], cfg["hidCNN"]
    hidR, hidS = cfg["hidRNN"], cfg["hidSkip"]
    skip, hw = cfg["skip"], cfg["highway_window"]
    T = P - Ck + 1
    pt = (P - Ck) // (skip + 1) if skip > 0 else 0
    B = x.shape[0]

    c = sum(jnp.einsum("bti,io->bto", x[:, k:k + T, :], params["w_conv"][k], precision=hp)
            for k in range(Ck))
    c = jnp.maximum(c + params["b_conv"][0], 0.0)            # [B, T, hidC]

    def gru(seq, w_ih, w_hh, b_ih, b_hh, hid):
        h = jnp.zeros((seq.shape[1], hid), jnp.float32)
        for t in range(seq.shape[0]):
            gi = jnp.dot(seq[t], w_ih, precision=hp) + b_ih[0]
            gh = jnp.dot(h, w_hh, precision=hp) + b_hh[0]
            r = _sigmoid(gi[:, :hid] + gh[:, :hid])
            z = _sigmoid(gi[:, hid:2 * hid] + gh[:, hid:2 * hid])
            n = jnp.tanh(gi[:, 2 * hid:] + r * gh[:, 2 * hid:])
            h = (1.0 - z) * n + z * h
        return h

    r = gru(jnp.transpose(c, (1, 0, 2)), params["w_ih1"], params["w_hh1"],
            params["b_ih1"], params["b_hh1"], hidR)          # [B, hidR]

    if skip > 0:
        base = T - pt * skip
        cs = c[:, base:base + pt * skip, :].reshape(B, pt, skip, hidC)
        cs = jnp.transpose(cs, (1, 0, 2, 3)).reshape(pt, B * skip, hidC)
        s = gru(cs, params["w_ihs"], params["w_hhs"],
                params["b_ihs"], params["b_hhs"], hidS)      # [B*skip, hidS]
        r = jnp.concatenate([r, s.reshape(B, skip * hidS)], axis=1)

    res = jnp.dot(r, params["w_lin"], precision=hp) + params["b_lin"][0]

    if hw > 0:
        z = jnp.einsum("bti,t->bi", x[:, P - hw:, :], params["w_hw"][0], precision=hp)
        res = res + z + params["b_hw"][0, 0]

    if cfg["output_fun"] == "sigmoid":
        res = _sigmoid(res)
    elif cfg["output_fun"] == "tanh":
        res = jnp.tanh(res)
    return res


# --------------------------------- parameters ----------------------------------

def init_params(key, cfg):
    m = cfg["d_int"]
    Ck, hidC = cfg["CNN_kernel"], cfg["hidCNN"]
    hidR, hidS = cfg["hidRNN"], cfg["hidSkip"]
    skip, hw, d_out = cfg["skip"], cfg["highway_window"], cfg["d_out"]
    keys = iter(jax.random.split(key, 32))

    def w(shape, scale=0.15):
        return jax.random.normal(next(keys), shape, jnp.float32) * scale

    return dict(
        w_conv=w((Ck, m, hidC)), b_conv=w((1, hidC), 0.05),
        w_ih1=w((hidC, 3 * hidR)), w_hh1=w((hidR, 3 * hidR)),
        b_ih1=w((1, 3 * hidR), 0.05), b_hh1=w((1, 3 * hidR), 0.05),
        w_ihs=w((hidC, 3 * hidS)), w_hhs=w((hidS, 3 * hidS)),
        b_ihs=w((1, 3 * hidS), 0.05), b_hhs=w((1, 3 * hidS), 0.05),
        w_lin=w((hidR + skip * hidS, d_out)), b_lin=w((1, d_out), 0.05),
        w_hw=w((1, hw)), b_hw=w((1, 1), 0.05),
    )


# ------------------------------------ main --------------------------------------

if __name__ == "__main__":
    cfg = dict(window=16, d_int=8, d_out=8,         # d_out == m (required by highway add)
               hidRNN=32, hidCNN=32, hidSkip=16,
               CNN_kernel=4, skip=2, highway_window=4,
               dropout=0.0, output_fun="sigmoid")
    B = 2

    key = jax.random.PRNGKey(0)
    kp, kx = jax.random.split(key)
    params = init_params(kp, cfg)
    x = jax.random.normal(kx, (B, cfg["window"], cfg["d_int"]), jnp.float32)

    wbuf, hwp = pack_params(params, cfg)            # one-time weight packing
    fwd = jax.jit(make_lstnet_forward(cfg, B))
    out = jax.block_until_ready(fwd(wbuf, hwp, x))

    assert out.shape == (B, cfg["d_out"]), out.shape
    assert bool(jnp.all(jnp.isfinite(out)))

    ref = jax.block_until_ready(jax.jit(lambda p, xx: lstnet_reference(p, xx, cfg))(params, x))
    assert bool(jnp.allclose(out, ref, rtol=1e-3, atol=1e-3)), (out, ref)

    print("KERNEL_OK")
</pallas_src>

<mosaic_0001>
module attributes {stable_mosaic.version = 11 : i64} {
  func.func @_lstnet_kernel(%arg0: memref<26x32xf32, #tpu.memory_space<vmem>>, %arg1: memref<2x16x8xf32, #tpu.memory_space<vmem>>, %arg2: memref<352x96xf32, #tpu.memory_space<vmem>>, %arg3: memref<5xf32, #tpu.memory_space<smem>>, %arg4: memref<2x8xf32, #tpu.memory_space<vmem>>) attributes {dimension_semantics = [], scalar_prefetch = 0 : i64, scratch_operands = 0 : i64, tpu.core_type = #tpu.core_type<tc>} {
    %c0 = arith.constant 0 : index
    %c0_0 = arith.constant 0 : index
    %0 = vector.load %arg0[%c0, %c0_0] : memref<26x32xf32, #tpu.memory_space<vmem>>, vector<26x32xf32>
    %c0_1 = arith.constant 0 : index
    %c0_2 = arith.constant 0 : index
    %1 = vector.load %arg2[%c0_1, %c0_2] : memref<352x96xf32, #tpu.memory_space<vmem>>, vector<32x32xf32>
    %cst = arith.constant dense<0.000000e+00> : vector<26x32xf32>
    %2 = tpu.matmul %0, %1, %cst {dimension_numbers = #tpu.dot_dimension_numbers<[1], [0], [0], [1], [0, 0, 1, 1], [], []>} : vector<26x32xf32>, vector<32x32xf32>, vector<26x32xf32> -> vector<26x32xf32>
    %c32 = arith.constant 32 : index
    %c0_3 = arith.constant 0 : index
    %3 = vector.load %arg2[%c32, %c0_3] : memref<352x96xf32, #tpu.memory_space<vmem>>, vector<1x32xf32>
    %4 = vector.broadcast %3 : vector<1x32xf32> to vector<26x32xf32>
    %5 = arith.addf %2, %4 : vector<26x32xf32>
    %cst_4 = arith.constant 0.000000e+00 : f32
    %6 = vector.broadcast %cst_4 : f32 to vector<26x32xf32>
    %7 = arith.maximumf %5, %6 : vector<26x32xf32>
    %c40 = arith.constant 40 : index
    %c0_5 = arith.constant 0 : index
    %8 = vector.load %arg2[%c40, %c0_5] : memref<352x96xf32, #tpu.memory_space<vmem>>, vector<32x96xf32>
    %c72 = arith.constant 72 : index
    %c0_6 = arith.constant 0 : index
    %9 = vector.load %arg2[%c72, %c0_6] : memref<352x96xf32, #tpu.memory_space<vmem>>, vector<1x96xf32>
    %c80 = arith.constant 80 : index
    %c0_7 = arith.constant 0 : index
    %10 = vector.load %arg2[%c80, %c0_7] : memref<352x96xf32, #tpu.memory_space<vmem>>, vector<1x32xf32>
    %c88 = arith.constant 88 : index
    %c0_8 = arith.constant 0 : index
    %11 = vector.load %arg2[%c88, %c0_8] : memref<352x96xf32, #tpu.memory_space<vmem>>, vector<32x32xf32>
    %c120 = arith.constant 120 : index
    %c0_9 = arith.constant 0 : index
    %12 = vector.load %arg2[%c120, %c0_9] : memref<352x96xf32, #tpu.memory_space<vmem>>, vector<32x32xf32>
    %c152 = arith.constant 152 : index
    %c0_10 = arith.constant 0 : index
    %13 = vector.load %arg2[%c152, %c0_10] : memref<352x96xf32, #tpu.memory_space<vmem>>, vector<32x32xf32>
    %cst_11 = arith.constant dense<0.000000e+00> : vector<26x96xf32>
    %14 = tpu.matmul %7, %8, %cst_11 {dimension_numbers = #tpu.dot_dimension_numbers<[1], [0], [0], [1], [0, 0, 1, 1], [], []>} : vector<26x32xf32>, vector<32x96xf32>, vector<26x96xf32> -> vector<26x96xf32>
    %15 = vector.broadcast %9 : vector<1x96xf32> to vector<26x96xf32>
    %16 = arith.addf %14, %15 : vector<26x96xf32>
    %17 = vector.extract_strided_slice %16 {offsets = [0, 0], sizes = [26, 32], strides = [1, 1]} : vector<26x96xf32> to vector<26x32xf32>
    %18 = vector.extract_strided_slice %16 {offsets = [0, 32], sizes = [26, 32], strides = [1, 1]} : vector<26x96xf32> to vector<26x32xf32>
    %19 = vector.extract_strided_slice %16 {offsets = [0, 64], sizes = [26, 32], strides = [1, 1]} : vector<26x96xf32> to vector<26x32xf32>
    %cst_12 = arith.constant 0.000000e+00 : f32
    %20 = vector.broadcast %cst_12 : f32 to vector<2x32xf32>
    %21 = vector.broadcast %10 : vector<1x32xf32> to vector<2x32xf32>
    %22 = arith.addf %21, %20 : vector<2x32xf32>
    %cst_13 = arith.constant 0.000000e+00 : f32
    %23 = vector.broadcast %cst_13 : f32 to vector<2x32xf32>
    %cst_14 = arith.constant dense<0.000000e+00> : vector<2x32xf32>
    %24 = tpu.matmul %23, %11, %cst_14 {dimension_numbers = #tpu.dot_dimension_numbers<[1], [0], [0], [1], [0, 0, 1, 1], [], []>} : vector<2x32xf32>, vector<32x32xf32>, vector<2x32xf32> -> vector<2x32xf32>
    %cst_15 = arith.constant dense<0.000000e+00> : vector<2x32xf32>
    %25 = tpu.matmul %23, %12, %cst_15 {dimension_numbers = #tpu.dot_dimension_numbers<[1], [0], [0], [1], [0, 0, 1, 1], [], []>} : vector<2x32xf32>, vector<32x32xf32>, vector<2x32xf32> -> vector<2x32xf32>
    %cst_16 = arith.constant dense<0.000000e+00> : vector<2x32xf32>
    %26 = tpu.matmul %23, %13, %cst_16 {dimension_numbers = #tpu.dot_dimension_numbers<[1], [0], [0], [1], [0, 0, 1, 1], [], []>} : vector<2x32xf32>, vector<32x32xf32>, vector<2x32xf32> -> vector<2x32xf32>
    %27 = vector.extract_strided_slice %17 {offsets = [0, 0], sizes = [2, 32], strides = [1, 1]} : vector<26x32xf32> to vector<2x32xf32>
    %28 = arith.addf %27, %24 : vector<2x32xf32>
    %cst_17 = arith.constant 0.000000e+00 : f32
    %29 = vector.broadcast %cst_17 : f32 to vector<2x32xf32>
    %30 = arith.subf %29, %28 : vector<2x32xf32>
    %31 = math.exp %30 : vector<2x32xf32>
    %cst_18 = arith.constant 1.000000e+00 : f32
    %32 = vector.broadcast %cst_18 : f32 to vector<2x32xf32>
    %33 = arith.addf %32, %31 : vector<2x32xf32>
    %cst_19 = arith.constant 1.000000e+00 : f32
    %34 = vector.broadcast %cst_19 : f32 to vector<2x32xf32>
    %35 = arith.divf %34, %33 : vector<2x32xf32>
    %36 = vector.extract_strided_slice %18 {offsets = [0, 0], sizes = [2, 32], strides = [1, 1]} : vector<26x32xf32> to vector<2x32xf32>
    %37 = arith.addf %36, %25 : vector<2x32xf32>
    %cst_20 = arith.constant 0.000000e+00 : f32
    %38 = vector.broadcast %cst_20 : f32 to vector<2x32xf32>
    %39 = arith.subf %38, %37 : vector<2x32xf32>
    %40 = math.exp %39 : vector<2x32xf32>
    %cst_21 = arith.constant 1.000000e+00 : f32
    %41 = vector.broadcast %cst_21 : f32 to vector<2x32xf32>
    %42 = arith.addf %41, %40 : vector<2x32xf32>
    %cst_22 = arith.constant 1.000000e+00 : f32
    %43 = vector.broadcast %cst_22 : f32 to vector<2x32xf32>
    %44 = arith.divf %43, %42 : vector<2x32xf32>
    %45 = vector.extract_strided_slice %19 {offsets = [0, 0], sizes = [2, 32], strides = [1, 1]} : vector<26x32xf32> to vector<2x32xf32>
    %46 = arith.addf %26, %22 : vector<2x32xf32>
    %47 = arith.mulf %35, %46 : vector<2x32xf32>
    %48 = arith.addf %45, %47 : vector<2x32xf32>
    %49 = math.tanh %48 : vector<2x32xf32>
    %cst_23 = arith.constant 1.000000e+00 : f32
    %50 = vector.broadcast %cst_23 : f32 to vector<2x32xf32>
    %51 = arith.subf %50, %44 : vector<2x32xf32>
    %52 = arith.mulf %51, %49 : vector<2x32xf32>
    %53 = arith.mulf %44, %23 : vector<2x32xf32>
    %54 = arith.addf %52, %53 : vector<2x32xf32>
    %cst_24 = arith.constant dense<0.000000e+00> : vector<2x32xf32>
    %55 = tpu.matmul %54, %11, %cst_24 {dimension_numbers = #tpu.dot_dimension_numbers<[1], [0], [0], [1], [0, 0, 1, 1], [], []>} : vector<2x32xf32>, vector<32x32xf32>, vector<2x32xf32> -> vector<2x32xf32>
    %cst_25 = arith.constant dense<0.000000e+00> : vector<2x32xf32>
    %56 = tpu.matmul %54, %12, %cst_25 {dimension_numbers = #tpu.dot_dimension_numbers<[1], [0], [0], [1], [0, 0, 1, 1], [], []>} : vector<2x32xf32>, vector<32x32xf32>, vector<2x32xf32> -> vector<2x32xf32>
    %cst_26 = arith.constant dense<0.000000e+00> : vector<2x32xf32>
    %57 = tpu.matmul %54, %13, %cst_26 {dimension_numbers = #tpu.dot_dimension_numbers<[1], [0], [0], [1], [0, 0, 1, 1], [], []>} : vector<2x32xf32>, vector<32x32xf32>, vector<2x32xf32> -> vector<2x32xf32>
    %58 = vector.extract_strided_slice %17 {offsets = [2, 0], sizes = [2, 32], strides = [1, 1]} : vector<26x32xf32> to vector<2x32xf32>
    %59 = arith.addf %58, %55 : vector<2x32xf32>
    %cst_27 = arith.constant 0.000000e+00 : f32
    %60 = vector.broadcast %cst_27 : f32 to vector<2x32xf32>
    %61 = arith.subf %60, %59 : vector<2x32xf32>
    %62 = math.exp %61 : vector<2x32xf32>
    %cst_28 = arith.constant 1.000000e+00 : f32
    %63 = vector.broadcast %cst_28 : f32 to vector<2x32xf32>
    %64 = arith.addf %63, %62 : vector<2x32xf32>
    %cst_29 = arith.constant 1.000000e+00 : f32
    %65 = vector.broadcast %cst_29 : f32 to vector<2x32xf32>
    %66 = arith.divf %65, %64 : vector<2x32xf32>
    %67 = vector.extract_strided_slice %18 {offsets = [2, 0], sizes = [2, 32], strides = [1, 1]} : vector<26x32xf32> to vector<2x32xf32>
    %68 = arith.addf %67, %56 : vector<2x32xf32>
    %cst_30 = arith.constant 0.000000e+00 : f32
    %69 = vector.broadcast %cst_30 : f32 to vector<2x32xf32>
    %70 = arith.subf %69, %68 : vector<2x32xf32>
    %71 = math.exp %70 : vector<2x32xf32>
    %cst_31 = arith.constant 1.000000e+00 : f32
    %72 = vector.broadcast %cst_31 : f32 to vector<2x32xf32>
    %73 = arith.addf %72, %71 : vector<2x32xf32>
    %cst_32 = arith.constant 1.000000e+00 : f32
    %74 = vector.broadcast %cst_32 : f32 to vector<2x32xf32>
    %75 = arith.divf %74, %73 : vector<2x32xf32>
    %76 = vector.extract_strided_slice %19 {offsets = [2, 0], sizes = [2, 32], strides = [1, 1]} : vector<26x32xf32> to vector<2x32xf32>
    %77 = arith.addf %57, %22 : vector<2x32xf32>
    %78 = arith.mulf %66, %77 : vector<2x32xf32>
    %79 = arith.addf %76, %78 : vector<2x32xf32>
    %80 = math.tanh %79 : vector<2x32xf32>
    %cst_33 = arith.constant 1.000000e+00 : f32
    %81 = vector.broadcast %cst_33 : f32 to vector<2x32xf32>
    %82 = arith.subf %81, %75 : vector<2x32xf32>
    %83 = arith.mulf %82, %80 : vector<2x32xf32>
    %84 = arith.mulf %75, %54 : vector<2x32xf32>
    %85 = arith.addf %83, %84 : vector<2x32xf32>
    %cst_34 = arith.constant dense<0.000000e+00> : vector<2x32xf32>
    %86 = tpu.matmul %85, %11, %cst_34 {dimension_numbers = #tpu.dot_dimension_numbers<[1], [0], [0], [1], [0, 0, 1, 1], [], []>} : vector<2x32xf32>, vector<32x32xf32>, vector<2x32xf32> -> vector<2x32xf32>
    %cst_35 = arith.constant dense<0.000000e+00> : vector<2x32xf32>
    %87 = tpu.matmul %85, %12, %cst_35 {dimension_numbers = #tpu.dot_dimension_numbers<[1], [0], [0], [1], [0, 0, 1, 1], [], []>} : vector<2x32xf32>, vector<32x32xf32>, vector<2x32xf32> -> vector<2x32xf32>
    %cst_36 = arith.constant dense<0.000000e+00> : vector<2x32xf32>
    %88 = tpu.matmul %85, %13, %cst_36 {dimension_numbers = #tpu.dot_dimension_numbers<[1], [0], [0], [1], [0, 0, 1, 1], [], []>} : vector<2x32xf32>, vector<32x32xf32>, vector<2x32xf32> -> vector<2x32xf32>
    %89 = vector.extract_strided_slice %17 {offsets = [4, 0], sizes = [2, 32], strides = [1, 1]} : vector<26x32xf32> to vector<2x32xf32>
    %90 = arith.addf %89, %86 : vector<2x32xf32>
    %cst_37 = arith.constant 0.000000e+00 : f32
    %91 = vector.broadcast %cst_37 : f32 to vector<2x32xf32>
    %92 = arith.subf %91, %90 : vector<2x32xf32>
    %93 = math.exp %92 : vector<2x32xf32>
    %cst_38 = arith.constant 1.000000e+00 : f32
    %94 = vector.broadcast %cst_38 : f32 to vector<2x32xf32>
    %95 = arith.addf %94, %93 : vector<2x32xf32>
    %cst_39 = arith.constant 1.000000e+00 : f32
    %96 = vector.broadcast %cst_39 : f32 to vector<2x32xf32>
    %97 = arith.divf %96, %95 : vector<2x32xf32>
    %98 = vector.extract_strided_slice %18 {offsets = [4, 0], sizes = [2, 32], strides = [1, 1]} : vector<26x32xf32> to vector<2x32xf32>
    %99 = arith.addf %98, %87 : vector<2x32xf32>
    %cst_40 = arith.constant 0.000000e+00 : f32
    %100 = vector.broadcast %cst_40 : f32 to vector<2x32xf32>
    %101 = arith.subf %100, %99 : vector<2x32xf32>
    %102 = math.exp %101 : vector<2x32xf32>
    %cst_41 = arith.constant 1.000000e+00 : f32
    %103 = vector.broadcast %cst_41 : f32 to vector<2x32xf32>
    %104 = arith.addf %103, %102 : vector<2x32xf32>
    %cst_42 = arith.constant 1.000000e+00 : f32
    %105 = vector.broadcast %cst_42 : f32 to vector<2x32xf32>
    %106 = arith.divf %105, %104 : vector<2x32xf32>
    %107 = vector.extract_strided_slice %19 {offsets = [4, 0], sizes = [2, 32], strides = [1, 1]} : vector<26x32xf32> to vector<2x32xf32>
    %108 = arith.addf %88, %22 : vector<2x32xf32>
    %109 = arith.mulf %97, %108 : vector<2x32xf32>
    %110 = arith.addf %107, %109 : vector<2x32xf32>
    %111 = math.tanh %110 : vector<2x32xf32>
    %cst_43 = arith.constant 1.000000e+00 : f32
    %112 = vector.broadcast %cst_43 : f32 to vector<2x32xf32>
    %113 = arith.subf %112, %106 : vector<2x32xf32>
    %114 = arith.mulf %113, %111 : vector<2x32xf32>
    %115 = arith.mulf %106, %85 : vector<2x32xf32>
    %116 = arith.addf %114, %115 : vector<2x32xf32>
    %cst_44 = arith.constant dense<0.000000e+00> : vector<2x32xf32>
    %117 = tpu.matmul %116, %11, %cst_44 {dimension_numbers = #tpu.dot_dimension_numbers<[1], [0], [0], [1], [0, 0, 1, 1], [], []>} : vector<2x32xf32>, vector<32x32xf32>, vector<2x32xf32> -> vector<2x32xf32>
    %cst_45 = arith.constant dense<0.000000e+00> : vector<2x32xf32>
    %118 = tpu.matmul %116, %12, %cst_45 {dimension_numbers = #tpu.dot_dimension_numbers<[1], [0], [0], [1], [0, 0, 1, 1], [], []>} : vector<2x32xf32>, vector<32x32xf32>, vector<2x32xf32> -> vector<2x32xf32>
    %cst_46 = arith.constant dense<0.000000e+00> : vector<2x32xf32>
    %119 = tpu.matmul %116, %13, %cst_46 {dimension_numbers = #tpu.dot_dimension_numbers<[1], [0], [0], [1], [0, 0, 1, 1], [], []>} : vector<2x32xf32>, vector<32x32xf32>, vector<2x32xf32> -> vector<2x32xf32>
    %120 = vector.extract_strided_slice %17 {offsets = [6, 0], sizes = [2, 32], strides = [1, 1]} : vector<26x32xf32> to vector<2x32xf32>
    %121 = arith.addf %120, %117 : vector<2x32xf32>
    %cst_47 = arith.constant 0.000000e+00 : f32
    %122 = vector.broadcast %cst_47 : f32 to vector<2x32xf32>
    %123 = arith.subf %122, %121 : vector<2x32xf32>
    %124 = math.exp %123 : vector<2x32xf32>
    %cst_48 = arith.constant 1.000000e+00 : f32
    %125 = vector.broadcast %cst_48 : f32 to vector<2x32xf32>
    %126 = arith.addf %125, %124 : vector<2x32xf32>
    %cst_49 = arith.constant 1.000000e+00 : f32
    %127 = vector.broadcast %cst_49 : f32 to vector<2x32xf32>
    %128 = arith.divf %127, %126 : vector<2x32xf32>
    %129 = vector.extract_strided_slice %18 {offsets = [6, 0], sizes = [2, 32], strides = [1, 1]} : vector<26x32xf32> to vector<2x32xf32>
    %130 = arith.addf %129, %118 : vector<2x32xf32>
    %cst_50 = arith.constant 0.000000e+00 : f32
    %131 = vector.broadcast %cst_50 : f32 to vector<2x32xf32>
    %132 = arith.subf %131, %130 : vector<2x32xf32>
    %133 = math.exp %132 : vector<2x32xf32>
    %cst_51 = arith.constant 1.000000e+00 : f32
    %134 = vector.broadcast %cst_51 : f32 to vector<2x32xf32>
    %135 = arith.addf %134, %133 : vector<2x32xf32>
    %cst_52 = arith.constant 1.000000e+00 : f32
    %136 = vector.broadcast %cst_52 : f32 to vector<2x32xf32>
    %137 = arith.divf %136, %135 : vector<2x32xf32>
    %138 = vector.extract_strided_slice %19 {offsets = [6, 0], sizes = [2, 32], strides = [1, 1]} : vector<26x32xf32> to vector<2x32xf32>
    %139 = arith.addf %119, %22 : vector<2x32xf32>
    %140 = arith.mulf %128, %139 : vector<2x32xf32>
    %141 = arith.addf %138, %140 : vector<2x32xf32>
    %142 = math.tanh %141 : vector<2x32xf32>
    %cst_53 = arith.constant 1.000000e+00 : f32
    %143 = vector.broadcast %cst_53 : f32 to vector<2x32xf32>
    %144 = arith.subf %143, %137 : vector<2x32xf32>
    %145 = arith.mulf %144, %142 : vector<2x32xf32>
    %146 = arith.mulf %137, %116 : vector<2x32xf32>
    %147 = arith.addf %145, %146 : vector<2x32xf32>
    %cst_54 = arith.constant dense<0.000000e+00> : vector<2x32xf32>
    %148 = tpu.matmul %147, %11, %cst_54 {dimension_numbers = #tpu.dot_dimension_numbers<[1], [0], [0], [1], [0, 0, 1, 1], [], []>} : vector<2x32xf32>, vector<32x32xf32>, vector<2x32xf32> -> vector<2x32xf32>
    %cst_55 = arith.constant dense<0.000000e+00> : vector<2x32xf32>
    %149 = tpu.matmul %147, %12, %cst_55 {dimension_numbers = #tpu.dot_dimension_numbers<[1], [0], [0], [1], [0, 0, 1, 1], [], []>} : vector<2x32xf32>, vector<32x32xf32>, vector<2x32xf32> -> vector<2x32xf32>
    %cst_56 = arith.constant dense<0.000000e+00> : vector<2x32xf32>
    %150 = tpu.matmul %147, %13, %cst_56 {dimension_numbers = #tpu.dot_dimension_numbers<[1], [0], [0], [1], [0, 0, 1, 1], [], []>} : vector<2x32xf32>, vector<32x32xf32>, vector<2x32xf32> -> vector<2x32xf32>
    %151 = vector.extract_strided_slice %17 {offsets = [8, 0], sizes = [2, 32], strides = [1, 1]} : vector<26x32xf32> to vector<2x32xf32>
    %152 = arith.addf %151, %148 : vector<2x32xf32>
    %cst_57 = arith.constant 0.000000e+00 : f32
    %153 = vector.broadcast %cst_57 : f32 to vector<2x32xf32>
    %154 = arith.subf %153, %152 : vector<2x32xf32>
    %155 = math.exp %154 : vector<2x32xf32>
    %cst_58 = arith.constant 1.000000e+00 : f32
    %156 = vector.broadcast %cst_58 : f32 to vector<2x32xf32>
    %157 = arith.addf %156, %155 : vector<2x32xf32>
    %cst_59 = arith.constant 1.000000e+00 : f32
    %158 = vector.broadcast %cst_59 : f32 to vector<2x32xf32>
    %159 = arith.divf %158, %157 : vector<2x32xf32>
    %160 = vector.extract_strided_slice %18 {offsets = [8, 0], sizes = [2, 32], strides = [1, 1]} : vector<26x32xf32> to vector<2x32xf32>
    %161 = arith.addf %160, %149 : vector<2x32xf32>
    %cst_60 = arith.constant 0.000000e+00 : f32
    %162 = vector.broadcast %cst_60 : f32 to vector<2x32xf32>
    %163 = arith.subf %162, %161 : vector<2x32xf32>
    %164 = math.exp %163 : vector<2x32xf32>
    %cst_61 = arith.constant 1.000000e+00 : f32
    %165 = vector.broadcast %cst_61 : f32 to vector<2x32xf32>
    %166 = arith.addf %165, %164 : vector<2x32xf32>
    %cst_62 = arith.constant 1.000000e+00 : f32
    %167 = vector.broadcast %cst_62 : f32 to vector<2x32xf32>
    %168 = arith.divf %167, %166 : vector<2x32xf32>
    %169 = vector.extract_strided_slice %19 {offsets = [8, 0], sizes = [2, 32], strides = [1, 1]} : vector<26x32xf32> to vector<2x32xf32>
    %170 = arith.addf %150, %22 : vector<2x32xf32>
    %171 = arith.mulf %159, %170 : vector<2x32xf32>
    %172 = arith.addf %169, %171 : vector<2x32xf32>
    %173 = math.tanh %172 : vector<2x32xf32>
    %cst_63 = arith.constant 1.000000e+00 : f32
    %174 = vector.broadcast %cst_63 : f32 to vector<2x32xf32>
    %175 = arith.subf %174, %168 : vector<2x32xf32>
    %176 = arith.mulf %175, %173 : vector<2x32xf32>
    %177 = arith.mulf %168, %147 : vector<2x32xf32>
    %178 = arith.addf %176, %177 : vector<2x32xf32>
    %cst_64 = arith.constant dense<0.000000e+00> : vector<2x32xf32>
    %179 = tpu.matmul %178, %11, %cst_64 {dimension_numbers = #tpu.dot_dimension_numbers<[1], [0], [0], [1], [0, 0, 1, 1], [], []>} : vector<2x32xf32>, vector<32x32xf32>, vector<2x32xf32> -> vector<2x32xf32>
    %cst_65 = arith.constant dense<0.000000e+00> : vector<2x32xf32>
    %180 = tpu.matmul %178, %12, %cst_65 {dimension_numbers = #tpu.dot_dimension_numbers<[1], [0], [0], [1], [0, 0, 1, 1], [], []>} : vector<2x32xf32>, vector<32x32xf32>, vector<2x32xf32> -> vector<2x32xf32>
    %cst_66 = arith.constant dense<0.000000e+00> : vector<2x32xf32>
    %181 = tpu.matmul %178, %13, %cst_66 {dimension_numbers = #tpu.dot_dimension_numbers<[1], [0], [0], [1], [0, 0, 1, 1], [], []>} : vector<2x32xf32>, vector<32x32xf32>, vector<2x32xf32> -> vector<2x32xf32>
    %182 = vector.extract_strided_slice %17 {offsets = [10, 0], sizes = [2, 32], strides = [1, 1]} : vector<26x32xf32> to vector<2x32xf32>
    %183 = arith.addf %182, %179 : vector<2x32xf32>
    %cst_67 = arith.constant 0.000000e+00 : f32
    %184 = vector.broadcast %cst_67 : f32 to vector<2x32xf32>
    %185 = arith.subf %184, %183 : vector<2x32xf32>
    %186 = math.exp %185 : vector<2x32xf32>
    %cst_68 = arith.constant 1.000000e+00 : f32
    %187 = vector.broadcast %cst_68 : f32 to vector<2x32xf32>
    %188 = arith.addf %187, %186 : vector<2x32xf32>
    %cst_69 = arith.constant 1.000000e+00 : f32
    %189 = vector.broadcast %cst_69 : f32 to vector<2x32xf32>
    %190 = arith.divf %189, %188 : vector<2x32xf32>
    %191 = vector.extract_strided_slice %18 {offsets = [10, 0], sizes = [2, 32], strides = [1, 1]} : vector<26x32xf32> to vector<2x32xf32>
    %192 = arith.addf %191, %180 : vector<2x32xf32>
    %cst_70 = arith.constant 0.000000e+00 : f32
    %193 = vector.broadcast %cst_70 : f32 to vector<2x32xf32>
    %194 = arith.subf %193, %192 : vector<2x32xf32>
    %195 = math.exp %194 : vector<2x32xf32>
    %cst_71 = arith.constant 1.000000e+00 : f32
    %196 = vector.broadcast %cst_71 : f32 to vector<2x32xf32>
    %197 = arith.addf %196, %195 : vector<2x32xf32>
    %cst_72 = arith.constant 1.000000e+00 : f32
    %198 = vector.broadcast %cst_72 : f32 to vector<2x32xf32>
    %199 = arith.divf %198, %197 : vector<2x32xf32>
    %200 = vector.extract_strided_slice %19 {offsets = [10, 0], sizes = [2, 32], strides = [1, 1]} : vector<26x32xf32> to vector<2x32xf32>
    %201 = arith.addf %181, %22 : vector<2x32xf32>
    %202 = arith.mulf %190, %201 : vector<2x32xf32>
    %203 = arith.addf %200, %202 : vector<2x32xf32>
    %204 = math.tanh %203 : vector<2x32xf32>
    %cst_73 = arith.constant 1.000000e+00 : f32
    %205 = vector.broadcast %cst_73 : f32 to vector<2x32xf32>
    %206 = arith.subf %205, %199 : vector<2x32xf32>
    %207 = arith.mulf %206, %204 : vector<2x32xf32>
    %208 = arith.mulf %199, %178 : vector<2x32xf32>
    %209 = arith.addf %207, %208 : vector<2x32xf32>
    %cst_74 = arith.constant dense<0.000000e+00> : vector<2x32xf32>
    %210 = tpu.matmul %209, %11, %cst_74 {dimension_numbers = #tpu.dot_dimension_numbers<[1], [0], [0], [1], [0, 0, 1, 1], [], []>} : vector<2x32xf32>, vector<32x32xf32>, vector<2x32xf32> -> vector<2x32xf32>
    %cst_75 = arith.constant dense<0.000000e+00> : vector<2x32xf32>
    %211 = tpu.matmul %209, %12, %cst_75 {dimension_numbers = #tpu.dot_dimension_numbers<[1], [0], [0], [1], [0, 0, 1, 1], [], []>} : vector<2x32xf32>, vector<32x32xf32>, vector<2x32xf32> -> vector<2x32xf32>
    %cst_76 = arith.constant dense<0.000000e+00> : vector<2x32xf32>
    %212 = tpu.matmul %209, %13, %cst_76 {dimension_numbers = #tpu.dot_dimension_numbers<[1], [0], [0], [1], [0, 0, 1, 1], [], []>} : vector<2x32xf32>, vector<32x32xf32>, vector<2x32xf32> -> vector<2x32xf32>
    %213 = vector.extract_strided_slice %17 {offsets = [12, 0], sizes = [2, 32], strides = [1, 1]} : vector<26x32xf32> to vector<2x32xf32>
    %214 = arith.addf %213, %210 : vector<2x32xf32>
    %cst_77 = arith.constant 0.000000e+00 : f32
    %215 = vector.broadcast %cst_77 : f32 to vector<2x32xf32>
    %216 = arith.subf %215, %214 : vector<2x32xf32>
    %217 = math.exp %216 : vector<2x32xf32>
    %cst_78 = arith.constant 1.000000e+00 : f32
    %218 = vector.broadcast %cst_78 : f32 to vector<2x32xf32>
    %219 = arith.addf %218, %217 : vector<2x32xf32>
    %cst_79 = arith.constant 1.000000e+00 : f32
    %220 = vector.broadcast %cst_79 : f32 to vector<2x32xf32>
    %221 = arith.divf %220, %219 : vector<2x32xf32>
    %222 = vector.extract_strided_slice %18 {offsets = [12, 0], sizes = [2, 32], strides = [1, 1]} : vector<26x32xf32> to vector<2x32xf32>
    %223 = arith.addf %222, %211 : vector<2x32xf32>
    %cst_80 = arith.constant 0.000000e+00 : f32
    %224 = vector.broadcast %cst_80 : f32 to vector<2x32xf32>
    %225 = arith.subf %224, %223 : vector<2x32xf32>
    %226 = math.exp %225 : vector<2x32xf32>
    %cst_81 = arith.constant 1.000000e+00 : f32
    %227 = vector.broadcast %cst_81 : f32 to vector<2x32xf32>
    %228 = arith.addf %227, %226 : vector<2x32xf32>
    %cst_82 = arith.constant 1.000000e+00 : f32
    %229 = vector.broadcast %cst_82 : f32 to vector<2x32xf32>
    %230 = arith.divf %229, %228 : vector<2x32xf32>
    %231 = vector.extract_strided_slice %19 {offsets = [12, 0], sizes = [2, 32], strides = [1, 1]} : vector<26x32xf32> to vector<2x32xf32>
    %232 = arith.addf %212, %22 : vector<2x32xf32>
    %233 = arith.mulf %221, %232 : vector<2x32xf32>
    %234 = arith.addf %231, %233 : vector<2x32xf32>
    %235 = math.tanh %234 : vector<2x32xf32>
    %cst_83 = arith.constant 1.000000e+00 : f32
    %236 = vector.broadcast %cst_83 : f32 to vector<2x32xf32>
    %237 = arith.subf %236, %230 : vector<2x32xf32>
    %238 = arith.mulf %237, %235 : vector<2x32xf32>
    %239 = arith.mulf %230, %209 : vector<2x32xf32>
    %240 = arith.addf %238, %239 : vector<2x32xf32>
    %cst_84 = arith.constant dense<0.000000e+00> : vector<2x32xf32>
    %241 = tpu.matmul %240, %11, %cst_84 {dimension_numbers = #tpu.dot_dimension_numbers<[1], [0], [0], [1], [0, 0, 1, 1], [], []>} : vector<2x32xf32>, vector<32x32xf32>, vector<2x32xf32> -> vector<2x32xf32>
    %cst_85 = arith.constant dense<0.000000e+00> : vector<2x32xf32>
    %242 = tpu.matmul %240, %12, %cst_85 {dimension_numbers = #tpu.dot_dimension_numbers<[1], [0], [0], [1], [0, 0, 1, 1], [], []>} : vector<2x32xf32>, vector<32x32xf32>, vector<2x32xf32> -> vector<2x32xf32>
    %cst_86 = arith.constant dense<0.000000e+00> : vector<2x32xf32>
    %243 = tpu.matmul %240, %13, %cst_86 {dimension_numbers = #tpu.dot_dimension_numbers<[1], [0], [0], [1], [0, 0, 1, 1], [], []>} : vector<2x32xf32>, vector<32x32xf32>, vector<2x32xf32> -> vector<2x32xf32>
    %244 = vector.extract_strided_slice %17 {offsets = [14, 0], sizes = [2, 32], strides = [1, 1]} : vector<26x32xf32> to vector<2x32xf32>
    %245 = arith.addf %244, %241 : vector<2x32xf32>
    %cst_87 = arith.constant 0.000000e+00 : f32
    %246 = vector.broadcast %cst_87 : f32 to vector<2x32xf32>
    %247 = arith.subf %246, %245 : vector<2x32xf32>
    %248 = math.exp %247 : vector<2x32xf32>
    %cst_88 = arith.constant 1.000000e+00 : f32
    %249 = vector.broadcast %cst_88 : f32 to vector<2x32xf32>
    %250 = arith.addf %249, %248 : vector<2x32xf32>
    %cst_89 = arith.constant 1.000000e+00 : f32
    %251 = vector.broadcast %cst_89 : f32 to vector<2x32xf32>
    %252 = arith.divf %251, %250 : vector<2x32xf32>
    %253 = vector.extract_strided_slice %18 {offsets = [14, 0], sizes = [2, 32], strides = [1, 1]} : vector<26x32xf32> to vector<2x32xf32>
    %254 = arith.addf %253, %242 : vector<2x32xf32>
    %cst_90 = arith.constant 0.000000e+00 : f32
    %255 = vector.broadcast %cst_90 : f32 to vector<2x32xf32>
    %256 = arith.subf %255, %254 : vector<2x32xf32>
    %257 = math.exp %256 : vector<2x32xf32>
    %cst_91 = arith.constant 1.000000e+00 : f32
    %258 = vector.broadcast %cst_91 : f32 to vector<2x32xf32>
    %259 = arith.addf %258, %257 : vector<2x32xf32>
    %cst_92 = arith.constant 1.000000e+00 : f32
    %260 = vector.broadcast %cst_92 : f32 to vector<2x32xf32>
    %261 = arith.divf %260, %259 : vector<2x32xf32>
    %262 = vector.extract_strided_slice %19 {offsets = [14, 0], sizes = [2, 32], strides = [1, 1]} : vector<26x32xf32> to vector<2x32xf32>
    %263 = arith.addf %243, %22 : vector<2x32xf32>
    %264 = arith.mulf %252, %263 : vector<2x32xf32>
    %265 = arith.addf %262, %264 : vector<2x32xf32>
    %266 = math.tanh %265 : vector<2x32xf32>
    %cst_93 = arith.constant 1.000000e+00 : f32
    %267 = vector.broadcast %cst_93 : f32 to vector<2x32xf32>
    %268 = arith.subf %267, %261 : vector<2x32xf32>
    %269 = arith.mulf %268, %266 : vector<2x32xf32>
    %270 = arith.mulf %261, %240 : vector<2x32xf32>
    %271 = arith.addf %269, %270 : vector<2x32xf32>
    %cst_94 = arith.constant dense<0.000000e+00> : vector<2x32xf32>
    %272 = tpu.matmul %271, %11, %cst_94 {dimension_numbers = #tpu.dot_dimension_numbers<[1], [0], [0], [1], [0, 0, 1, 1], [], []>} : vector<2x32xf32>, vector<32x32xf32>, vector<2x32xf32> -> vector<2x32xf32>
    %cst_95 = arith.constant dense<0.000000e+00> : vector<2x32xf32>
    %273 = tpu.matmul %271, %12, %cst_95 {dimension_numbers = #tpu.dot_dimension_numbers<[1], [0], [0], [1], [0, 0, 1, 1], [], []>} : vector<2x32xf32>, vector<32x32xf32>, vector<2x32xf32> -> vector<2x32xf32>
    %cst_96 = arith.constant dense<0.000000e+00> : vector<2x32xf32>
    %274 = tpu.matmul %271, %13, %cst_96 {dimension_numbers = #tpu.dot_dimension_numbers<[1], [0], [0], [1], [0, 0, 1, 1], [], []>} : vector<2x32xf32>, vector<32x32xf32>, vector<2x32xf32> -> vector<2x32xf32>
    %275 = vector.extract_strided_slice %17 {offsets = [16, 0], sizes = [2, 32], strides = [1, 1]} : vector<26x32xf32> to vector<2x32xf32>
    %276 = arith.addf %275, %272 : vector<2x32xf32>
    %cst_97 = arith.constant 0.000000e+00 : f32
    %277 = vector.broadcast %cst_97 : f32 to vector<2x32xf32>
    %278 = arith.subf %277, %276 : vector<2x32xf32>
    %279 = math.exp %278 : vector<2x32xf32>
    %cst_98 = arith.constant 1.000000e+00 : f32
    %280 = vector.broadcast %cst_98 : f32 to vector<2x32xf32>
    %281 = arith.addf %280, %279 : vector<2x32xf32>
    %cst_99 = arith.constant 1.000000e+00 : f32
    %282 = vector.broadcast %cst_99 : f32 to vector<2x32xf32>
    %283 = arith.divf %282, %281 : vector<2x32xf32>
    %284 = vector.extract_strided_slice %18 {offsets = [16, 0], sizes = [2, 32], strides = [1, 1]} : vector<26x32xf32> to vector<2x32xf32>
    %285 = arith.addf %284, %273 : vector<2x32xf32>
    %cst_100 = arith.constant 0.000000e+00 : f32
    %286 = vector.broadcast %cst_100 : f32 to vector<2x32xf32>
    %287 = arith.subf %286, %285 : vector<2x32xf32>
    %288 = math.exp %287 : vector<2x32xf32>
    %cst_101 = arith.constant 1.000000e+00 : f32
    %289 = vector.broadcast %cst_101 : f32 to vector<2x32xf32>
    %290 = arith.addf %289, %288 : vector<2x32xf32>
    %cst_102 = arith.constant 1.000000e+00 : f32
    %291 = vector.broadcast %cst_102 : f32 to vector<2x32xf32>
    %292 = arith.divf %291, %290 : vector<2x32xf32>
    %293 = vector.extract_strided_slice %19 {offsets = [16, 0], sizes = [2, 32], strides = [1, 1]} : vector<26x32xf32> to vector<2x32xf32>
    %294 = arith.addf %274, %22 : vector<2x32xf32>
    %295 = arith.mulf %283, %294 : vector<2x32xf32>
    %296 = arith.addf %293, %295 : vector<2x32xf32>
    %297 = math.tanh %296 : vector<2x32xf32>
    %cst_103 = arith.constant 1.000000e+00 : f32
    %298 = vector.broadcast %cst_103 : f32 to vector<2x32xf32>
    %299 = arith.subf %298, %292 : vector<2x32xf32>
    %300 = arith.mulf %299, %297 : vector<2x32xf32>
    %301 = arith.mulf %292, %271 : vector<2x32xf32>
    %302 = arith.addf %300, %301 : vector<2x32xf32>
    %cst_104 = arith.constant dense<0.000000e+00> : vector<2x32xf32>
    %303 = tpu.matmul %302, %11, %cst_104 {dimension_numbers = #tpu.dot_dimension_numbers<[1], [0], [0], [1], [0, 0, 1, 1], [], []>} : vector<2x32xf32>, vector<32x32xf32>, vector<2x32xf32> -> vector<2x32xf32>
    %cst_105 = arith.constant dense<0.000000e+00> : vector<2x32xf32>
    %304 = tpu.matmul %302, %12, %cst_105 {dimension_numbers = #tpu.dot_dimension_numbers<[1], [0], [0], [1], [0, 0, 1, 1], [], []>} : vector<2x32xf32>, vector<32x32xf32>, vector<2x32xf32> -> vector<2x32xf32>
    %cst_106 = arith.constant dense<0.000000e+00> : vector<2x32xf32>
    %305 = tpu.matmul %302, %13, %cst_106 {dimension_numbers = #tpu.dot_dimension_numbers<[1], [0], [0], [1], [0, 0, 1, 1], [], []>} : vector<2x32xf32>, vector<32x32xf32>, vector<2x32xf32> -> vector<2x32xf32>
    %306 = vector.extract_strided_slice %17 {offsets = [18, 0], sizes = [2, 32], strides = [1, 1]} : vector<26x32xf32> to vector<2x32xf32>
    %307 = arith.addf %306, %303 : vector<2x32xf32>
    %cst_107 = arith.constant 0.000000e+00 : f32
    %308 = vector.broadcast %cst_107 : f32 to vector<2x32xf32>
    %309 = arith.subf %308, %307 : vector<2x32xf32>
    %310 = math.exp %309 : vector<2x32xf32>
    %cst_108 = arith.constant 1.000000e+00 : f32
    %311 = vector.broadcast %cst_108 : f32 to vector<2x32xf32>
    %312 = arith.addf %311, %310 : vector<2x32xf32>
    %cst_109 = arith.constant 1.000000e+00 : f32
    %313 = vector.broadcast %cst_109 : f32 to vector<2x32xf32>
    %314 = arith.divf %313, %312 : vector<2x32xf32>
    %315 = vector.extract_strided_slice %18 {offsets = [18, 0], sizes = [2, 32], strides = [1, 1]} : vector<26x32xf32> to vector<2x32xf32>
    %316 = arith.addf %315, %304 : vector<2x32xf32>
    %cst_110 = arith.constant 0.000000e+00 : f32
    %317 = vector.broadcast %cst_110 : f32 to vector<2x32xf32>
    %318 = arith.subf %317, %316 : vector<2x32xf32>
    %319 = math.exp %318 : vector<2x32xf32>
    %cst_111 = arith.constant 1.000000e+00 : f32
    %320 = vector.broadcast %cst_111 : f32 to vector<2x32xf32>
    %321 = arith.addf %320, %319 : vector<2x32xf32>
    %cst_112 = arith.constant 1.000000e+00 : f32
    %322 = vector.broadcast %cst_112 : f32 to vector<2x32xf32>
    %323 = arith.divf %322, %321 : vector<2x32xf32>
    %324 = vector.extract_strided_slice %19 {offsets = [18, 0], sizes = [2, 32], strides = [1, 1]} : vector<26x32xf32> to vector<2x32xf32>
    %325 = arith.addf %305, %22 : vector<2x32xf32>
    %326 = arith.mulf %314, %325 : vector<2x32xf32>
    %327 = arith.addf %324, %326 : vector<2x32xf32>
    %328 = math.tanh %327 : vector<2x32xf32>
    %cst_113 = arith.constant 1.000000e+00 : f32
    %329 = vector.broadcast %cst_113 : f32 to vector<2x32xf32>
    %330 = arith.subf %329, %323 : vector<2x32xf32>
    %331 = arith.mulf %330, %328 : vector<2x32xf32>
    %332 = arith.mulf %323, %302 : vector<2x32xf32>
    %333 = arith.addf %331, %332 : vector<2x32xf32>
    %cst_114 = arith.constant dense<0.000000e+00> : vector<2x32xf32>
    %334 = tpu.matmul %333, %11, %cst_114 {dimension_numbers = #tpu.dot_dimension_numbers<[1], [0], [0], [1], [0, 0, 1, 1], [], []>} : vector<2x32xf32>, vector<32x32xf32>, vector<2x32xf32> -> vector<2x32xf32>
    %cst_115 = arith.constant dense<0.000000e+00> : vector<2x32xf32>
    %335 = tpu.matmul %333, %12, %cst_115 {dimension_numbers = #tpu.dot_dimension_numbers<[1], [0], [0], [1], [0, 0, 1, 1], [], []>} : vector<2x32xf32>, vector<32x32xf32>, vector<2x32xf32> -> vector<2x32xf32>
    %cst_116 = arith.constant dense<0.000000e+00> : vector<2x32xf32>
    %336 = tpu.matmul %333, %13, %cst_116 {dimension_numbers = #tpu.dot_dimension_numbers<[1], [0], [0], [1], [0, 0, 1, 1], [], []>} : vector<2x32xf32>, vector<32x32xf32>, vector<2x32xf32> -> vector<2x32xf32>
    %337 = vector.extract_strided_slice %17 {offsets = [20, 0], sizes = [2, 32], strides = [1, 1]} : vector<26x32xf32> to vector<2x32xf32>
    %338 = arith.addf %337, %334 : vector<2x32xf32>
    %cst_117 = arith.constant 0.000000e+00 : f32
    %339 = vector.broadcast %cst_117 : f32 to vector<2x32xf32>
    %340 = arith.subf %339, %338 : vector<2x32xf32>
    %341 = math.exp %340 : vector<2x32xf32>
    %cst_118 = arith.constant 1.000000e+00 : f32
    %342 = vector.broadcast %cst_118 : f32 to vector<2x32xf32>
    %343 = arith.addf %342, %341 : vector<2x32xf32>
    %cst_119 = arith.constant 1.000000e+00 : f32
    %344 = vector.broadcast %cst_119 : f32 to vector<2x32xf32>
    %345 = arith.divf %344, %343 : vector<2x32xf32>
    %346 = vector.extract_strided_slice %18 {offsets = [20, 0], sizes = [2, 32], strides = [1, 1]} : vector<26x32xf32> to vector<2x32xf32>
    %347 = arith.addf %346, %335 : vector<2x32xf32>
    %cst_120 = arith.constant 0.000000e+00 : f32
    %348 = vector.broadcast %cst_120 : f32 to vector<2x32xf32>
    %349 = arith.subf %348, %347 : vector<2x32xf32>
    %350 = math.exp %349 : vector<2x32xf32>
    %cst_121 = arith.constant 1.000000e+00 : f32
    %351 = vector.broadcast %cst_121 : f32 to vector<2x32xf32>
    %352 = arith.addf %351, %350 : vector<2x32xf32>
    %cst_122 = arith.constant 1.000000e+00 : f32
    %353 = vector.broadcast %cst_122 : f32 to vector<2x32xf32>
    %354 = arith.divf %353, %352 : vector<2x32xf32>
    %355 = vector.extract_strided_slice %19 {offsets = [20, 0], sizes = [2, 32], strides = [1, 1]} : vector<26x32xf32> to vector<2x32xf32>
    %356 = arith.addf %336, %22 : vector<2x32xf32>
    %357 = arith.mulf %345, %356 : vector<2x32xf32>
    %358 = arith.addf %355, %357 : vector<2x32xf32>
    %359 = math.tanh %358 : vector<2x32xf32>
    %cst_123 = arith.constant 1.000000e+00 : f32
    %360 = vector.broadcast %cst_123 : f32 to vector<2x32xf32>
    %361 = arith.subf %360, %354 : vector<2x32xf32>
    %362 = arith.mulf %361, %359 : vector<2x32xf32>
    %363 = arith.mulf %354, %333 : vector<2x32xf32>
    %364 = arith.addf %362, %363 : vector<2x32xf32>
    %cst_124 = arith.constant dense<0.000000e+00> : vector<2x32xf32>
    %365 = tpu.matmul %364, %11, %cst_124 {dimension_numbers = #tpu.dot_dimension_numbers<[1], [0], [0], [1], [0, 0, 1, 1], [], []>} : vector<2x32xf32>, vector<32x32xf32>, vector<2x32xf32> -> vector<2x32xf32>
    %cst_125 = arith.constant dense<0.000000e+00> : vector<2x32xf32>
    %366 = tpu.matmul %364, %12, %cst_125 {dimension_numbers = #tpu.dot_dimension_numbers<[1], [0], [0], [1], [0, 0, 1, 1], [], []>} : vector<2x32xf32>, vector<32x32xf32>, vector<2x32xf32> -> vector<2x32xf32>
    %cst_126 = arith.constant dense<0.000000e+00> : vector<2x32xf32>
    %367 = tpu.matmul %364, %13, %cst_126 {dimension_numbers = #tpu.dot_dimension_numbers<[1], [0], [0], [1], [0, 0, 1, 1], [], []>} : vector<2x32xf32>, vector<32x32xf32>, vector<2x32xf32> -> vector<2x32xf32>
    %368 = vector.extract_strided_slice %17 {offsets = [22, 0], sizes = [2, 32], strides = [1, 1]} : vector<26x32xf32> to vector<2x32xf32>
    %369 = arith.addf %368, %365 : vector<2x32xf32>
    %cst_127 = arith.constant 0.000000e+00 : f32
    %370 = vector.broadcast %cst_127 : f32 to vector<2x32xf32>
    %371 = arith.subf %370, %369 : vector<2x32xf32>
    %372 = math.exp %371 : vector<2x32xf32>
    %cst_128 = arith.constant 1.000000e+00 : f32
    %373 = vector.broadcast %cst_128 : f32 to vector<2x32xf32>
    %374 = arith.addf %373, %372 : vector<2x32xf32>
    %cst_129 = arith.constant 1.000000e+00 : f32
    %375 = vector.broadcast %cst_129 : f32 to vector<2x32xf32>
    %376 = arith.divf %375, %374 : vector<2x32xf32>
    %377 = vector.extract_strided_slice %18 {offsets = [22, 0], sizes = [2, 32], strides = [1, 1]} : vector<26x32xf32> to vector<2x32xf32>
    %378 = arith.addf %377, %366 : vector<2x32xf32>
    %cst_130 = arith.constant 0.000000e+00 : f32
    %379 = vector.broadcast %cst_130 : f32 to vector<2x32xf32>
    %380 = arith.subf %379, %378 : vector<2x32xf32>
    %381 = math.exp %380 : vector<2x32xf32>
    %cst_131 = arith.constant 1.000000e+00 : f32
    %382 = vector.broadcast %cst_131 : f32 to vector<2x32xf32>
    %383 = arith.addf %382, %381 : vector<2x32xf32>
    %cst_132 = arith.constant 1.000000e+00 : f32
    %384 = vector.broadcast %cst_132 : f32 to vector<2x32xf32>
    %385 = arith.divf %384, %383 : vector<2x32xf32>
    %386 = vector.extract_strided_slice %19 {offsets = [22, 0], sizes = [2, 32], strides = [1, 1]} : vector<26x32xf32> to vector<2x32xf32>
    %387 = arith.addf %367, %22 : vector<2x32xf32>
    %388 = arith.mulf %376, %387 : vector<2x32xf32>
    %389 = arith.addf %386, %388 : vector<2x32xf32>
    %390 = math.tanh %389 : vector<2x32xf32>
    %cst_133 = arith.constant 1.000000e+00 : f32
    %391 = vector.broadcast %cst_133 : f32 to vector<2x32xf32>
    %392 = arith.subf %391, %385 : vector<2x32xf32>
    %393 = arith.mulf %392, %390 : vector<2x32xf32>
    %394 = arith.mulf %385, %364 : vector<2x32xf32>
    %395 = arith.addf %393, %394 : vector<2x32xf32>
    %cst_134 = arith.constant dense<0.000000e+00> : vector<2x32xf32>
    %396 = tpu.matmul %395, %11, %cst_134 {dimension_numbers = #tpu.dot_dimension_numbers<[1], [0], [0], [1], [0, 0, 1, 1], [], []>} : vector<2x32xf32>, vector<32x32xf32>, vector<2x32xf32> -> vector<2x32xf32>
    %cst_135 = arith.constant dense<0.000000e+00> : vector<2x32xf32>
    %397 = tpu.matmul %395, %12, %cst_135 {dimension_numbers = #tpu.dot_dimension_numbers<[1], [0], [0], [1], [0, 0, 1, 1], [], []>} : vector<2x32xf32>, vector<32x32xf32>, vector<2x32xf32> -> vector<2x32xf32>
    %cst_136 = arith.constant dense<0.000000e+00> : vector<2x32xf32>
    %398 = tpu.matmul %395, %13, %cst_136 {dimension_numbers = #tpu.dot_dimension_numbers<[1], [0], [0], [1], [0, 0, 1, 1], [], []>} : vector<2x32xf32>, vector<32x32xf32>, vector<2x32xf32> -> vector<2x32xf32>
    %399 = vector.extract_strided_slice %17 {offsets = [24, 0], sizes = [2, 32], strides = [1, 1]} : vector<26x32xf32> to vector<2x32xf32>
    %400 = arith.addf %399, %396 : vector<2x32xf32>
    %cst_137 = arith.constant 0.000000e+00 : f32
    %401 = vector.broadcast %cst_137 : f32 to vector<2x32xf32>
    %402 = arith.subf %401, %400 : vector<2x32xf32>
    %403 = math.exp %402 : vector<2x32xf32>
    %cst_138 = arith.constant 1.000000e+00 : f32
    %404 = vector.broadcast %cst_138 : f32 to vector<2x32xf32>
    %405 = arith.addf %404, %403 : vector<2x32xf32>
    %cst_139 = arith.constant 1.000000e+00 : f32
    %406 = vector.broadcast %cst_139 : f32 to vector<2x32xf32>
    %407 = arith.divf %406, %405 : vector<2x32xf32>
    %408 = vector.extract_strided_slice %18 {offsets = [24, 0], sizes = [2, 32], strides = [1, 1]} : vector<26x32xf32> to vector<2x32xf32>
    %409 = arith.addf %408, %397 : vector<2x32xf32>
    %cst_140 = arith.constant 0.000000e+00 : f32
    %410 = vector.broadcast %cst_140 : f32 to vector<2x32xf32>
    %411 = arith.subf %410, %409 : vector<2x32xf32>
    %412 = math.exp %411 : vector<2x32xf32>
    %cst_141 = arith.constant 1.000000e+00 : f32
    %413 = vector.broadcast %cst_141 : f32 to vector<2x32xf32>
    %414 = arith.addf %413, %412 : vector<2x32xf32>
    %cst_142 = arith.constant 1.000000e+00 : f32
    %415 = vector.broadcast %cst_142 : f32 to vector<2x32xf32>
    %416 = arith.divf %415, %414 : vector<2x32xf32>
    %417 = vector.extract_strided_slice %19 {offsets = [24, 0], sizes = [2, 32], strides = [1, 1]} : vector<26x32xf32> to vector<2x32xf32>
    %418 = arith.addf %398, %22 : vector<2x32xf32>
    %419 = arith.mulf %407, %418 : vector<2x32xf32>
    %420 = arith.addf %417, %419 : vector<2x32xf32>
    %421 = math.tanh %420 : vector<2x32xf32>
    %cst_143 = arith.constant 1.000000e+00 : f32
    %422 = vector.broadcast %cst_143 : f32 to vector<2x32xf32>
    %423 = arith.subf %422, %416 : vector<2x32xf32>
    %424 = arith.mulf %423, %421 : vector<2x32xf32>
    %425 = arith.mulf %416, %395 : vector<2x32xf32>
    %426 = arith.addf %424, %425 : vector<2x32xf32>
    %c280 = arith.constant 280 : index
    %c0_144 = arith.constant 0 : index
    %427 = vector.load %arg2[%c280, %c0_144] : memref<352x96xf32, #tpu.memory_space<vmem>>, vector<64x8xf32>
    %428 = vector.extract_strided_slice %427 {offsets = [0, 0], sizes = [32, 8], strides = [1, 1]} : vector<64x8xf32> to vector<32x8xf32>
    %cst_145 = arith.constant dense<0.000000e+00> : vector<2x8xf32>
    %429 = tpu.matmul %426, %428, %cst_145 {dimension_numbers = #tpu.dot_dimension_numbers<[1], [0], [0], [1], [0, 0, 1, 1], [], []>} : vector<2x32xf32>, vector<32x8xf32>, vector<2x8xf32> -> vector<2x8xf32>
    %c344 = arith.constant 344 : index
    %c0_146 = arith.constant 0 : index
    %430 = vector.load %arg2[%c344, %c0_146] : memref<352x96xf32, #tpu.memory_space<vmem>>, vector<1x8xf32>
    %431 = vector.broadcast %430 : vector<1x8xf32> to vector<2x8xf32>
    %432 = arith.addf %429, %431 : vector<2x8xf32>
    %433 = vector.extract_strided_slice %7 {offsets = [10, 0], sizes = [16, 32], strides = [1, 1]} : vector<26x32xf32> to vector<16x32xf32>
    %c184 = arith.constant 184 : index
    %c0_147 = arith.constant 0 : index
    %434 = vector.load %arg2[%c184, %c0_147] : memref<352x96xf32, #tpu.memory_space<vmem>>, vector<32x48xf32>
    %c216 = arith.constant 216 : index
    %c0_148 = arith.constant 0 : index
    %435 = vector.load %arg2[%c216, %c0_148] : memref<352x96xf32, #tpu.memory_space<vmem>>, vector<1x48xf32>
    %c224 = arith.constant 224 : index
    %c0_149 = arith.constant 0 : index
    %436 = vector.load %arg2[%c224, %c0_149] : memref<352x96xf32, #tpu.memory_space<vmem>>, vector<1x16xf32>
    %c232 = arith.constant 232 : index
    %c0_150 = arith.constant 0 : index
    %437 = vector.load %arg2[%c232, %c0_150] : memref<352x96xf32, #tpu.memory_space<vmem>>, vector<16x16xf32>
    %c248 = arith.constant 248 : index
    %c0_151 = arith.constant 0 : index
    %438 = vector.load %arg2[%c248, %c0_151] : memref<352x96xf32, #tpu.memory_space<vmem>>, vector<16x16xf32>
    %c264 = arith.constant 264 : index
    %c0_152 = arith.constant 0 : index
    %439 = vector.load %arg2[%c264, %c0_152] : memref<352x96xf32, #tpu.memory_space<vmem>>, vector<16x16xf32>
    %cst_153 = arith.constant dense<0.000000e+00> : vector<16x48xf32>
    %440 = tpu.matmul %433, %434, %cst_153 {dimension_numbers = #tpu.dot_dimension_numbers<[1], [0], [0], [1], [0, 0, 1, 1], [], []>} : vector<16x32xf32>, vector<32x48xf32>, vector<16x48xf32> -> vector<16x48xf32>
    %441 = vector.broadcast %435 : vector<1x48xf32> to vector<16x48xf32>
    %442 = arith.addf %440, %441 : vector<16x48xf32>
    %443 = vector.extract_strided_slice %442 {offsets = [0, 0], sizes = [16, 16], strides = [1, 1]} : vector<16x48xf32> to vector<16x16xf32>
    %444 = vector.extract_strided_slice %442 {offsets = [0, 16], sizes = [16, 16], strides = [1, 1]} : vector<16x48xf32> to vector<16x16xf32>
    %445 = vector.extract_strided_slice %442 {offsets = [0, 32], sizes = [16, 16], strides = [1, 1]} : vector<16x48xf32> to vector<16x16xf32>
    %cst_154 = arith.constant 0.000000e+00 : f32
    %446 = vector.broadcast %cst_154 : f32 to vector<4x16xf32>
    %447 = vector.broadcast %436 : vector<1x16xf32> to vector<4x16xf32>
    %448 = arith.addf %447, %446 : vector<4x16xf32>
    %cst_155 = arith.constant 0.000000e+00 : f32
    %449 = vector.broadcast %cst_155 : f32 to vector<4x16xf32>
    %cst_156 = arith.constant dense<0.000000e+00> : vector<4x16xf32>
    %450 = tpu.matmul %449, %437, %cst_156 {dimension_numbers = #tpu.dot_dimension_numbers<[1], [0], [0], [1], [0, 0, 1, 1], [], []>} : vector<4x16xf32>, vector<16x16xf32>, vector<4x16xf32> -> vector<4x16xf32>
    %cst_157 = arith.constant dense<0.000000e+00> : vector<4x16xf32>
    %451 = tpu.matmul %449, %438, %cst_157 {dimension_numbers = #tpu.dot_dimension_numbers<[1], [0], [0], [1], [0, 0, 1, 1], [], []>} : vector<4x16xf32>, vector<16x16xf32>, vector<4x16xf32> -> vector<4x16xf32>
    %cst_158 = arith.constant dense<0.000000e+00> : vector<4x16xf32>
    %452 = tpu.matmul %449, %439, %cst_158 {dimension_numbers = #tpu.dot_dimension_numbers<[1], [0], [0], [1], [0, 0, 1, 1], [], []>} : vector<4x16xf32>, vector<16x16xf32>, vector<4x16xf32> -> vector<4x16xf32>
    %453 = vector.extract_strided_slice %443 {offsets = [0, 0], sizes = [4, 16], strides = [1, 1]} : vector<16x16xf32> to vector<4x16xf32>
    %454 = arith.addf %453, %450 : vector<4x16xf32>
    %cst_159 = arith.constant 0.000000e+00 : f32
    %455 = vector.broadcast %cst_159 : f32 to vector<4x16xf32>
    %456 = arith.subf %455, %454 : vector<4x16xf32>
    %457 = math.exp %456 : vector<4x16xf32>
    %cst_160 = arith.constant 1.000000e+00 : f32
    %458 = vector.broadcast %cst_160 : f32 to vector<4x16xf32>
    %459 = arith.addf %458, %457 : vector<4x16xf32>
    %cst_161 = arith.constant 1.000000e+00 : f32
    %460 = vector.broadcast %cst_161 : f32 to vector<4x16xf32>
    %461 = arith.divf %460, %459 : vector<4x16xf32>
    %462 = vector.extract_strided_slice %444 {offsets = [0, 0], sizes = [4, 16], strides = [1, 1]} : vector<16x16xf32> to vector<4x16xf32>
    %463 = arith.addf %462, %451 : vector<4x16xf32>
    %cst_162 = arith.constant 0.000000e+00 : f32
    %464 = vector.broadcast %cst_162 : f32 to vector<4x16xf32>
    %465 = arith.subf %464, %463 : vector<4x16xf32>
    %466 = math.exp %465 : vector<4x16xf32>
    %cst_163 = arith.constant 1.000000e+00 : f32
    %467 = vector.broadcast %cst_163 : f32 to vector<4x16xf32>
    %468 = arith.addf %467, %466 : vector<4x16xf32>
    %cst_164 = arith.constant 1.000000e+00 : f32
    %469 = vector.broadcast %cst_164 : f32 to vector<4x16xf32>
    %470 = arith.divf %469, %468 : vector<4x16xf32>
    %471 = vector.extract_strided_slice %445 {offsets = [0, 0], sizes = [4, 16], strides = [1, 1]} : vector<16x16xf32> to vector<4x16xf32>
    %472 = arith.addf %452, %448 : vector<4x16xf32>
    %473 = arith.mulf %461, %472 : vector<4x16xf32>
    %474 = arith.addf %471, %473 : vector<4x16xf32>
    %475 = math.tanh %474 : vector<4x16xf32>
    %cst_165 = arith.constant 1.000000e+00 : f32
    %476 = vector.broadcast %cst_165 : f32 to vector<4x16xf32>
    %477 = arith.subf %476, %470 : vector<4x16xf32>
    %478 = arith.mulf %477, %475 : vector<4x16xf32>
    %479 = arith.mulf %470, %449 : vector<4x16xf32>
    %480 = arith.addf %478, %479 : vector<4x16xf32>
    %cst_166 = arith.constant dense<0.000000e+00> : vector<4x16xf32>
    %481 = tpu.matmul %480, %437, %cst_166 {dimension_numbers = #tpu.dot_dimension_numbers<[1], [0], [0], [1], [0, 0, 1, 1], [], []>} : vector<4x16xf32>, vector<16x16xf32>, vector<4x16xf32> -> vector<4x16xf32>
    %cst_167 = arith.constant dense<0.000000e+00> : vector<4x16xf32>
    %482 = tpu.matmul %480, %438, %cst_167 {dimension_numbers = #tpu.dot_dimension_numbers<[1], [0], [0], [1], [0, 0, 1, 1], [], []>} : vector<4x16xf32>, vector<16x16xf32>, vector<4x16xf32> -> vector<4x16xf32>
    %cst_168 = arith.constant dense<0.000000e+00> : vector<4x16xf32>
    %483 = tpu.matmul %480, %439, %cst_168 {dimension_numbers = #tpu.dot_dimension_numbers<[1], [0], [0], [1], [0, 0, 1, 1], [], []>} : vector<4x16xf32>, vector<16x16xf32>, vector<4x16xf32> -> vector<4x16xf32>
    %484 = vector.extract_strided_slice %443 {offsets = [4, 0], sizes = [4, 16], strides = [1, 1]} : vector<16x16xf32> to vector<4x16xf32>
    %485 = arith.addf %484, %481 : vector<4x16xf32>
    %cst_169 = arith.constant 0.000000e+00 : f32
    %486 = vector.broadcast %cst_169 : f32 to vector<4x16xf32>
    %487 = arith.subf %486, %485 : vector<4x16xf32>
    %488 = math.exp %487 : vector<4x16xf32>
    %cst_170 = arith.constant 1.000000e+00 : f32
    %489 = vector.broadcast %cst_170 : f32 to vector<4x16xf32>
    %490 = arith.addf %489, %488 : vector<4x16xf32>
    %cst_171 = arith.constant 1.000000e+00 : f32
    %491 = vector.broadcast %cst_171 : f32 to vector<4x16xf32>
    %492 = arith.divf %491, %490 : vector<4x16xf32>
    %493 = vector.extract_strided_slice %444 {offsets = [4, 0], sizes = [4, 16], strides = [1, 1]} : vector<16x16xf32> to vector<4x16xf32>
    %494 = arith.addf %493, %482 : vector<4x16xf32>
    %cst_172 = arith.constant 0.000000e+00 : f32
    %495 = vector.broadcast %cst_172 : f32 to vector<4x16xf32>
    %496 = arith.subf %495, %494 : vector<4x16xf32>
    %497 = math.exp %496 : vector<4x16xf32>
    %cst_173 = arith.constant 1.000000e+00 : f32
    %498 = vector.broadcast %cst_173 : f32 to vector<4x16xf32>
    %499 = arith.addf %498, %497 : vector<4x16xf32>
    %cst_174 = arith.constant 1.000000e+00 : f32
    %500 = vector.broadcast %cst_174 : f32 to vector<4x16xf32>
    %501 = arith.divf %500, %499 : vector<4x16xf32>
    %502 = vector.extract_strided_slice %445 {offsets = [4, 0], sizes = [4, 16], strides = [1, 1]} : vector<16x16xf32> to vector<4x16xf32>
    %503 = arith.addf %483, %448 : vector<4x16xf32>
    %504 = arith.mulf %492, %503 : vector<4x16xf32>
    %505 = arith.addf %502, %504 : vector<4x16xf32>
    %506 = math.tanh %505 : vector<4x16xf32>
    %cst_175 = arith.constant 1.000000e+00 : f32
    %507 = vector.broadcast %cst_175 : f32 to vector<4x16xf32>
    %508 = arith.subf %507, %501 : vector<4x16xf32>
    %509 = arith.mulf %508, %506 : vector<4x16xf32>
    %510 = arith.mulf %501, %480 : vector<4x16xf32>
    %511 = arith.addf %509, %510 : vector<4x16xf32>
    %cst_176 = arith.constant dense<0.000000e+00> : vector<4x16xf32>
    %512 = tpu.matmul %511, %437, %cst_176 {dimension_numbers = #tpu.dot_dimension_numbers<[1], [0], [0], [1], [0, 0, 1, 1], [], []>} : vector<4x16xf32>, vector<16x16xf32>, vector<4x16xf32> -> vector<4x16xf32>
    %cst_177 = arith.constant dense<0.000000e+00> : vector<4x16xf32>
    %513 = tpu.matmul %511, %438, %cst_177 {dimension_numbers = #tpu.dot_dimension_numbers<[1], [0], [0], [1], [0, 0, 1, 1], [], []>} : vector<4x16xf32>, vector<16x16xf32>, vector<4x16xf32> -> vector<4x16xf32>
    %cst_178 = arith.constant dense<0.000000e+00> : vector<4x16xf32>
    %514 = tpu.matmul %511, %439, %cst_178 {dimension_numbers = #tpu.dot_dimension_numbers<[1], [0], [0], [1], [0, 0, 1, 1], [], []>} : vector<4x16xf32>, vector<16x16xf32>, vector<4x16xf32> -> vector<4x16xf32>
    %515 = vector.extract_strided_slice %443 {offsets = [8, 0], sizes = [4, 16], strides = [1, 1]} : vector<16x16xf32> to vector<4x16xf32>
    %516 = arith.addf %515, %512 : vector<4x16xf32>
    %cst_179 = arith.constant 0.000000e+00 : f32
    %517 = vector.broadcast %cst_179 : f32 to vector<4x16xf32>
    %518 = arith.subf %517, %516 : vector<4x16xf32>
    %519 = math.exp %518 : vector<4x16xf32>
    %cst_180 = arith.constant 1.000000e+00 : f32
    %520 = vector.broadcast %cst_180 : f32 to vector<4x16xf32>
    %521 = arith.addf %520, %519 : vector<4x16xf32>
    %cst_181 = arith.constant 1.000000e+00 : f32
    %522 = vector.broadcast %cst_181 : f32 to vector<4x16xf32>
    %523 = arith.divf %522, %521 : vector<4x16xf32>
    %524 = vector.extract_strided_slice %444 {offsets = [8, 0], sizes = [4, 16], strides = [1, 1]} : vector<16x16xf32> to vector<4x16xf32>
    %525 = arith.addf %524, %513 : vector<4x16xf32>
    %cst_182 = arith.constant 0.000000e+00 : f32
    %526 = vector.broadcast %cst_182 : f32 to vector<4x16xf32>
    %527 = arith.subf %526, %525 : vector<4x16xf32>
    %528 = math.exp %527 : vector<4x16xf32>
    %cst_183 = arith.constant 1.000000e+00 : f32
    %529 = vector.broadcast %cst_183 : f32 to vector<4x16xf32>
    %530 = arith.addf %529, %528 : vector<4x16xf32>
    %cst_184 = arith.constant 1.000000e+00 : f32
    %531 = vector.broadcast %cst_184 : f32 to vector<4x16xf32>
    %532 = arith.divf %531, %530 : vector<4x16xf32>
    %533 = vector.extract_strided_slice %445 {offsets = [8, 0], sizes = [4, 16], strides = [1, 1]} : vector<16x16xf32> to vector<4x16xf32>
    %534 = arith.addf %514, %448 : vector<4x16xf32>
    %535 = arith.mulf %523, %534 : vector<4x16xf32>
    %536 = arith.addf %533, %535 : vector<4x16xf32>
    %537 = math.tanh %536 : vector<4x16xf32>
    %cst_185 = arith.constant 1.000000e+00 : f32
    %538 = vector.broadcast %cst_185 : f32 to vector<4x16xf32>
    %539 = arith.subf %538, %532 : vector<4x16xf32>
    %540 = arith.mulf %539, %537 : vector<4x16xf32>
    %541 = arith.mulf %532, %511 : vector<4x16xf32>
    %542 = arith.addf %540, %541 : vector<4x16xf32>
    %cst_186 = arith.constant dense<0.000000e+00> : vector<4x16xf32>
    %543 = tpu.matmul %542, %437, %cst_186 {dimension_numbers = #tpu.dot_dimension_numbers<[1], [0], [0], [1], [0, 0, 1, 1], [], []>} : vector<4x16xf32>, vector<16x16xf32>, vector<4x16xf32> -> vector<4x16xf32>
    %cst_187 = arith.constant dense<0.000000e+00> : vector<4x16xf32>
    %544 = tpu.matmul %542, %438, %cst_187 {dimension_numbers = #tpu.dot_dimension_numbers<[1], [0], [0], [1], [0, 0, 1, 1], [], []>} : vector<4x16xf32>, vector<16x16xf32>, vector<4x16xf32> -> vector<4x16xf32>
    %cst_188 = arith.constant dense<0.000000e+00> : vector<4x16xf32>
    %545 = tpu.matmul %542, %439, %cst_188 {dimension_numbers = #tpu.dot_dimension_numbers<[1], [0], [0], [1], [0, 0, 1, 1], [], []>} : vector<4x16xf32>, vector<16x16xf32>, vector<4x16xf32> -> vector<4x16xf32>
    %546 = vector.extract_strided_slice %443 {offsets = [12, 0], sizes = [4, 16], strides = [1, 1]} : vector<16x16xf32> to vector<4x16xf32>
    %547 = arith.addf %546, %543 : vector<4x16xf32>
    %cst_189 = arith.constant 0.000000e+00 : f32
    %548 = vector.broadcast %cst_189 : f32 to vector<4x16xf32>
    %549 = arith.subf %548, %547 : vector<4x16xf32>
    %550 = math.exp %549 : vector<4x16xf32>
    %cst_190 = arith.constant 1.000000e+00 : f32
    %551 = vector.broadcast %cst_190 : f32 to vector<4x16xf32>
    %552 = arith.addf %551, %550 : vector<4x16xf32>
    %cst_191 = arith.constant 1.000000e+00 : f32
    %553 = vector.broadcast %cst_191 : f32 to vector<4x16xf32>
    %554 = arith.divf %553, %552 : vector<4x16xf32>
    %555 = vector.extract_strided_slice %444 {offsets = [12, 0], sizes = [4, 16], strides = [1, 1]} : vector<16x16xf32> to vector<4x16xf32>
    %556 = arith.addf %555, %544 : vector<4x16xf32>
    %cst_192 = arith.constant 0.000000e+00 : f32
    %557 = vector.broadcast %cst_192 : f32 to vector<4x16xf32>
    %558 = arith.subf %557, %556 : vector<4x16xf32>
    %559 = math.exp %558 : vector<4x16xf32>
    %cst_193 = arith.constant 1.000000e+00 : f32
    %560 = vector.broadcast %cst_193 : f32 to vector<4x16xf32>
    %561 = arith.addf %560, %559 : vector<4x16xf32>
    %cst_194 = arith.constant 1.000000e+00 : f32
    %562 = vector.broadcast %cst_194 : f32 to vector<4x16xf32>
    %563 = arith.divf %562, %561 : vector<4x16xf32>
    %564 = vector.extract_strided_slice %445 {offsets = [12, 0], sizes = [4, 16], strides = [1, 1]} : vector<16x16xf32> to vector<4x16xf32>
    %565 = arith.addf %545, %448 : vector<4x16xf32>
    %566 = arith.mulf %554, %565 : vector<4x16xf32>
    %567 = arith.addf %564, %566 : vector<4x16xf32>
    %568 = math.tanh %567 : vector<4x16xf32>
    %cst_195 = arith.constant 1.000000e+00 : f32
    %569 = vector.broadcast %cst_195 : f32 to vector<4x16xf32>
    %570 = arith.subf %569, %563 : vector<4x16xf32>
    %571 = arith.mulf %570, %568 : vector<4x16xf32>
    %572 = arith.mulf %563, %542 : vector<4x16xf32>
    %573 = arith.addf %571, %572 : vector<4x16xf32>
    %574 = vector.extract_strided_slice %573 {offsets = [0, 0], sizes = [2, 16], strides = [1, 1]} : vector<4x16xf32> to vector<2x16xf32>
    %575 = vector.extract_strided_slice %427 {offsets = [32, 0], sizes = [16, 8], strides = [1, 1]} : vector<64x8xf32> to vector<16x8xf32>
    %cst_196 = arith.constant dense<0.000000e+00> : vector<2x8xf32>
    %576 = tpu.matmul %574, %575, %cst_196 {dimension_numbers = #tpu.dot_dimension_numbers<[1], [0], [0], [1], [0, 0, 1, 1], [], []>} : vector<2x16xf32>, vector<16x8xf32>, vector<2x8xf32> -> vector<2x8xf32>
    %577 = arith.addf %432, %576 : vector<2x8xf32>
    %578 = vector.extract_strided_slice %573 {offsets = [2, 0], sizes = [2, 16], strides = [1, 1]} : vector<4x16xf32> to vector<2x16xf32>
    %579 = vector.extract_strided_slice %427 {offsets = [48, 0], sizes = [16, 8], strides = [1, 1]} : vector<64x8xf32> to vector<16x8xf32>
    %cst_197 = arith.constant dense<0.000000e+00> : vector<2x8xf32>
    %580 = tpu.matmul %578, %579, %cst_197 {dimension_numbers = #tpu.dot_dimension_numbers<[1], [0], [0], [1], [0, 0, 1, 1], [], []>} : vector<2x16xf32>, vector<16x8xf32>, vector<2x8xf32> -> vector<2x8xf32>
    %581 = arith.addf %577, %580 : vector<2x8xf32>
    %c0_198 = arith.constant 0 : index
    %c0_199 = arith.constant 0 : index
    %c0_200 = arith.constant 0 : index
    %582 = vector.load %arg1[%c0_198, %c0_199, %c0_200] : memref<2x16x8xf32, #tpu.memory_space<vmem>>, vector<2x16x8xf32>
    %c4 = arith.constant 4 : index
    %583 = memref.load %arg3[%c4] : memref<5xf32, #tpu.memory_space<smem>>
    %584 = vector.broadcast %583 : f32 to vector<2x8xf32>
    %585 = arith.addf %581, %584 : vector<2x8xf32>
    %c0_201 = arith.constant 0 : index
    %586 = memref.load %arg3[%c0_201] : memref<5xf32, #tpu.memory_space<smem>>
    %587 = vector.extract_strided_slice %582 {offsets = [0, 12, 0], sizes = [2, 1, 8], strides = [1, 1, 1]} : vector<2x16x8xf32> to vector<2x1x8xf32>
    %588 = vector.shape_cast %587 : vector<2x1x8xf32> to vector<2x8xf32>
    %589 = vector.broadcast %586 : f32 to vector<2x8xf32>
    %590 = arith.mulf %589, %588 : vector<2x8xf32>
    %591 = arith.addf %585, %590 : vector<2x8xf32>
    %c1 = arith.constant 1 : index
    %592 = memref.load %arg3[%c1] : memref<5xf32, #tpu.memory_space<smem>>
    %593 = vector.extract_strided_slice %582 {offsets = [0, 13, 0], sizes = [2, 1, 8], strides = [1, 1, 1]} : vector<2x16x8xf32> to vector<2x1x8xf32>
    %594 = vector.shape_cast %593 : vector<2x1x8xf32> to vector<2x8xf32>
    %595 = vector.broadcast %592 : f32 to vector<2x8xf32>
    %596 = arith.mulf %595, %594 : vector<2x8xf32>
    %597 = arith.addf %591, %596 : vector<2x8xf32>
    %c2 = arith.constant 2 : index
    %598 = memref.load %arg3[%c2] : memref<5xf32, #tpu.memory_space<smem>>
    %599 = vector.extract_strided_slice %582 {offsets = [0, 14, 0], sizes = [2, 1, 8], strides = [1, 1, 1]} : vector<2x16x8xf32> to vector<2x1x8xf32>
    %600 = vector.shape_cast %599 : vector<2x1x8xf32> to vector<2x8xf32>
    %601 = vector.broadcast %598 : f32 to vector<2x8xf32>
    %602 = arith.mulf %601, %600 : vector<2x8xf32>
    %603 = arith.addf %597, %602 : vector<2x8xf32>
    %c3 = arith.constant 3 : index
    %604 = memref.load %arg3[%c3] : memref<5xf32, #tpu.memory_space<smem>>
    %605 = vector.extract_strided_slice %582 {offsets = [0, 15, 0], sizes = [2, 1, 8], strides = [1, 1, 1]} : vector<2x16x8xf32> to vector<2x1x8xf32>
    %606 = vector.shape_cast %605 : vector<2x1x8xf32> to vector<2x8xf32>
    %607 = vector.broadcast %604 : f32 to vector<2x8xf32>
    %608 = arith.mulf %607, %606 : vector<2x8xf32>
    %609 = arith.addf %603, %608 : vector<2x8xf32>
    %cst_202 = arith.constant 0.000000e+00 : f32
    %610 = vector.broadcast %cst_202 : f32 to vector<2x8xf32>
    %611 = arith.subf %610, %609 : vector<2x8xf32>
    %612 = math.exp %611 : vector<2x8xf32>
    %cst_203 = arith.constant 1.000000e+00 : f32
    %613 = vector.broadcast %cst_203 : f32 to vector<2x8xf32>
    %614 = arith.addf %613, %612 : vector<2x8xf32>
    %cst_204 = arith.constant 1.000000e+00 : f32
    %615 = vector.broadcast %cst_204 : f32 to vector<2x8xf32>
    %616 = arith.divf %615, %614 : vector<2x8xf32>
    %c0_205 = arith.constant 0 : index
    %c0_206 = arith.constant 0 : index
    %617 = vector.load %arg4[%c0_205, %c0_206] : memref<2x8xf32, #tpu.memory_space<vmem>>, vector<2x8xf32>
    tpu.vector_store %arg4[%c0_205, %c0_206], %616 {strides = array<i32>} : memref<2x8xf32, #tpu.memory_space<vmem>>, vector<2x8xf32>,
    return
  }
}

</mosaic_0001>

<llo_original>
// kernel: fwd.1
$region0: #{fwd.1}
  #allocation0 [shape = 'u32[]', space=smem, size = 0x4, offset = 0x4, fixed_abs, tag = 'smem constant byte address 0x4 - core index']
  #allocation1 [shape = 'u32[144,128]{1,0:T(1,128)}', space=vmem, size = 0x12000, scoped, tag = 'internal scratch']
  %s0 = inlined_call_operand.vmem [shape: f32[26,32], index: 0, kind: input, shape index: {}]
  %s1 = inlined_call_operand.vmem [shape: f32[2,16,8], index: 1, kind: input, shape index: {}]
  %s2 = inlined_call_operand.vmem [shape: f32[352,96], index: 2, kind: input, shape index: {}]
  %s3 = inlined_call_operand.vmem [shape: f32[5], index: 3, kind: input, shape index: {}]
  %s4 = inlined_call_operand.hbm [shape: f32[2,8], index: 4, kind: output, shape index: {}]
  %s5 = sld [smem:[#allocation0]]
  $region30: #{fwd.1} parent=0
    _
  %s7 = ssub.s32 1, %s5
  %s8 = scalar_select 0, %s7, %s5
  $region1: #{fwd.1} parent=0
    #allocation2 [shape = 'u8[512]{0}', space=smem, size = 0x200, scoped, tag = 'input window, operand 3, single buffered']
    #allocation3 [shape = 's32[1]{0}', space=sflag, size = 0x4, scoped, tag = 'scoped memory for fwd.1']
    #allocation4 [shape = 's32[1]{0}', space=sflag, size = 0x4, scoped, tag = 'scoped memory for fwd.1']
    #allocation5 [shape = 'u8[1024]{0}', space=vmem, size = 0x400, scoped, tag = 'output window, operand 0, single buffered']
    %9 = vsyncpa [#allocation4], 0
    %10 = vsyncpa [#allocation3], 0
    // Predicated region
    $region2: #{fwd.1} parent=1 // pred_check
      _
    $region3: #{fwd.1} parent=1 // pred_check_branch
      %12 = sbr.rel (0) target = $region5
    $region4: #{fwd.1} parent=1 // pred_region
      _
    $region5: #{fwd.1} parent=1 // pred_fallthru
      _
    // Predicated region
    $region6: #{fwd.1} parent=1 // pred_check
      _
    $region7: #{fwd.1} parent=1 // pred_check_branch
      %14 = sbr.rel (0) target = $region9
    $region8: #{fwd.1} parent=1 // pred_region
      _
    $region9: #{fwd.1} parent=1 // pred_fallthru
      _
    // Predicated region
    $region10: #{fwd.1} parent=1 // pred_check
      _
    $region11: #{fwd.1} parent=1 // pred_check_branch
      %16 = sbr.rel (0) target = $region13
    $region12: #{fwd.1} parent=1 // pred_region
      _
    $region13: #{fwd.1} parent=1 // pred_fallthru
      _
    // Predicated region
    $region14: #{fwd.1} parent=1 // pred_check
      _
    $region15: #{fwd.1} parent=1 // pred_check_branch
      %18 = sbr.rel (0) target = $region17
    $region16: #{fwd.1} parent=1 // pred_region
      %s20 = ssub.s32 16, 16
      %21 = vsyncadd [#allocation4], %s20
      %s23 = sshll.u32 %s3, 4
      %s24 = int_to_ptr.vmem [resolvable:$true] %s23
      %26 = dma.vmem_to_smem %s24, 16, [#allocation2], [#allocation4]
    $region17: #{fwd.1} parent=1 // pred_fallthru
      _
    // Predicated region
    $region18: #{fwd.1} parent=1 // pred_check
      _
    $region19: #{fwd.1} parent=1 // pred_check_branch
      %28 = sbr.rel (0) target = $region21
    $region20: #{fwd.1} parent=1 // pred_region
      %29 = dma.done [#allocation4], 16
    $region21: #{fwd.1} parent=1 // pred_fallthru
      _
    %30 = sfence
    %v31 = vld [vmem:[%s0] sm:$0xff]
    %v32 = vld [vmem:[%s0 + $0x8] sm:$0xff]
    %v33 = vld [vmem:[%s0 + $0x10] sm:$0xff]
    %v34 = vld [vmem:[%s0 + $0x18] sm:$0x3]
    %v35 = vld [vmem:[%s2] sm:$0xff]
    %v36 = vld [vmem:[%s2 + $0x8] sm:$0xff]
    %v37 = vld [vmem:[%s2 + $0x10] sm:$0xff]
    %v38 = vld [vmem:[%s2 + $0x18] sm:$0xff]
    %v39 = vld [vmem:[%s2 + $0x20] sm:$0x1]
    %v40 = vlaneseq
    %v41 = vshrl.u32 %v40, 7
    %v42 = vsub.s32 0, %v41
    %v43 = vrot.slane %v39, %v42
    %vm44 = vcmask 261120
    %v46 = vsel %vm44, %v31, 0
    %v49 = vsel %vm44, %v32, 0
    %v52 = vsel %vm44, %v33, 0
    %v55 = vsel %vm44, %v34, 0
    %57 = vmatprep.subr.mxu0 0.0
    %58 = vmatpush1.msra.mxu0 0.0
    %59 = vmatprep.subr.mxu0 0.0
    %60 = vmatpush1.msra.mxu0 0.0
    %61 = vmatprep.subr.mxu0 0.0
    %62 = vmatpush1.msra.mxu0 0.0
    %63 = vmatprep.subr.mxu0 0.0
    %64 = vmatpush1.msra.mxu0 0.0
    %65 = vmatprep.subr.mxu0 0.0
    %66 = vmatpush1.msra.mxu0 0.0
    %67 = vmatprep.subr.mxu0 0.0
    %68 = vmatpush1.msra.mxu0 0.0
    %69 = vmatprep.subr.mxu0 0.0
    %70 = vmatpush1.msra.mxu0 0.0
    %71 = vmatprep.subr.mxu0 0.0
    %72 = vmatpush1.msra.mxu0 0.0
    %73 = vmatprep.subr.mxu0 0.0
    %74 = vmatpush1.msra.mxu0 0.0
    %75 = vmatprep.subr.mxu0 0.0
    %76 = vmatpush1.msra.mxu0 0.0
    %77 = vmatprep.subr.mxu0 0.0
    %78 = vmatpush1.msra.mxu0 0.0
    %79 = vmatprep.subr.mxu0 0.0
    %80 = vmatpush1.msra.mxu0 0.0
    %81 = vmatprep.subr.mxu0 0.0
    %82 = vmatpush1.msra.mxu0 %v38
    %83 = vmatprep.subr.mxu0 0.0
    %84 = vmatpush1.msra.mxu0 %v37
    %85 = vmatprep.subr.mxu0 0.0
    %86 = vmatpush1.msra.mxu0 %v36
    %87 = vmatprep.subr.mxu0 0.0
    %88 = vmatpush1.msra.mxu0 %v35
    %89 = vmatprep.subr.mxu0 0.0
    %90 = vmatpush2.msra.mxu0 0.0
    %91 = vmatprep.subr.mxu0 0.0
    %92 = vmatpush2.msra.mxu0 0.0
    %93 = vmatprep.subr.mxu0 0.0
    %94 = vmatpush2.msra.mxu0 0.0
    %95 = vmatprep.subr.mxu0 0.0
    %96 = vmatpush2.msra.mxu0 0.0
    %97 = vmatprep.subr.mxu0 0.0
    %98 = vmatpush2.msra.mxu0 0.0
    %99 = vmatprep.subr.mxu0 0.0
    %100 = vmatpush2.msra.mxu0 0.0
    %101 = vmatprep.subr.mxu0 0.0
    %102 = vmatpush2.msra.mxu0 0.0
    %103 = vmatprep.subr.mxu0 0.0
    %104 = vmatpush2.msra.mxu0 0.0
    %105 = vmatprep.subr.mxu0 0.0
    %106 = vmatpush2.msra.mxu0 0.0
    %107 = vmatprep.subr.mxu0 0.0
    %108 = vmatpush2.msra.mxu0 0.0
    %109 = vmatprep.subr.mxu0 0.0
    %110 = vmatpush2.msra.mxu0 0.0
    %111 = vmatprep.subr.mxu0 0.0
    %112 = vmatpush2.msra.mxu0 0.0
    %113 = vmatprep.subr.mxu0 0.0
    %114 = vmatpush2.msra.mxu0 0.0
    %115 = vmatprep.subr.mxu0 0.0
    %116 = vmatpush2.msra.mxu0 0.0
    %117 = vmatprep.subr.mxu0 0.0
    %118 = vmatpush2.msra.mxu0 0.0
    %119 = vmatprep.subr.mxu0 0.0
    %120 = vmatpush2.msra.mxu0 0.0
    %121 = vmatprep.mubr.f32.mxu0 0.0
    %122 = vmatmul.mubr.f32.gmra.mxu0 %v46
    %v123 = vpop.f32.mrf.mxu0
    %v124 = vadd.f32 %v43, %v123
    %v125 = vpop.f32.mrf.mxu0
    %126 = vmatprep.mubr.f32.mxu0 0.0
    %127 = vmatmul.mubr.f32.gmra.mxu0 %v49
    %v128 = vpop.f32.mrf.mxu0
    %v129 = vadd.f32 %v43, %v128
    %v130 = vpop.f32.mrf.mxu0
    %131 = vmatprep.mubr.f32.mxu0 0.0
    %132 = vmatmul.mubr.f32.gmra.mxu0 %v52
    %v133 = vpop.f32.mrf.mxu0
    %v134 = vadd.f32 %v43, %v133
    %v135 = vpop.f32.mrf.mxu0
    %136 = vmatprep.mubr.f32.mxu0 0.0
    %137 = vmatmul.mubr.f32.gmra.mxu0 %v55
    %v138 = vpop.f32.mrf.mxu0
    %v139 = vadd.f32 %v43, %v138
    %v140 = vpop.f32.mrf.mxu0
    %141 = vdwg.mxu0
    %v142 = vmax.f32 %v124, 0.0
    %v143 = vmax.f32 %v129, 0.0
    %v144 = vmax.f32 %v134, 0.0
    %v145 = vmax.f32 %v139, 0.0
    %v146 = vld [vmem:[%s2 + $0x28] sm:$0xff]
    %v147 = vld [vmem:[%s2 + $0x30] sm:$0xff]
    %v148 = vld [vmem:[%s2 + $0x38] sm:$0xff]
    %v149 = vld [vmem:[%s2 + $0x40] sm:$0xff]
    %v150 = vld [vmem:[%s2 + $0x48] sm:$0x1]
    %v151 = vld [vmem:[%s2 + $0x50] sm:$0x1]
    %v152 = vld [vmem:[%s2 + $0x58] sm:$0xff]
    %v153 = vld [vmem:[%s2 + $0x60] sm:$0xff]
    %v154 = vld [vmem:[%s2 + $0x68] sm:$0xff]
    %v155 = vld [vmem:[%s2 + $0x70] sm:$0xff]
    %v156 = vld [vmem:[%s2 + $0x78] sm:$0xff]
    %v157 = vld [vmem:[%s2 + $0x80] sm:$0xff]
    %v158 = vld [vmem:[%s2 + $0x88] sm:$0xff]
    %v159 = vld [vmem:[%s2 + $0x90] sm:$0xff]
    %v160 = vld [vmem:[%s2 + $0x98] sm:$0xff]
    %v161 = vld [vmem:[%s2 + $0xa0] sm:$0xff]
    %v162 = vld [vmem:[%s2 + $0xa8] sm:$0xff]
    %v163 = vld [vmem:[%s2 + $0xb0] sm:$0xff]
    %v164 = vlaneseq
    %v165 = vshrl.u32 %v164, 7
    %v166 = vsub.s32 0, %v165
    %v167 = vrot.slane %v150, %v166
    %v169 = vsel %vm44, %v142, 0
    %v172 = vsel %vm44, %v143, 0
    %v175 = vsel %vm44, %v144, 0
    %v178 = vsel %vm44, %v145, 0
    %180 = vmatprep.subr.mxu0 0.0
    %181 = vmatpush1.msra.mxu0 0.0
    %182 = vmatprep.subr.mxu0 0.0
    %183 = vmatpush1.msra.mxu0 0.0
    %184 = vmatprep.subr.mxu0 0.0
    %185 = vmatpush1.msra.mxu0 0.0
    %186 = vmatprep.subr.mxu0 0.0
    %187 = vmatpush1.msra.mxu0 0.0
    %188 = vmatprep.subr.mxu0 0.0
    %189 = vmatpush1.msra.mxu0 0.0
    %190 = vmatprep.subr.mxu0 0.0
    %191 = vmatpush1.msra.mxu0 0.0
    %192 = vmatprep.subr.mxu0 0.0
    %193 = vmatpush1.msra.mxu0 0.0
    %194 = vmatprep.subr.mxu0 0.0
    %195 = vmatpush1.msra.mxu0 0.0
    %196 = vmatprep.subr.mxu0 0.0
    %197 = vmatpush1.msra.mxu0 0.0
    %198 = vmatprep.subr.mxu0 0.0
    %199 = vmatpush1.msra.mxu0 0.0
    %200 = vmatprep.subr.mxu0 0.0
    %201 = vmatpush1.msra.mxu0 0.0
    %202 = vmatprep.subr.mxu0 0.0
    %203 = vmatpush1.msra.mxu0 0.0
    %204 = vmatprep.subr.mxu0 0.0
    %205 = vmatpush1.msra.mxu0 %v149
    %206 = vmatprep.subr.mxu0 0.0
    %207 = vmatpush1.msra.mxu0 %v148
    %208 = vmatprep.subr.mxu0 0.0
    %209 = vmatpush1.msra.mxu0 %v147
    %210 = vmatprep.subr.mxu0 0.0
    %211 = vmatpush1.msra.mxu0 %v146
    %212 = vmatprep.subr.mxu0 0.0
    %213 = vmatpush2.msra.mxu0 0.0
    %214 = vmatprep.subr.mxu0 0.0
    %215 = vmatpush2.msra.mxu0 0.0
    %216 = vmatprep.subr.mxu0 0.0
    %217 = vmatpush2.msra.mxu0 0.0
    %218 = vmatprep.subr.mxu0 0.0
    %219 = vmatpush2.msra.mxu0 0.0
    %220 = vmatprep.subr.mxu0 0.0
    %221 = vmatpush2.msra.mxu0 0.0
    %222 = vmatprep.subr.mxu0 0.0
    %223 = vmatpush2.msra.mxu0 0.0
    %224 = vmatprep.subr.mxu0 0.0
    %225 = vmatpush2.msra.mxu0 0.0
    %226 = vmatprep.subr.mxu0 0.0
    %227 = vmatpush2.msra.mxu0 0.0
    %228 = vmatprep.subr.mxu0 0.0
    %229 = vmatpush2.msra.mxu0 0.0
    %230 = vmatprep.subr.mxu0 0.0
    %231 = vmatpush2.msra.mxu0 0.0
    %232 = vmatprep.subr.mxu0 0.0
    %233 = vmatpush2.msra.mxu0 0.0
    %234 = vmatprep.subr.mxu0 0.0
    %235 = vmatpush2.msra.mxu0 0.0
    %236 = vmatprep.subr.mxu0 0.0
    %237 = vmatpush2.msra.mxu0 0.0
    %238 = vmatprep.subr.mxu0 0.0
    %239 = vmatpush2.msra.mxu0 0.0
    %240 = vmatprep.subr.mxu0 0.0
    %241 = vmatpush2.msra.mxu0 0.0
    %242 = vmatprep.subr.mxu0 0.0
    %243 = vmatpush2.msra.mxu0 0.0
    %244 = vmatprep.mubr.f32.mxu0 0.0
    %245 = vmatmul.mubr.f32.gmra.mxu0 %v169
    %v246 = vpop.f32.mrf.mxu0
    %v247 = vadd.f32 %v167, %v246
    %v248 = vpop.f32.mrf.mxu0
    %249 = vmatprep.mubr.f32.mxu0 0.0
    %250 = vmatmul.mubr.f32.gmra.mxu0 %v172
    %v251 = vpop.f32.mrf.mxu0
    %v252 = vadd.f32 %v167, %v251
    %v253 = vpop.f32.mrf.mxu0
    %254 = vmatprep.mubr.f32.mxu0 0.0
    %255 = vmatmul.mubr.f32.gmra.mxu0 %v175
    %v256 = vpop.f32.mrf.mxu0
    %v257 = vadd.f32 %v167, %v256
    %v258 = vpop.f32.mrf.mxu0
    %259 = vmatprep.mubr.f32.mxu0 0.0
    %260 = vmatmul.mubr.f32.gmra.mxu0 %v178
    %v261 = vpop.f32.mrf.mxu0
    %v262 = vadd.f32 %v167, %v261
    %v263 = vpop.f32.mrf.mxu0
    %264 = vdwg.mxu0
    %v265 = vlaneseq
    %v266 = vshrl.u32 %v265, 7
    %v267 = vsub.s32 0, %v266
    %v268 = vrot.slane %v151, %v267
    %v269 = vadd.f32 %v268, 0.0
    %v271 = vsel %vm44, 0.0, 0
    %273 = vmatprep.subr.mxu0 0.0
    %274 = vmatpush1.msra.mxu0 0.0
    %275 = vmatprep.subr.mxu0 0.0
    %276 = vmatpush1.msra.mxu0 0.0
    %277 = vmatprep.subr.mxu0 0.0
    %278 = vmatpush1.msra.mxu0 0.0
    %279 = vmatprep.subr.mxu0 0.0
    %280 = vmatpush1.msra.mxu0 0.0
    %281 = vmatprep.subr.mxu0 0.0
    %282 = vmatpush1.msra.mxu0 0.0
    %283 = vmatprep.subr.mxu0 0.0
    %284 = vmatpush1.msra.mxu0 0.0
    %285 = vmatprep.subr.mxu0 0.0
    %286 = vmatpush1.msra.mxu0 0.0
    %287 = vmatprep.subr.mxu0 0.0
    %288 = vmatpush1.msra.mxu0 0.0
    %289 = vmatprep.subr.mxu0 0.0
    %290 = vmatpush1.msra.mxu0 0.0
    %291 = vmatprep.subr.mxu0 0.0
    %292 = vmatpush1.msra.mxu0 0.0
    %293 = vmatprep.subr.mxu0 0.0
    %294 = vmatpush1.msra.mxu0 0.0
    %295 = vmatprep.subr.mxu0 0.0
    %296 = vmatpush1.msra.mxu0 0.0
    %297 = vmatprep.subr.mxu0 0.0
    %298 = vmatpush1.msra.mxu0 %v155
    %299 = vmatprep.subr.mxu0 0.0
    %300 = vmatpush1.msra.mxu0 %v154
    %301 = vmatprep.subr.mxu0 0.0
    %302 = vmatpush1.msra.mxu0 %v153
    %303 = vmatprep.subr.mxu0 0.0
    %304 = vmatpush1.msra.mxu0 %v152
    %305 = vmatprep.subr.mxu0 0.0
    %306 = vmatpush2.msra.mxu0 0.0
    %307 = vmatprep.subr.mxu0 0.0
    %308 = vmatpush2.msra.mxu0 0.0
    %309 = vmatprep.subr.mxu0 0.0
    %310 = vmatpush2.msra.mxu0 0.0
    %311 = vmatprep.subr.mxu0 0.0
    %312 = vmatpush2.msra.mxu0 0.0
    %313 = vmatprep.subr.mxu0 0.0
    %314 = vmatpush2.msra.mxu0 0.0
    %315 = vmatprep.subr.mxu0 0.0
    %316 = vmatpush2.msra.mxu0 0.0
    %317 = vmatprep.subr.mxu0 0.0
    %318 = vmatpush2.msra.mxu0 0.0
    %319 = vmatprep.subr.mxu0 0.0
    %320 = vmatpush2.msra.mxu0 0.0
    %321 = vmatprep.subr.mxu0 0.0
    %322 = vmatpush2.msra.mxu0 0.0
    %323 = vmatprep.subr.mxu0 0.0
    %324 = vmatpush2.msra.mxu0 0.0
    %325 = vmatprep.subr.mxu0 0.0
    %326 = vmatpush2.msra.mxu0 0.0
    %327 = vmatprep.subr.mxu0 0.0
    %328 = vmatpush2.msra.mxu0 0.0
    %329 = vmatprep.subr.mxu0 0.0
    %330 = vmatpush2.msra.mxu0 0.0
    %331 = vmatprep.subr.mxu0 0.0
    %332 = vmatpush2.msra.mxu0 0.0
    %333 = vmatprep.subr.mxu0 0.0
    %334 = vmatpush2.msra.mxu0 0.0
    %335 = vmatprep.subr.mxu0 0.0
    %336 = vmatpush2.msra.mxu0 0.0
    %337 = vmatprep.mubr.f32.mxu0 0.0
    %338 = vmatmul.mubr.f32.gmra.mxu0 %v271
    %v339 = vpop.f32.mrf.mxu0
    %v340 = vadd.f32 0.0, %v339
    %v341 = vpop.f32.mrf.mxu0
    %342 = vdwg.mxu0
    %343 = vmatprep.subr.mxu0 0.0
    %344 = vmatpush1.msra.mxu0 0.0
    %345 = vmatprep.subr.mxu0 0.0
    %346 = vmatpush1.msra.mxu0 0.0
    %347 = vmatprep.subr.mxu0 0.0
    %348 = vmatpush1.msra.mxu0 0.0
    %349 = vmatprep.subr.mxu0 0.0
    %350 = vmatpush1.msra.mxu0 0.0
    %351 = vmatprep.subr.mxu0 0.0
    %352 = vmatpush1.msra.mxu0 0.0
    %353 = vmatprep.subr.mxu0 0.0
    %354 = vmatpush1.msra.mxu0 0.0
    %355 = vmatprep.subr.mxu0 0.0
    %356 = vmatpush1.msra.mxu0 0.0
    %357 = vmatprep.subr.mxu0 0.0
    %358 = vmatpush1.msra.mxu0 0.0
    %359 = vmatprep.subr.mxu0 0.0
    %360 = vmatpush1.msra.mxu0 0.0
    %361 = vmatprep.subr.mxu0 0.0
    %362 = vmatpush1.msra.mxu0 0.0
    %363 = vmatprep.subr.mxu0 0.0
    %364 = vmatpush1.msra.mxu0 0.0
    %365 = vmatprep.subr.mxu0 0.0
    %366 = vmatpush1.msra.mxu0 0.0
    %367 = vmatprep.subr.mxu0 0.0
    %368 = vmatpush1.msra.mxu0 %v159
    %369 = vmatprep.subr.mxu0 0.0
    %370 = vmatpush1.msra.mxu0 %v158
    %371 = vmatprep.subr.mxu0 0.0
    %372 = vmatpush1.msra.mxu0 %v157
    %373 = vmatprep.subr.mxu0 0.0
    %374 = vmatpush1.msra.mxu0 %v156
    %375 = vmatprep.subr.mxu0 0.0
    %376 = vmatpush2.msra.mxu0 0.0
    %377 = vmatprep.subr.mxu0 0.0
    %378 = vmatpush2.msra.mxu0 0.0
    %379 = vmatprep.subr.mxu0 0.0
    %380 = vmatpush2.msra.mxu0 0.0
    %381 = vmatprep.subr.mxu0 0.0
    %382 = vmatpush2.msra.mxu0 0.0
    %383 = vmatprep.subr.mxu0 0.0
    %384 = vmatpush2.msra.mxu0 0.0
    %385 = vmatprep.subr.mxu0 0.0
    %386 = vmatpush2.msra.mxu0 0.0
    %387 = vmatprep.subr.mxu0 0.0
    %388 = vmatpush2.msra.mxu0 0.0
    %389 = vmatprep.subr.mxu0 0.0
    %390 = vmatpush2.msra.mxu0 0.0
    %391 = vmatprep.subr.mxu0 0.0
    %392 = vmatpush2.msra.mxu0 0.0
    %393 = vmatprep.subr.mxu0 0.0
    %394 = vmatpush2.msra.mxu0 0.0
    %395 = vmatprep.subr.mxu0 0.0
    %396 = vmatpush2.msra.mxu0 0.0
    %397 = vmatprep.subr.mxu0 0.0
    %398 = vmatpush2.msra.mxu0 0.0
    %399 = vmatprep.subr.mxu0 0.0
    %400 = vmatpush2.msra.mxu0 0.0
    %401 = vmatprep.subr.mxu0 0.0
    %402 = vmatpush2.msra.mxu0 0.0
    %403 = vmatprep.subr.mxu0 0.0
    %404 = vmatpush2.msra.mxu0 0.0
    %405 = vmatprep.subr.mxu0 0.0
    %406 = vmatpush2.msra.mxu0 0.0
    %407 = vmatprep.mubr.f32.mxu0 0.0
    %408 = vmatmul.mubr.f32.gmra.mxu0 %v271
    %v409 = vpop.f32.mrf.mxu0
    %v410 = vadd.f32 0.0, %v409
    %v411 = vpop.f32.mrf.mxu0
    %412 = vdwg.mxu0
    %v413 = vadd.f32 %v247, %v340
    %v414 = vsub.f32 0.0, %v413
    %v415 = vmul.f32 %v414, 1.442695
    %v416 = vpow.pop %v415
    %v417 = vadd.f32 %v416, 1.0
    %v418 = vrcp.pop %v417
    %v419 = vmul.f32 1.0, %v418
    %421 = vrot.lane.b32.xlu0 %v410, 32
    %v422 = vpop.permute.xlu0 %421
    %v424 = vadd.f32 %v247, %v422
    %v425 = vsub.f32 0.0, %v424
    %v426 = vmul.f32 %v425, 1.442695
    %v427 = vpow.pop %v426
    %v428 = vadd.f32 %v427, 1.0
    %v429 = vrcp.pop %v428
    %v430 = vmul.f32 1.0, %v429
    %431 = vmatprep.subr.mxu0 0.0
    %432 = vmatpush1.msra.mxu0 0.0
    %433 = vmatprep.subr.mxu0 0.0
    %434 = vmatpush1.msra.mxu0 0.0
    %435 = vmatprep.subr.mxu0 0.0
    %436 = vmatpush1.msra.mxu0 0.0
    %437 = vmatprep.subr.mxu0 0.0
    %438 = vmatpush1.msra.mxu0 0.0
    %439 = vmatprep.subr.mxu0 0.0
    %440 = vmatpush1.msra.mxu0 0.0
    %441 = vmatprep.subr.mxu0 0.0
    %442 = vmatpush1.msra.mxu0 0.0
    %443 = vmatprep.subr.mxu0 0.0
    %444 = vmatpush1.msra.mxu0 0.0
    %445 = vmatprep.subr.mxu0 0.0
    %446 = vmatpush1.msra.mxu0 0.0
    %447 = vmatprep.subr.mxu0 0.0
    %448 = vmatpush1.msra.mxu0 0.0
    %449 = vmatprep.subr.mxu0 0.0
    %450 = vmatpush1.msra.mxu0 0.0
    %451 = vmatprep.subr.mxu0 0.0
    %452 = vmatpush1.msra.mxu0 0.0
    %453 = vmatprep.subr.mxu0 0.0
    %454 = vmatpush1.msra.mxu0 0.0
    %455 = vmatprep.subr.mxu0 0.0
    %456 = vmatpush1.msra.mxu0 %v163
    %457 = vmatprep.subr.mxu0 0.0
    %458 = vmatpush1.msra.mxu0 %v162
    %459 = vmatprep.subr.mxu0 0.0
    %460 = vmatpush1.msra.mxu0 %v161
    %461 = vmatprep.subr.mxu0 0.0
    %462 = vmatpush1.msra.mxu0 %v160
    %463 = vmatprep.subr.mxu0 0.0
    %464 = vmatpush2.msra.mxu0 0.0
    %465 = vmatprep.subr.mxu0 0.0
    %466 = vmatpush2.msra.mxu0 0.0
    %467 = vmatprep.subr.mxu0 0.0
    %468 = vmatpush2.msra.mxu0 0.0
    %469 = vmatprep.subr.mxu0 0.0
    %470 = vmatpush2.msra.mxu0 0.0
    %471 = vmatprep.subr.mxu0 0.0
    %472 = vmatpush2.msra.mxu0 0.0
    %473 = vmatprep.subr.mxu0 0.0
    %474 = vmatpush2.msra.mxu0 0.0
    %475 = vmatprep.subr.mxu0 0.0
    %476 = vmatpush2.msra.mxu0 0.0
    %477 = vmatprep.subr.mxu0 0.0
    %478 = vmatpush2.msra.mxu0 0.0
    %479 = vmatprep.subr.mxu0 0.0
    %480 = vmatpush2.msra.mxu0 0.0
    %481 = vmatprep.subr.mxu0 0.0
    %482 = vmatpush2.msra.mxu0 0.0
    %483 = vmatprep.subr.mxu0 0.0
    %484 = vmatpush2.msra.mxu0 0.0
    %485 = vmatprep.subr.mxu0 0.0
    %486 = vmatpush2.msra.mxu0 0.0
    %487 = vmatprep.subr.mxu0 0.0
    %488 = vmatpush2.msra.mxu0 0.0
    %489 = vmatprep.subr.mxu0 0.0
    %490 = vmatpush2.msra.mxu0 0.0
    %491 = vmatprep.subr.mxu0 0.0
    %492 = vmatpush2.msra.mxu0 0.0
    %493 = vmatprep.subr.mxu0 0.0
    %494 = vmatpush2.msra.mxu0 0.0
    %495 = vmatprep.mubr.f32.mxu0 0.0
    %496 = vmatmul.mubr.f32.gmra.mxu0 %v271
    %v497 = vpop.f32.mrf.mxu0
    %v498 = vadd.f32 %v269, %v497
    %v499 = vpop.f32.mrf.mxu0
    %500 = vdwg.mxu0
    %v501 = vmul.f32 %v419, %v498
    %503 = vrot.lane.b32.xlu0 %v501, 64
    %v504 = vpop.permute.xlu0 %503
    %v506 = vadd.f32 %v247, %v504
    %v507 = vtanh.pop %v506
    %v508 = vsub.f32 1.0, %v430
    %510 = vrot.lane.b32.xlu0 %v507, 96
    %v511 = vpop.permute.xlu0 %510
    %v513 = vmul.f32 %v508, %v511
    %v514 = vmul.f32 %v430, 0.0
    %v515 = vadd.f32 %v513, %v514
    %517 = vrot.lane.b32.xlu0 %v515, 96
    %v518 = vpop.permute.xlu0 %517
    %v519 = vsel %vm44, %v518, 0
    %521 = vmatprep.subr.mxu0 0.0
    %522 = vmatpush1.msra.mxu0 0.0
    %523 = vmatprep.subr.mxu0 0.0
    %524 = vmatpush1.msra.mxu0 0.0
    %525 = vmatprep.subr.mxu0 0.0
    %526 = vmatpush1.msra.mxu0 0.0
    %527 = vmatprep.subr.mxu0 0.0
    %528 = vmatpush1.msra.mxu0 0.0
    %529 = vmatprep.subr.mxu0 0.0
    %530 = vmatpush1.msra.mxu0 0.0
    %531 = vmatprep.subr.mxu0 0.0
    %532 = vmatpush1.msra.mxu0 0.0
    %533 = vmatprep.subr.mxu0 0.0
    %534 = vmatpush1.msra.mxu0 0.0
    %535 = vmatprep.subr.mxu0 0.0
    %536 = vmatpush1.msra.mxu0 0.0
    %537 = vmatprep.subr.mxu0 0.0
    %538 = vmatpush1.msra.mxu0 0.0
    %539 = vmatprep.subr.mxu0 0.0
    %540 = vmatpush1.msra.mxu0 0.0
    %541 = vmatprep.subr.mxu0 0.0
    %542 = vmatpush1.msra.mxu0 0.0
    %543 = vmatprep.subr.mxu0 0.0
    %544 = vmatpush1.msra.mxu0 0.0
    %545 = vmatprep.subr.mxu0 0.0
    %546 = vmatpush1.msra.mxu0 %v155
    %547 = vmatprep.subr.mxu0 0.0
    %548 = vmatpush1.msra.mxu0 %v154
    %549 = vmatprep.subr.mxu0 0.0
    %550 = vmatpush1.msra.mxu0 %v153
    %551 = vmatprep.subr.mxu0 0.0
    %552 = vmatpush1.msra.mxu0 %v152
    %553 = vmatprep.subr.mxu0 0.0
    %554 = vmatpush2.msra.mxu0 0.0
    %555 = vmatprep.subr.mxu0 0.0
    %556 = vmatpush2.msra.mxu0 0.0
    %557 = vmatprep.subr.mxu0 0.0
    %558 = vmatpush2.msra.mxu0 0.0
    %559 = vmatprep.subr.mxu0 0.0
    %560 = vmatpush2.msra.mxu0 0.0
    %561 = vmatprep.subr.mxu0 0.0
    %562 = vmatpush2.msra.mxu0 0.0
    %563 = vmatprep.subr.mxu0 0.0
    %564 = vmatpush2.msra.mxu0 0.0
    %565 = vmatprep.subr.mxu0 0.0
    %566 = vmatpush2.msra.mxu0 0.0
    %567 = vmatprep.subr.mxu0 0.0
    %568 = vmatpush2.msra.mxu0 0.0
    %569 = vmatprep.subr.mxu0 0.0
    %570 = vmatpush2.msra.mxu0 0.0
    %571 = vmatprep.subr.mxu0 0.0
    %572 = vmatpush2.msra.mxu0 0.0
    %573 = vmatprep.subr.mxu0 0.0
    %574 = vmatpush2.msra.mxu0 0.0
    %575 = vmatprep.subr.mxu0 0.0
    %576 = vmatpush2.msra.mxu0 0.0
    %577 = vmatprep.subr.mxu0 0.0
    %578 = vmatpush2.msra.mxu0 0.0
    %579 = vmatprep.subr.mxu0 0.0
    %580 = vmatpush2.msra.mxu0 0.0
    %581 = vmatprep.subr.mxu0 0.0
    %582 = vmatpush2.msra.mxu0 0.0
    %583 = vmatprep.subr.mxu0 0.0
    %584 = vmatpush2.msra.mxu0 0.0
    %585 = vmatprep.mubr.f32.mxu0 0.0
    %586 = vmatmul.mubr.f32.gmra.mxu0 %v519
    %v587 = vpop.f32.mrf.mxu0
    %v588 = vadd.f32 0.0, %v587
    %v589 = vpop.f32.mrf.mxu0
    %590 = vdwg.mxu0
    %591 = vmatprep.subr.mxu0 0.0
    %592 = vmatpush1.msra.mxu0 0.0
    %593 = vmatprep.subr.mxu0 0.0
    %594 = vmatpush1.msra.mxu0 0.0
    %595 = vmatprep.subr.mxu0 0.0
    %596 = vmatpush1.msra.mxu0 0.0
    %597 = vmatprep.subr.mxu0 0.0
    %598 = vmatpush1.msra.mxu0 0.0
    %599 = vmatprep.subr.mxu0 0.0
    %600 = vmatpush1.msra.mxu0 0.0
    %601 = vmatprep.subr.mxu0 0.0
    %602 = vmatpush1.msra.mxu0 0.0
    %603 = vmatprep.subr.mxu0 0.0
    %604 = vmatpush1.msra.mxu0 0.0
    %605 = vmatprep.subr.mxu0 0.0
    %606 = vmatpush1.msra.mxu0 0.0
    %607 = vmatprep.subr.mxu0 0.0
    %608 = vmatpush1.msra.mxu0 0.0
    %609 = vmatprep.subr.mxu0 0.0
    %610 = vmatpush1.msra.mxu0 0.0
    %611 = vmatprep.subr.mxu0 0.0
    %612 = vmatpush1.msra.mxu0 0.0
    %613 = vmatprep.subr.mxu0 0.0
    %614 = vmatpush1.msra.mxu0 0.0
    %615 = vmatprep.subr.mxu0 0.0
    %616 = vmatpush1.msra.mxu0 %v159
    %617 = vmatprep.subr.mxu0 0.0
    %618 = vmatpush1.msra.mxu0 %v158
    %619 = vmatprep.subr.mxu0 0.0
    %620 = vmatpush1.msra.mxu0 %v157
    %621 = vmatprep.subr.mxu0 0.0
    %622 = vmatpush1.msra.mxu0 %v156
    %623 = vmatprep.subr.mxu0 0.0
    %624 = vmatpush2.msra.mxu0 0.0
    %625 = vmatprep.subr.mxu0 0.0
    %626 = vmatpush2.msra.mxu0 0.0
    %627 = vmatprep.subr.mxu0 0.0
    %628 = vmatpush2.msra.mxu0 0.0
    %629 = vmatprep.subr.mxu0 0.0
    %630 = vmatpush2.msra.mxu0 0.0
    %631 = vmatprep.subr.mxu0 0.0
    %632 = vmatpush2.msra.mxu0 0.0
    %633 = vmatprep.subr.mxu0 0.0
    %634 = vmatpush2.msra.mxu0 0.0
    %635 = vmatprep.subr.mxu0 0.0
    %636 = vmatpush2.msra.mxu0 0.0
    %637 = vmatprep.subr.mxu0 0.0
    %638 = vmatpush2.msra.mxu0 0.0
    %639 = vmatprep.subr.mxu0 0.0
    %640 = vmatpush2.msra.mxu0 0.0
    %641 = vmatprep.subr.mxu0 0.0
    %642 = vmatpush2.msra.mxu0 0.0
    %643 = vmatprep.subr.mxu0 0.0
    %644 = vmatpush2.msra.mxu0 0.0
    %645 = vmatprep.subr.mxu0 0.0
    %646 = vmatpush2.msra.mxu0 0.0
    %647 = vmatprep.subr.mxu0 0.0
    %648 = vmatpush2.msra.mxu0 0.0
    %649 = vmatprep.subr.mxu0 0.0
    %650 = vmatpush2.msra.mxu0 0.0
    %651 = vmatprep.subr.mxu0 0.0
    %652 = vmatpush2.msra.mxu0 0.0
    %653 = vmatprep.subr.mxu0 0.0
    %654 = vmatpush2.msra.mxu0 0.0
    %655 = vmatprep.mubr.f32.mxu0 0.0
    %656 = vmatmul.mubr.f32.gmra.mxu0 %v519
    %v657 = vpop.f32.mrf.mxu0
    %v658 = vadd.f32 0.0, %v657
    %v659 = vpop.f32.mrf.mxu0
    %660 = vdwg.mxu0
    %v662 = vrot.slane %v588, 6
    %v664 = vadd.f32 %v247, %v662
    %v665 = vsub.f32 0.0, %v664
    %v666 = vmul.f32 %v665, 1.442695
    %v667 = vpow.pop %v666
    %v668 = vadd.f32 %v667, 1.0
    %v669 = vrcp.pop %v668
    %v670 = vmul.f32 1.0, %v669
    %v672 = vrot.slane %v658, 6
    %673 = vrot.lane.b32.xlu0 %v672, 32
    %v674 = vpop.permute.xlu0 %673
    %v676 = vadd.f32 %v247, %v674
    %v677 = vsub.f32 0.0, %v676
    %v678 = vmul.f32 %v677, 1.442695
    %v679 = vpow.pop %v678
    %v680 = vadd.f32 %v679, 1.0
    %v681 = vrcp.pop %v680
    %v682 = vmul.f32 1.0, %v681
    %683 = vmatprep.subr.mxu0 0.0
    %684 = vmatpush1.msra.mxu0 0.0
    %685 = vmatprep.subr.mxu0 0.0
    %686 = vmatpush1.msra.mxu0 0.0
    %687 = vmatprep.subr.mxu0 0.0
    %688 = vmatpush1.msra.mxu0 0.0
    %689 = vmatprep.subr.mxu0 0.0
    %690 = vmatpush1.msra.mxu0 0.0
    %691 = vmatprep.subr.mxu0 0.0
    %692 = vmatpush1.msra.mxu0 0.0
    %693 = vmatprep.subr.mxu0 0.0
    %694 = vmatpush1.msra.mxu0 0.0
    %695 = vmatprep.subr.mxu0 0.0
    %696 = vmatpush1.msra.mxu0 0.0
    %697 = vmatprep.subr.mxu0 0.0
    %698 = vmatpush1.msra.mxu0 0.0
    %699 = vmatprep.subr.mxu0 0.0
    %700 = vmatpush1.msra.mxu0 0.0
    %701 = vmatprep.subr.mxu0 0.0
    %702 = vmatpush1.msra.mxu0 0.0
    %703 = vmatprep.subr.mxu0 0.0
    %704 = vmatpush1.msra.mxu0 0.0
    %705 = vmatprep.subr.mxu0 0.0
    %706 = vmatpush1.msra.mxu0 0.0
    %707 = vmatprep.subr.mxu0 0.0
    %708 = vmatpush1.msra.mxu0 %v163
    %709 = vmatprep.subr.mxu0 0.0
    %710 = vmatpush1.msra.mxu0 %v162
    %711 = vmatprep.subr.mxu0 0.0
    %712 = vmatpush1.msra.mxu0 %v161
    %713 = vmatprep.subr.mxu0 0.0
    %714 = vmatpush1.msra.mxu0 %v160
    %715 = vmatprep.subr.mxu0 0.0
    %716 = vmatpush2.msra.mxu0 0.0
    %717 = vmatprep.subr.mxu0 0.0
    %718 = vmatpush2.msra.mxu0 0.0
    %719 = vmatprep.subr.mxu0 0.0
    %720 = vmatpush2.msra.mxu0 0.0
    %721 = vmatprep.subr.mxu0 0.0
    %722 = vmatpush2.msra.mxu0 0.0
    %723 = vmatprep.subr.mxu0 0.0
    %724 = vmatpush2.msra.mxu0 0.0
    %725 = vmatprep.subr.mxu0 0.0
    %726 = vmatpush2.msra.mxu0 0.0
    %727 = vmatprep.subr.mxu0 0.0
    %728 = vmatpush2.msra.mxu0 0.0
    %729 = vmatprep.subr.mxu0 0.0
    %730 = vmatpush2.msra.mxu0 0.0
    %731 = vmatprep.subr.mxu0 0.0
    %732 = vmatpush2.msra.mxu0 0.0
    %733 = vmatprep.subr.mxu0 0.0
    %734 = vmatpush2.msra.mxu0 0.0
    %735 = vmatprep.subr.mxu0 0.0
    %736 = vmatpush2.msra.mxu0 0.0
    %737 = vmatprep.subr.mxu0 0.0
    %738 = vmatpush2.msra.mxu0 0.0
    %739 = vmatprep.subr.mxu0 0.0
    %740 = vmatpush2.msra.mxu0 0.0
    %741 = vmatprep.subr.mxu0 0.0
    %742 = vmatpush2.msra.mxu0 0.0
    %743 = vmatprep.subr.mxu0 0.0
    %744 = vmatpush2.msra.mxu0 0.0
    %745 = vmatprep.subr.mxu0 0.0
    %746 = vmatpush2.msra.mxu0 0.0
    %747 = vmatprep.mubr.f32.mxu0 0.0
    %748 = vmatmul.mubr.f32.gmra.mxu0 %v519
    %v749 = vpop.f32.mrf.mxu0
    %v750 = vadd.f32 %v269, %v749
    %v751 = vpop.f32.mrf.mxu0
    %752 = vdwg.mxu0
    %v754 = vrot.slane %v750, 6
    %v756 = vmul.f32 %v670, %v754
    %758 = vrot.lane.b32.xlu0 %v756, 64
    %v759 = vpop.permute.xlu0 %758
    %v761 = vadd.f32 %v247, %v759
    %v762 = vtanh.pop %v761
    %v763 = vsub.f32 1.0, %v682
    %765 = vrot.lane.b32.xlu0 %v762, 96
    %v766 = vpop.permute.xlu0 %765
    %v768 = vmul.f32 %v763, %v766
    %v769 = vrot.slane %v515, 6
    %v771 = vmul.f32 %v682, %v769
    %v772 = vadd.f32 %v768, %v771
    %v774 = vrot.slane %v772, 2
    %775 = vrot.lane.b32.xlu0 %v774, 96
    %v776 = vpop.permute.xlu0 %775
    %v777 = vsel %vm44, %v776, 0
    %779 = vmatprep.subr.mxu0 0.0
    %780 = vmatpush1.msra.mxu0 0.0
    %781 = vmatprep.subr.mxu0 0.0
    %782 = vmatpush1.msra.mxu0 0.0
    %783 = vmatprep.subr.mxu0 0.0
    %784 = vmatpush1.msra.mxu0 0.0
    %785 = vmatprep.subr.mxu0 0.0
    %786 = vmatpush1.msra.mxu0 0.0
    %787 = vmatprep.subr.mxu0 0.0
    %788 = vmatpush1.msra.mxu0 0.0
    %789 = vmatprep.subr.mxu0 0.0
    %790 = vmatpush1.msra.mxu0 0.0
    %791 = vmatprep.subr.mxu0 0.0
    %792 = vmatpush1.msra.mxu0 0.0
    %793 = vmatprep.subr.mxu0 0.0
    %794 = vmatpush1.msra.mxu0 0.0
    %795 = vmatprep.subr.mxu0 0.0
    %796 = vmatpush1.msra.mxu0 0.0
    %797 = vmatprep.subr.mxu0 0.0
    %798 = vmatpush1.msra.mxu0 0.0
    %799 = vmatprep.subr.mxu0 0.0
    %800 = vmatpush1.msra.mxu0 0.0
    %801 = vmatprep.subr.mxu0 0.0
    %802 = vmatpush1.msra.mxu0 0.0
    %803 = vmatprep.subr.mxu0 0.0
    %804 = vmatpush1.msra.mxu0 %v155
    %805 = vmatprep.subr.mxu0 0.0
    %806 = vmatpush1.msra.mxu0 %v154
    %807 = vmatprep.subr.mxu0 0.0
    %808 = vmatpush1.msra.mxu0 %v153
    %809 = vmatprep.subr.mxu0 0.0
    %810 = vmatpush1.msra.mxu0 %v152
    %811 = vmatprep.subr.mxu0 0.0
    %812 = vmatpush2.msra.mxu0 0.0
    %813 = vmatprep.subr.mxu0 0.0
    %814 = vmatpush2.msra.mxu0 0.0
    %815 = vmatprep.subr.mxu0 0.0
    %816 = vmatpush2.msra.mxu0 0.0
    %817 = vmatprep.subr.mxu0 0.0
    %818 = vmatpush2.msra.mxu0 0.0
    %819 = vmatprep.subr.mxu0 0.0
    %820 = vmatpush2.msra.mxu0 0.0
    %821 = vmatprep.subr.mxu0 0.0
    %822 = vmatpush2.msra.mxu0 0.0
    %823 = vmatprep.subr.mxu0 0.0
    %824 = vmatpush2.msra.mxu0 0.0
    %825 = vmatprep.subr.mxu0 0.0
    %826 = vmatpush2.msra.mxu0 0.0
    %827 = vmatprep.subr.mxu0 0.0
    %828 = vmatpush2.msra.mxu0 0.0
    %829 = vmatprep.subr.mxu0 0.0
    %830 = vmatpush2.msra.mxu0 0.0
    %831 = vmatprep.subr.mxu0 0.0
    %832 = vmatpush2.msra.mxu0 0.0
    %833 = vmatprep.subr.mxu0 0.0
    %834 = vmatpush2.msra.mxu0 0.0
    %835 = vmatprep.subr.mxu0 0.0
    %836 = vmatpush2.msra.mxu0 0.0
    %837 = vmatprep.subr.mxu0 0.0
    %838 = vmatpush2.msra.mxu0 0.0
    %839 = vmatprep.subr.mxu0 0.0
    %840 = vmatpush2.msra.mxu0 0.0
    %841 = vmatprep.subr.mxu0 0.0
    %842 = vmatpush2.msra.mxu0 0.0
    %843 = vmatprep.mubr.f32.mxu0 0.0
    %844 = vmatmul.mubr.f32.gmra.mxu0 %v777
    %v845 = vpop.f32.mrf.mxu0
    %v846 = vadd.f32 0.0, %v845
    %v847 = vpop.f32.mrf.mxu0
    %848 = vdwg.mxu0
    %849 = vmatprep.subr.mxu0 0.0
    %850 = vmatpush1.msra.mxu0 0.0
    %851 = vmatprep.subr.mxu0 0.0
    %852 = vmatpush1.msra.mxu0 0.0
    %853 = vmatprep.subr.mxu0 0.0
    %854 = vmatpush1.msra.mxu0 0.0
    %855 = vmatprep.subr.mxu0 0.0
    %856 = vmatpush1.msra.mxu0 0.0
    %857 = vmatprep.subr.mxu0 0.0
    %858 = vmatpush1.msra.mxu0 0.0
    %859 = vmatprep.subr.mxu0 0.0
    %860 = vmatpush1.msra.mxu0 0.0
    %861 = vmatprep.subr.mxu0 0.0
    %862 = vmatpush1.msra.mxu0 0.0
    %863 = vmatprep.subr.mxu0 0.0
    %864 = vmatpush1.msra.mxu0 0.0
    %865 = vmatprep.subr.mxu0 0.0
    %866 = vmatpush1.msra.mxu0 0.0
    %867 = vmatprep.subr.mxu0 0.0
    %868 = vmatpush1.msra.mxu0 0.0
    %869 = vmatprep.subr.mxu0 0.0
    %870 = vmatpush1.msra.mxu0 0.0
    %871 = vmatprep.subr.mxu0 0.0
    %872 = vmatpush1.msra.mxu0 0.0
    %873 = vmatprep.subr.mxu0 0.0
    %874 = vmatpush1.msra.mxu0 %v159
    %875 = vmatprep.subr.mxu0 0.0
    %876 = vmatpush1.msra.mxu0 %v158
    %877 = vmatprep.subr.mxu0 0.0
    %878 = vmatpush1.msra.mxu0 %v157
    %879 = vmatprep.subr.mxu0 0.0
    %880 = vmatpush1.msra.mxu0 %v156
    %881 = vmatprep.subr.mxu0 0.0
    %882 = vmatpush2.msra.mxu0 0.0
    %883 = vmatprep.subr.mxu0 0.0
    %884 = vmatpush2.msra.mxu0 0.0
    %885 = vmatprep.subr.mxu0 0.0
    %886 = vmatpush2.msra.mxu0 0.0
    %887 = vmatprep.subr.mxu0 0.0
    %888 = vmatpush2.msra.mxu0 0.0
    %889 = vmatprep.subr.mxu0 0.0
    %890 = vmatpush2.msra.mxu0 0.0
    %891 = vmatprep.subr.mxu0 0.0
    %892 = vmatpush2.msra.mxu0 0.0
    %893 = vmatprep.subr.mxu0 0.0
    %894 = vmatpush2.msra.mxu0 0.0
    %895 = vmatprep.subr.mxu0 0.0
    %896 = vmatpush2.msra.mxu0 0.0
    %897 = vmatprep.subr.mxu0 0.0
    %898 = vmatpush2.msra.mxu0 0.0
    %899 = vmatprep.subr.mxu0 0.0
    %900 = vmatpush2.msra.mxu0 0.0
    %901 = vmatprep.subr.mxu0 0.0
    %902 = vmatpush2.msra.mxu0 0.0
    %903 = vmatprep.subr.mxu0 0.0
    %904 = vmatpush2.msra.mxu0 0.0
    %905 = vmatprep.subr.mxu0 0.0
    %906 = vmatpush2.msra.mxu0 0.0
    %907 = vmatprep.subr.mxu0 0.0
    %908 = vmatpush2.msra.mxu0 0.0
    %909 = vmatprep.subr.mxu0 0.0
    %910 = vmatpush2.msra.mxu0 0.0
    %911 = vmatprep.subr.mxu0 0.0
    %912 = vmatpush2.msra.mxu0 0.0
    %913 = vmatprep.mubr.f32.mxu0 0.0
    %914 = vmatmul.mubr.f32.gmra.mxu0 %v777
    %v915 = vpop.f32.mrf.mxu0
    %v916 = vadd.f32 0.0, %v915
    %v917 = vpop.f32.mrf.mxu0
    %918 = vdwg.mxu0
    %v920 = vrot.slane %v846, 4
    %v922 = vadd.f32 %v247, %v920
    %v923 = vsub.f32 0.0, %v922
    %v924 = vmul.f32 %v923, 1.442695
    %v925 = vpow.pop %v924
    %v926 = vadd.f32 %v925, 1.0
    %v927 = vrcp.pop %v926
    %v928 = vmul.f32 1.0, %v927
    %v930 = vrot.slane %v916, 4
    %931 = vrot.lane.b32.xlu0 %v930, 32
    %v932 = vpop.permute.xlu0 %931
    %v934 = vadd.f32 %v247, %v932
    %v935 = vsub.f32 0.0, %v934
    %v936 = vmul.f32 %v935, 1.442695
    %v937 = vpow.pop %v936
    %v938 = vadd.f32 %v937, 1.0
    %v939 = vrcp.pop %v938
    %v940 = vmul.f32 1.0, %v939
    %941 = vmatprep.subr.mxu0 0.0
    %942 = vmatpush1.msra.mxu0 0.0
    %943 = vmatprep.subr.mxu0 0.0
    %944 = vmatpush1.msra.mxu0 0.0
    %945 = vmatprep.subr.mxu0 0.0
    %946 = vmatpush1.msra.mxu0 0.0
    %947 = vmatprep.subr.mxu0 0.0
    %948 = vmatpush1.msra.mxu0 0.0
    %949 = vmatprep.subr.mxu0 0.0
    %950 = vmatpush1.msra.mxu0 0.0
    %951 = vmatprep.subr.mxu0 0.0
    %952 = vmatpush1.msra.mxu0 0.0
    %953 = vmatprep.subr.mxu0 0.0
    %954 = vmatpush1.msra.mxu0 0.0
    %955 = vmatprep.subr.mxu0 0.0
    %956 = vmatpush1.msra.mxu0 0.0
    %957 = vmatprep.subr.mxu0 0.0
    %958 = vmatpush1.msra.mxu0 0.0
    %959 = vmatprep.subr.mxu0 0.0
    %960 = vmatpush1.msra.mxu0 0.0
    %961 = vmatprep.subr.mxu0 0.0
    %962 = vmatpush1.msra.mxu0 0.0
    %963 = vmatprep.subr.mxu0 0.0
    %964 = vmatpush1.msra.mxu0 0.0
    %965 = vmatprep.subr.mxu0 0.0
    %966 = vmatpush1.msra.mxu0 %v163
    %967 = vmatprep.subr.mxu0 0.0
    %968 = vmatpush1.msra.mxu0 %v162
    %969 = vmatprep.subr.mxu0 0.0
    %970 = vmatpush1.msra.mxu0 %v161
    %971 = vmatprep.subr.mxu0 0.0
    %972 = vmatpush1.msra.mxu0 %v160
    %973 = vmatprep.subr.mxu0 0.0
    %974 = vmatpush2.msra.mxu0 0.0
    %975 = vmatprep.subr.mxu0 0.0
    %976 = vmatpush2.msra.mxu0 0.0
    %977 = vmatprep.subr.mxu0 0.0
    %978 = vmatpush2.msra.mxu0 0.0
    %979 = vmatprep.subr.mxu0 0.0
    %980 = vmatpush2.msra.mxu0 0.0
    %981 = vmatprep.subr.mxu0 0.0
    %982 = vmatpush2.msra.mxu0 0.0
    %983 = vmatprep.subr.mxu0 0.0
    %984 = vmatpush2.msra.mxu0 0.0
    %985 = vmatprep.subr.mxu0 0.0
    %986 = vmatpush2.msra.mxu0 0.0
    %987 = vmatprep.subr.mxu0 0.0
    %988 = vmatpush2.msra.mxu0 0.0
    %989 = vmatprep.subr.mxu0 0.0
    %990 = vmatpush2.msra.mxu0 0.0
    %991 = vmatprep.subr.mxu0 0.0
    %992 = vmatpush2.msra.mxu0 0.0
    %993 = vmatprep.subr.mxu0 0.0
    %994 = vmatpush2.msra.mxu0 0.0
    %995 = vmatprep.subr.mxu0 0.0
    %996 = vmatpush2.msra.mxu0 0.0
    %997 = vmatprep.subr.mxu0 0.0
    %998 = vmatpush2.msra.mxu0 0.0
    %999 = vmatprep.subr.mxu0 0.0
    %1000 = vmatpush2.msra.mxu0 0.0
    %1001 = vmatprep.subr.mxu0 0.0
    %1002 = vmatpush2.msra.mxu0 0.0
    %1003 = vmatprep.subr.mxu0 0.0
    %1004 = vmatpush2.msra.mxu0 0.0
    %1005 = vmatprep.mubr.f32.mxu0 0.0
    %1006 = vmatmul.mubr.f32.gmra.mxu0 %v777
    %v1007 = vpop.f32.mrf.mxu0
    %v1008 = vadd.f32 %v269, %v1007
    %v1009 = vpop.f32.mrf.mxu0
    %1010 = vdwg.mxu0
    %v1012 = vrot.slane %v1008, 4
    %v1014 = vmul.f32 %v928, %v1012
    %1016 = vrot.lane.b32.xlu0 %v1014, 64
    %v1017 = vpop.permute.xlu0 %1016
    %v1019 = vadd.f32 %v247, %v1017
    %v1020 = vtanh.pop %v1019
    %v1021 = vsub.f32 1.0, %v940
    %1023 = vrot.lane.b32.xlu0 %v1020, 96
    %v1024 = vpop.permute.xlu0 %1023
    %v1026 = vmul.f32 %v1021, %v1024
    %v1027 = vrot.slane %v772, 6
    %v1029 = vmul.f32 %v940, %v1027
    %v1030 = vadd.f32 %v1026, %v1029
    %v1032 = vrot.slane %v1030, 4
    %1033 = vrot.lane.b32.xlu0 %v1032, 96
    %v1034 = vpop.permute.xlu0 %1033
    %v1035 = vsel %vm44, %v1034, 0
    %1037 = vmatprep.subr.mxu0 0.0
    %1038 = vmatpush1.msra.mxu0 0.0
    %1039 = vmatprep.subr.mxu0 0.0
    %1040 = vmatpush1.msra.mxu0 0.0
    %1041 = vmatprep.subr.mxu0 0.0
    %1042 = vmatpush1.msra.mxu0 0.0
    %1043 = vmatprep.subr.mxu0 0.0
    %1044 = vmatpush1.msra.mxu0 0.0
    %1045 = vmatprep.subr.mxu0 0.0
    %1046 = vmatpush1.msra.mxu0 0.0
    %1047 = vmatprep.subr.mxu0 0.0
    %1048 = vmatpush1.msra.mxu0 0.0
    %1049 = vmatprep.subr.mxu0 0.0
    %1050 = vmatpush1.msra.mxu0 0.0
    %1051 = vmatprep.subr.mxu0 0.0
    %1052 = vmatpush1.msra.mxu0 0.0
    %1053 = vmatprep.subr.mxu0 0.0
    %1054 = vmatpush1.msra.mxu0 0.0
    %1055 = vmatprep.subr.mxu0 0.0
    %1056 = vmatpush1.msra.mxu0 0.0
    %1057 = vmatprep.subr.mxu0 0.0
    %1058 = vmatpush1.msra.mxu0 0.0
    %1059 = vmatprep.subr.mxu0 0.0
    %1060 = vmatpush1.msra.mxu0 0.0
    %1061 = vmatprep.subr.mxu0 0.0
    %1062 = vmatpush1.msra.mxu0 %v155
    %1063 = vmatprep.subr.mxu0 0.0
    %1064 = vmatpush1.msra.mxu0 %v154
    %1065 = vmatprep.subr.mxu0 0.0
    %1066 = vmatpush1.msra.mxu0 %v153
    %1067 = vmatprep.subr.mxu0 0.0
    %1068 = vmatpush1.msra.mxu0 %v152
    %1069 = vmatprep.subr.mxu0 0.0
    %1070 = vmatpush2.msra.mxu0 0.0
    %1071 = vmatprep.subr.mxu0 0.0
    %1072 = vmatpush2.msra.mxu0 0.0
    %1073 = vmatprep.subr.mxu0 0.0
    %1074 = vmatpush2.msra.mxu0 0.0
    %1075 = vmatprep.subr.mxu0 0.0
    %1076 = vmatpush2.msra.mxu0 0.0
    %1077 = vmatprep.subr.mxu0 0.0
    %1078 = vmatpush2.msra.mxu0 0.0
    %1079 = vmatprep.subr.mxu0 0.0
    %1080 = vmatpush2.msra.mxu0 0.0
    %1081 = vmatprep.subr.mxu0 0.0
    %1082 = vmatpush2.msra.mxu0 0.0
    %1083 = vmatprep.subr.mxu0 0.0
    %1084 = vmatpush2.msra.mxu0 0.0
    %1085 = vmatprep.subr.mxu0 0.0
    %1086 = vmatpush2.msra.mxu0 0.0
    %1087 = vmatprep.subr.mxu0 0.0
    %1088 = vmatpush2.msra.mxu0 0.0
    %1089 = vmatprep.subr.mxu0 0.0
    %1090 = vmatpush2.msra.mxu0 0.0
    %1091 = vmatprep.subr.mxu0 0.0
    %1092 = vmatpush2.msra.mxu0 0.0
    %1093 = vmatprep.subr.mxu0 0.0
    %1094 = vmatpush2.msra.mxu0 0.0
    %1095 = vmatprep.subr.mxu0 0.0
    %1096 = vmatpush2.msra.mxu0 0.0
    %1097 = vmatprep.subr.mxu0 0.0
    %1098 = vmatpush2.msra.mxu0 0.0
    %1099 = vmatprep.subr.mxu0 0.0
    %1100 = vmatpush2.msra.mxu0 0.0
    %1101 = vmatprep.mubr.f32.mxu0 0.0
    %1102 = vmatmul.mubr.f32.gmra.mxu0 %v1035
    %v1103 = vpop.f32.mrf.mxu0
    %v1104 = vadd.f32 0.0, %v1103
    %v1105 = vpop.f32.mrf.mxu0
    %1106 = vdwg.mxu0
    %1107 = vmatprep.subr.mxu0 0.0
    %1108 = vmatpush1.msra.mxu0 0.0
    %1109 = vmatprep.subr.mxu0 0.0
    %1110 = vmatpush1.msra.mxu0 0.0
    %1111 = vmatprep.subr.mxu0 0.0
    %1112 = vmatpush1.msra.mxu0 0.0
    %1113 = vmatprep.subr.mxu0 0.0
    %1114 = vmatpush1.msra.mxu0 0.0
    %1115 = vmatprep.subr.mxu0 0.0
    %1116 = vmatpush1.msra.mxu0 0.0
    %1117 = vmatprep.subr.mxu0 0.0
    %1118 = vmatpush1.msra.mxu0 0.0
    %1119 = vmatprep.subr.mxu0 0.0
    %1120 = vmatpush1.msra.mxu0 0.0
    %1121 = vmatprep.subr.mxu0 0.0
    %1122 = vmatpush1.msra.mxu0 0.0
    %1123 = vmatprep.subr.mxu0 0.0
    %1124 = vmatpush1.msra.mxu0 0.0
    %1125 = vmatprep.subr.mxu0 0.0
    %1126 = vmatpush1.msra.mxu0 0.0
    %1127 = vmatprep.subr.mxu0 0.0
    %1128 = vmatpush1.msra.mxu0 0.0
    %1129 = vmatprep.subr.mxu0 0.0
    %1130 = vmatpush1.msra.mxu0 0.0
    %1131 = vmatprep.subr.mxu0 0.0
    %1132 = vmatpush1.msra.mxu0 %v159
    %1133 = vmatprep.subr.mxu0 0.0
    %1134 = vmatpush1.msra.mxu0 %v158
    %1135 = vmatprep.subr.mxu0 0.0
    %1136 = vmatpush1.msra.mxu0 %v157
    %1137 = vmatprep.subr.mxu0 0.0
    %1138 = vmatpush1.msra.mxu0 %v156
    %1139 = vmatprep.subr.mxu0 0.0
    %1140 = vmatpush2.msra.mxu0 0.0
    %1141 = vmatprep.subr.mxu0 0.0
    %1142 = vmatpush2.msra.mxu0 0.0
    %1143 = vmatprep.subr.mxu0 0.0
    %1144 = vmatpush2.msra.mxu0 0.0
    %1145 = vmatprep.subr.mxu0 0.0
    %1146 = vmatpush2.msra.mxu0 0.0
    %1147 = vmatprep.subr.mxu0 0.0
    %1148 = vmatpush2.msra.mxu0 0.0
    %1149 = vmatprep.subr.mxu0 0.0
    %1150 = vmatpush2.msra.mxu0 0.0
    %1151 = vmatprep.subr.mxu0 0.0
    %1152 = vmatpush2.msra.mxu0 0.0
    %1153 = vmatprep.subr.mxu0 0.0
    %1154 = vmatpush2.msra.mxu0 0.0
    %1155 = vmatprep.subr.mxu0 0.0
    %1156 = vmatpush2.msra.mxu0 0.0
    %1157 = vmatprep.subr.mxu0 0.0
    %1158 = vmatpush2.msra.mxu0 0.0
    %1159 = vmatprep.subr.mxu0 0.0
    %1160 = vmatpush2.msra.mxu0 0.0
    %1161 = vmatprep.subr.mxu0 0.0
    %1162 = vmatpush2.msra.mxu0 0.0
    %1163 = vmatprep.subr.mxu0 0.0
    %1164 = vmatpush2.msra.mxu0 0.0
    %1165 = vmatprep.subr.mxu0 0.0
    %1166 = vmatpush2.msra.mxu0 0.0
    %1167 = vmatprep.subr.mxu0 0.0
    %1168 = vmatpush2.msra.mxu0 0.0
    %1169 = vmatprep.subr.mxu0 0.0
    %1170 = vmatpush2.msra.mxu0 0.0
    %1171 = vmatprep.mubr.f32.mxu0 0.0
    %1172 = vmatmul.mubr.f32.gmra.mxu0 %v1035
    %v1173 = vpop.f32.mrf.mxu0
    %v1174 = vadd.f32 0.0, %v1173
    %v1175 = vpop.f32.mrf.mxu0
    %1176 = vdwg.mxu0
    %v1178 = vrot.slane %v1104, 2
    %v1180 = vadd.f32 %v247, %v1178
    %v1181 = vsub.f32 0.0, %v1180
    %v1182 = vmul.f32 %v1181, 1.442695
    %v1183 = vpow.pop %v1182
    %v1184 = vadd.f32 %v1183, 1.0
    %v1185 = vrcp.pop %v1184
    %v1186 = vmul.f32 1.0, %v1185
    %v1188 = vrot.slane %v1174, 2
    %1189 = vrot.lane.b32.xlu0 %v1188, 32
    %v1190 = vpop.permute.xlu0 %1189
    %v1192 = vadd.f32 %v247, %v1190
    %v1193 = vsub.f32 0.0, %v1192
    %v1194 = vmul.f32 %v1193, 1.442695
    %v1195 = vpow.pop %v1194
    %v1196 = vadd.f32 %v1195, 1.0
    %v1197 = vrcp.pop %v1196
    %v1198 = vmul.f32 1.0, %v1197
    %1199 = vmatprep.subr.mxu0 0.0
    %1200 = vmatpush1.msra.mxu0 0.0
    %1201 = vmatprep.subr.mxu0 0.0
    %1202 = vmatpush1.msra.mxu0 0.0
    %1203 = vmatprep.subr.mxu0 0.0
    %1204 = vmatpush1.msra.mxu0 0.0
    %1205 = vmatprep.subr.mxu0 0.0
    %1206 = vmatpush1.msra.mxu0 0.0
    %1207 = vmatprep.subr.mxu0 0.0
    %1208 = vmatpush1.msra.mxu0 0.0
    %1209 = vmatprep.subr.mxu0 0.0
    %1210 = vmatpush1.msra.mxu0 0.0
    %1211 = vmatprep.subr.mxu0 0.0
    %1212 = vmatpush1.msra.mxu0 0.0
    %1213 = vmatprep.subr.mxu0 0.0
    %1214 = vmatpush1.msra.mxu0 0.0
    %1215 = vmatprep.subr.mxu0 0.0
    %1216 = vmatpush1.msra.mxu0 0.0
    %1217 = vmatprep.subr.mxu0 0.0
    %1218 = vmatpush1.msra.mxu0 0.0
    %1219 = vmatprep.subr.mxu0 0.0
    %1220 = vmatpush1.msra.mxu0 0.0
    %1221 = vmatprep.subr.mxu0 0.0
    %1222 = vmatpush1.msra.mxu0 0.0
    %1223 = vmatprep.subr.mxu0 0.0
    %1224 = vmatpush1.msra.mxu0 %v163
    %1225 = vmatprep.subr.mxu0 0.0
    %1226 = vmatpush1.msra.mxu0 %v162
    %1227 = vmatprep.subr.mxu0 0.0
    %1228 = vmatpush1.msra.mxu0 %v161
    %1229 = vmatprep.subr.mxu0 0.0
    %1230 = vmatpush1.msra.mxu0 %v160
    %1231 = vmatprep.subr.mxu0 0.0
    %1232 = vmatpush2.msra.mxu0 0.0
    %1233 = vmatprep.subr.mxu0 0.0
    %1234 = vmatpush2.msra.mxu0 0.0
    %1235 = vmatprep.subr.mxu0 0.0
    %1236 = vmatpush2.msra.mxu0 0.0
    %1237 = vmatprep.subr.mxu0 0.0
    %1238 = vmatpush2.msra.mxu0 0.0
    %1239 = vmatprep.subr.mxu0 0.0
    %1240 = vmatpush2.msra.mxu0 0.0
    %1241 = vmatprep.subr.mxu0 0.0
    %1242 = vmatpush2.msra.mxu0 0.0
    %1243 = vmatprep.subr.mxu0 0.0
    %1244 = vmatpush2.msra.mxu0 0.0
    %1245 = vmatprep.subr.mxu0 0.0
    %1246 = vmatpush2.msra.mxu0 0.0
    %1247 = vmatprep.subr.mxu0 0.0
    %1248 = vmatpush2.msra.mxu0 0.0
    %1249 = vmatprep.subr.mxu0 0.0
    %1250 = vmatpush2.msra.mxu0 0.0
    %1251 = vmatprep.subr.mxu0 0.0
    %1252 = vmatpush2.msra.mxu0 0.0
    %1253 = vmatprep.subr.mxu0 0.0
    %1254 = vmatpush2.msra.mxu0 0.0
    %1255 = vmatprep.subr.mxu0 0.0
    %1256 = vmatpush2.msra.mxu0 0.0
    %1257 = vmatprep.subr.mxu0 0.0
    %1258 = vmatpush2.msra.mxu0 0.0
    %1259 = vmatprep.subr.mxu0 0.0
    %1260 = vmatpush2.msra.mxu0 0.0
    %1261 = vmatprep.subr.mxu0 0.0
    %1262 = vmatpush2.msra.mxu0 0.0
    %1263 = vmatprep.mubr.f32.mxu0 0.0
    %1264 = vmatmul.mubr.f32.gmra.mxu0 %v1035
    %v1265 = vpop.f32.mrf.mxu0
    %v1266 = vadd.f32 %v269, %v1265
    %v1267 = vpop.f32.mrf.mxu0
    %1268 = vdwg.mxu0
    %v1270 = vrot.slane %v1266, 2
    %v1272 = vmul.f32 %v1186, %v1270
    %1274 = vrot.lane.b32.xlu0 %v1272, 64
    %v1275 = vpop.permute.xlu0 %1274
    %v1277 = vadd.f32 %v247, %v1275
    %v1278 = vtanh.pop %v1277
    %v1279 = vsub.f32 1.0, %v1198
    %1281 = vrot.lane.b32.xlu0 %v1278, 96
    %v1282 = vpop.permute.xlu0 %1281
    %v1284 = vmul.f32 %v1279, %v1282
    %v1285 = vrot.slane %v1030, 6
    %v1287 = vmul.f32 %v1198, %v1285
    %v1288 = vadd.f32 %v1284, %v1287
    %v1290 = vrot.slane %v1288, 6
    %1291 = vrot.lane.b32.xlu0 %v1290, 96
    %v1292 = vpop.permute.xlu0 %1291
    %v1293 = vsel %vm44, %v1292, 0
    %1295 = vmatprep.subr.mxu0 0.0
    %1296 = vmatpush1.msra.mxu0 0.0
    %1297 = vmatprep.subr.mxu0 0.0
    %1298 = vmatpush1.msra.mxu0 0.0
    %1299 = vmatprep.subr.mxu0 0.0
    %1300 = vmatpush1.msra.mxu0 0.0
    %1301 = vmatprep.subr.mxu0 0.0
    %1302 = vmatpush1.msra.mxu0 0.0
    %1303 = vmatprep.subr.mxu0 0.0
    %1304 = vmatpush1.msra.mxu0 0.0
    %1305 = vmatprep.subr.mxu0 0.0
    %1306 = vmatpush1.msra.mxu0 0.0
    %1307 = vmatprep.subr.mxu0 0.0
    %1308 = vmatpush1.msra.mxu0 0.0
    %1309 = vmatprep.subr.mxu0 0.0
    %1310 = vmatpush1.msra.mxu0 0.0
    %1311 = vmatprep.subr.mxu0 0.0
    %1312 = vmatpush1.msra.mxu0 0.0
    %1313 = vmatprep.subr.mxu0 0.0
    %1314 = vmatpush1.msra.mxu0 0.0
    %1315 = vmatprep.subr.mxu0 0.0
    %1316 = vmatpush1.msra.mxu0 0.0
    %1317 = vmatprep.subr.mxu0 0.0
    %1318 = vmatpush1.msra.mxu0 0.0
    %1319 = vmatprep.subr.mxu0 0.0
    %1320 = vmatpush1.msra.mxu0 %v155
    %1321 = vmatprep.subr.mxu0 0.0
    %1322 = vmatpush1.msra.mxu0 %v154
    %1323 = vmatprep.subr.mxu0 0.0
    %1324 = vmatpush1.msra.mxu0 %v153
    %1325 = vmatprep.subr.mxu0 0.0
    %1326 = vmatpush1.msra.mxu0 %v152
    %1327 = vmatprep.subr.mxu0 0.0
    %1328 = vmatpush2.msra.mxu0 0.0
    %1329 = vmatprep.subr.mxu0 0.0
    %1330 = vmatpush2.msra.mxu0 0.0
    %1331 = vmatprep.subr.mxu0 0.0
    %1332 = vmatpush2.msra.mxu0 0.0
    %1333 = vmatprep.subr.mxu0 0.0
    %1334 = vmatpush2.msra.mxu0 0.0
    %1335 = vmatprep.subr.mxu0 0.0
    %1336 = vmatpush2.msra.mxu0 0.0
    %1337 = vmatprep.subr.mxu0 0.0
    %1338 = vmatpush2.msra.mxu0 0.0
    %1339 = vmatprep.subr.mxu0 0.0
    %1340 = vmatpush2.msra.mxu0 0.0
    %1341 = vmatprep.subr.mxu0 0.0
    %1342 = vmatpush2.msra.mxu0 0.0
    %1343 = vmatprep.subr.mxu0 0.0
    %1344 = vmatpush2.msra.mxu0 0.0
    %1345 = vmatprep.subr.mxu0 0.0
    %1346 = vmatpush2.msra.mxu0 0.0
    %1347 = vmatprep.subr.mxu0 0.0
    %1348 = vmatpush2.msra.mxu0 0.0
    %1349 = vmatprep.subr.mxu0 0.0
    %1350 = vmatpush2.msra.mxu0 0.0
    %1351 = vmatprep.subr.mxu0 0.0
    %1352 = vmatpush2.msra.mxu0 0.0
    %1353 = vmatprep.subr.mxu0 0.0
    %1354 = vmatpush2.msra.mxu0 0.0
    %1355 = vmatprep.subr.mxu0 0.0
    %1356 = vmatpush2.msra.mxu0 0.0
    %1357 = vmatprep.subr.mxu0 0.0
    %1358 = vmatpush2.msra.mxu0 0.0
    %1359 = vmatprep.mubr.f32.mxu0 0.0
    %1360 = vmatmul.mubr.f32.gmra.mxu0 %v1293
    %v1361 = vpop.f32.mrf.mxu0
    %v1362 = vadd.f32 0.0, %v1361
    %v1363 = vpop.f32.mrf.mxu0
    %1364 = vdwg.mxu0
    %1365 = vmatprep.subr.mxu0 0.0
    %1366 = vmatpush1.msra.mxu0 0.0
    %1367 = vmatprep.subr.mxu0 0.0
    %1368 = vmatpush1.msra.mxu0 0.0
    %1369 = vmatprep.subr.mxu0 0.0
    %1370 = vmatpush1.msra.mxu0 0.0
    %1371 = vmatprep.subr.mxu0 0.0
    %1372 = vmatpush1.msra.mxu0 0.0
    %1373 = vmatprep.subr.mxu0 0.0
    %1374 = vmatpush1.msra.mxu0 0.0
    %1375 = vmatprep.subr.mxu0 0.0
    %1376 = vmatpush1.msra.mxu0 0.0
    %1377 = vmatprep.subr.mxu0 0.0
    %1378 = vmatpush1.msra.mxu0 0.0
    %1379 = vmatprep.subr.mxu0 0.0
    %1380 = vmatpush1.msra.mxu0 0.0
    %1381 = vmatprep.subr.mxu0 0.0
    %1382 = vmatpush1.msra.mxu0 0.0
    %1383 = vmatprep.subr.mxu0 0.0
    %1384 = vmatpush1.msra.mxu0 0.0
    %1385 = vmatprep.subr.mxu0 0.0
    %1386 = vmatpush1.msra.mxu0 0.0
    %1387 = vmatprep.subr.mxu0 0.0
    %1388 = vmatpush1.msra.mxu0 0.0
    %1389 = vmatprep.subr.mxu0 0.0
    %1390 = vmatpush1.msra.mxu0 %v159
    %1391 = vmatprep.subr.mxu0 0.0
    %1392 = vmatpush1.msra.mxu0 %v158
    %1393 = vmatprep.subr.mxu0 0.0
    %1394 = vmatpush1.msra.mxu0 %v157
    %1395 = vmatprep.subr.mxu0 0.0
    %1396 = vmatpush1.msra.mxu0 %v156
    %1397 = vmatprep.subr.mxu0 0.0
    %1398 = vmatpush2.msra.mxu0 0.0
    %1399 = vmatprep.subr.mxu0 0.0
    %1400 = vmatpush2.msra.mxu0 0.0
    %1401 = vmatprep.subr.mxu0 0.0
    %1402 = vmatpush2.msra.mxu0 0.0
    %1403 = vmatprep.subr.mxu0 0.0
    %1404 = vmatpush2.msra.mxu0 0.0
    %1405 = vmatprep.subr.mxu0 0.0
    %1406 = vmatpush2.msra.mxu0 0.0
    %1407 = vmatprep.subr.mxu0 0.0
    %1408 = vmatpush2.msra.mxu0 0.0
    %1409 = vmatprep.subr.mxu0 0.0
    %1410 = vmatpush2.msra.mxu0 0.0
    %1411 = vmatprep.subr.mxu0 0.0
    %1412 = vmatpush2.msra.mxu0 0.0
    %1413 = vmatprep.subr.mxu0 0.0
    %1414 = vmatpush2.msra.mxu0 0.0
    %1415 = vmatprep.subr.mxu0 0.0
    %1416 = vmatpush2.msra.mxu0 0.0
    %1417 = vmatprep.subr.mxu0 0.0
    %1418 = vmatpush2.msra.mxu0 0.0
    %1419 = vmatprep.subr.mxu0 0.0
    %1420 = vmatpush2.msra.mxu0 0.0
    %1421 = vmatprep.subr.mxu0 0.0
    %1422 = vmatpush2.msra.mxu0 0.0
    %1423 = vmatprep.subr.mxu0 0.0
    %1424 = vmatpush2.msra.mxu0 0.0
    %1425 = vmatprep.subr.mxu0 0.0
    %1426 = vmatpush2.msra.mxu0 0.0
    %1427 = vmatprep.subr.mxu0 0.0
    %1428 = vmatpush2.msra.mxu0 0.0
    %1429 = vmatprep.mubr.f32.mxu0 0.0
    %1430 = vmatmul.mubr.f32.gmra.mxu0 %v1293
    %v1431 = vpop.f32.mrf.mxu0
    %v1432 = vadd.f32 0.0, %v1431
    %v1433 = vpop.f32.mrf.mxu0
    %1434 = vdwg.mxu0
    %v1435 = vadd.f32 %v252, %v1362
    %v1436 = vsub.f32 0.0, %v1435
    %v1437 = vmul.f32 %v1436, 1.442695
    %v1438 = vpow.pop %v1437
    %v1439 = vadd.f32 %v1438, 1.0
    %v1440 = vrcp.pop %v1439
    %v1441 = vmul.f32 1.0, %v1440
    %1443 = vrot.lane.b32.xlu0 %v1432, 32
    %v1444 = vpop.permute.xlu0 %1443
    %v1446 = vadd.f32 %v252, %v1444
    %v1447 = vsub.f32 0.0, %v1446
    %v1448 = vmul.f32 %v1447, 1.442695
    %v1449 = vpow.pop %v1448
    %v1450 = vadd.f32 %v1449, 1.0
    %v1451 = vrcp.pop %v1450
    %v1452 = vmul.f32 1.0, %v1451
    %1453 = vmatprep.subr.mxu0 0.0
    %1454 = vmatpush1.msra.mxu0 0.0
    %1455 = vmatprep.subr.mxu0 0.0
    %1456 = vmatpush1.msra.mxu0 0.0
    %1457 = vmatprep.subr.mxu0 0.0
    %1458 = vmatpush1.msra.mxu0 0.0
    %1459 = vmatprep.subr.mxu0 0.0
    %1460 = vmatpush1.msra.mxu0 0.0
    %1461 = vmatprep.subr.mxu0 0.0
    %1462 = vmatpush1.msra.mxu0 0.0
    %1463 = vmatprep.subr.mxu0 0.0
    %1464 = vmatpush1.msra.mxu0 0.0
    %1465 = vmatprep.subr.mxu0 0.0
    %1466 = vmatpush1.msra.mxu0 0.0
    %1467 = vmatprep.subr.mxu0 0.0
    %1468 = vmatpush1.msra.mxu0 0.0
    %1469 = vmatprep.subr.mxu0 0.0
    %1470 = vmatpush1.msra.mxu0 0.0
    %1471 = vmatprep.subr.mxu0 0.0
    %1472 = vmatpush1.msra.mxu0 0.0
    %1473 = vmatprep.subr.mxu0 0.0
    %1474 = vmatpush1.msra.mxu0 0.0
    %1475 = vmatprep.subr.mxu0 0.0
    %1476 = vmatpush1.msra.mxu0 0.0
    %1477 = vmatprep.subr.mxu0 0.0
    %1478 = vmatpush1.msra.mxu0 %v163
    %1479 = vmatprep.subr.mxu0 0.0
    %1480 = vmatpush1.msra.mxu0 %v162
    %1481 = vmatprep.subr.mxu0 0.0
    %1482 = vmatpush1.msra.mxu0 %v161
    %1483 = vmatprep.subr.mxu0 0.0
    %1484 = vmatpush1.msra.mxu0 %v160
    %1485 = vmatprep.subr.mxu0 0.0
    %1486 = vmatpush2.msra.mxu0 0.0
    %1487 = vmatprep.subr.mxu0 0.0
    %1488 = vmatpush2.msra.mxu0 0.0
    %1489 = vmatprep.subr.mxu0 0.0
    %1490 = vmatpush2.msra.mxu0 0.0
    %1491 = vmatprep.subr.mxu0 0.0
    %1492 = vmatpush2.msra.mxu0 0.0
    %1493 = vmatprep.subr.mxu0 0.0
    %1494 = vmatpush2.msra.mxu0 0.0
    %1495 = vmatprep.subr.mxu0 0.0
    %1496 = vmatpush2.msra.mxu0 0.0
    %1497 = vmatprep.subr.mxu0 0.0
    %1498 = vmatpush2.msra.mxu0 0.0
    %1499 = vmatprep.subr.mxu0 0.0
    %1500 = vmatpush2.msra.mxu0 0.0
    %1501 = vmatprep.subr.mxu0 0.0
    %1502 = vmatpush2.msra.mxu0 0.0
    %1503 = vmatprep.subr.mxu0 0.0
    %1504 = vmatpush2.msra.mxu0 0.0
    %1505 = vmatprep.subr.mxu0 0.0
    %1506 = vmatpush2.msra.mxu0 0.0
    %1507 = vmatprep.subr.mxu0 0.0
    %1508 = vmatpush2.msra.mxu0 0.0
    %1509 = vmatprep.subr.mxu0 0.0
    %1510 = vmatpush2.msra.mxu0 0.0
    %1511 = vmatprep.subr.mxu0 0.0
    %1512 = vmatpush2.msra.mxu0 0.0
    %1513 = vmatprep.subr.mxu0 0.0
    %1514 = vmatpush2.msra.mxu0 0.0
    %1515 = vmatprep.subr.mxu0 0.0
    %1516 = vmatpush2.msra.mxu0 0.0
    %1517 = vmatprep.mubr.f32.mxu0 0.0
    %1518 = vmatmul.mubr.f32.gmra.mxu0 %v1293
    %v1519 = vpop.f32.mrf.mxu0
    %v1520 = vadd.f32 %v269, %v1519
    %v1521 = vpop.f32.mrf.mxu0
    %1522 = vdwg.mxu0
    %v1523 = vmul.f32 %v1441, %v1520
    %1525 = vrot.lane.b32.xlu0 %v1523, 64
    %v1526 = vpop.permute.xlu0 %1525
    %v1528 = vadd.f32 %v252, %v1526
    %v1529 = vtanh.pop %v1528
    %v1530 = vsub.f32 1.0, %v1452
    %1532 = vrot.lane.b32.xlu0 %v1529, 96
    %v1533 = vpop.permute.xlu0 %1532
    %v1535 = vmul.f32 %v1530, %v1533
    %v1537 = vmul.f32 %v1452, %v1290
    %v1538 = vadd.f32 %v1535, %v1537
    %1540 = vrot.lane.b32.xlu0 %v1538, 96
    %v1541 = vpop.permute.xlu0 %1540
    %v1542 = vsel %vm44, %v1541, 0
    %1544 = vmatprep.subr.mxu0 0.0
    %1545 = vmatpush1.msra.mxu0 0.0
    %1546 = vmatprep.subr.mxu0 0.0
    %1547 = vmatpush1.msra.mxu0 0.0
    %1548 = vmatprep.subr.mxu0 0.0
    %1549 = vmatpush1.msra.mxu0 0.0
    %1550 = vmatprep.subr.mxu0 0.0
    %1551 = vmatpush1.msra.mxu0 0.0
    %1552 = vmatprep.subr.mxu0 0.0
    %1553 = vmatpush1.msra.mxu0 0.0
    %1554 = vmatprep.subr.mxu0 0.0
    %1555 = vmatpush1.msra.mxu0 0.0
    %1556 = vmatprep.subr.mxu0 0.0
    %1557 = vmatpush1.msra.mxu0 0.0
    %1558 = vmatprep.subr.mxu0 0.0
    %1559 = vmatpush1.msra.mxu0 0.0
    %1560 = vmatprep.subr.mxu0 0.0
    %1561 = vmatpush1.msra.mxu0 0.0
    %1562 = vmatprep.subr.mxu0 0.0
    %1563 = vmatpush1.msra.mxu0 0.0
    %1564 = vmatprep.subr.mxu0 0.0
    %1565 = vmatpush1.msra.mxu0 0.0
    %1566 = vmatprep.subr.mxu0 0.0
    %1567 = vmatpush1.msra.mxu0 0.0
    %1568 = vmatprep.subr.mxu0 0.0
    %1569 = vmatpush1.msra.mxu0 %v155
    %1570 = vmatprep.subr.mxu0 0.0
    %1571 = vmatpush1.msra.mxu0 %v154
    %1572 = vmatprep.subr.mxu0 0.0
    %1573 = vmatpush1.msra.mxu0 %v153
    %1574 = vmatprep.subr.mxu0 0.0
    %1575 = vmatpush1.msra.mxu0 %v152
    %1576 = vmatprep.subr.mxu0 0.0
    %1577 = vmatpush2.msra.mxu0 0.0
    %1578 = vmatprep.subr.mxu0 0.0
    %1579 = vmatpush2.msra.mxu0 0.0
    %1580 = vmatprep.subr.mxu0 0.0
    %1581 = vmatpush2.msra.mxu0 0.0
    %1582 = vmatprep.subr.mxu0 0.0
    %1583 = vmatpush2.msra.mxu0 0.0
    %1584 = vmatprep.subr.mxu0 0.0
    %1585 = vmatpush2.msra.mxu0 0.0
    %1586 = vmatprep.subr.mxu0 0.0
    %1587 = vmatpush2.msra.mxu0 0.0
    %1588 = vmatprep.subr.mxu0 0.0
    %1589 = vmatpush2.msra.mxu0 0.0
    %1590 = vmatprep.subr.mxu0 0.0
    %1591 = vmatpush2.msra.mxu0 0.0
    %1592 = vmatprep.subr.mxu0 0.0
    %1593 = vmatpush2.msra.mxu0 0.0
    %1594 = vmatprep.subr.mxu0 0.0
    %1595 = vmatpush2.msra.mxu0 0.0
    %1596 = vmatprep.subr.mxu0 0.0
    %1597 = vmatpush2.msra.mxu0 0.0
    %1598 = vmatprep.subr.mxu0 0.0
    %1599 = vmatpush2.msra.mxu0 0.0
    %1600 = vmatprep.subr.mxu0 0.0
    %1601 = vmatpush2.msra.mxu0 0.0
    %1602 = vmatprep.subr.mxu0 0.0
    %1603 = vmatpush2.msra.mxu0 0.0
    %1604 = vmatprep.subr.mxu0 0.0
    %1605 = vmatpush2.msra.mxu0 0.0
    %1606 = vmatprep.subr.mxu0 0.0
    %1607 = vmatpush2.msra.mxu0 0.0
    %1608 = vmatprep.mubr.f32.mxu0 0.0
    %1609 = vmatmul.mubr.f32.gmra.mxu0 %v1542
    %v1610 = vpop.f32.mrf.mxu0
    %v1611 = vadd.f32 0.0, %v1610
    %v1612 = vpop.f32.mrf.mxu0
    %1613 = vdwg.mxu0
    %1614 = vmatprep.subr.mxu0 0.0
    %1615 = vmatpush1.msra.mxu0 0.0
    %1616 = vmatprep.subr.mxu0 0.0
    %1617 = vmatpush1.msra.mxu0 0.0
    %1618 = vmatprep.subr.mxu0 0.0
    %1619 = vmatpush1.msra.mxu0 0.0
    %1620 = vmatprep.subr.mxu0 0.0
    %1621 = vmatpush1.msra.mxu0 0.0
    %1622 = vmatprep.subr.mxu0 0.0
    %1623 = vmatpush1.msra.mxu0 0.0
    %1624 = vmatprep.subr.mxu0 0.0
    %1625 = vmatpush1.msra.mxu0 0.0
    %1626 = vmatprep.subr.mxu0 0.0
    %1627 = vmatpush1.msra.mxu0 0.0
    %1628 = vmatprep.subr.mxu0 0.0
    %1629 = vmatpush1.msra.mxu0 0.0
    %1630 = vmatprep.subr.mxu0 0.0
    %1631 = vmatpush1.msra.mxu0 0.0
    %1632 = vmatprep.subr.mxu0 0.0
    %1633 = vmatpush1.msra.mxu0 0.0
    %1634 = vmatprep.subr.mxu0 0.0
    %1635 = vmatpush1.msra.mxu0 0.0
    %1636 = vmatprep.subr.mxu0 0.0
    %1637 = vmatpush1.msra.mxu0 0.0
    %1638 = vmatprep.subr.mxu0 0.0
    %1639 = vmatpush1.msra.mxu0 %v159
    %1640 = vmatprep.subr.mxu0 0.0
    %1641 = vmatpush1.msra.mxu0 %v158
    %1642 = vmatprep.subr.mxu0 0.0
    %1643 = vmatpush1.msra.mxu0 %v157
    %1644 = vmatprep.subr.mxu0 0.0
    %1645 = vmatpush1.msra.mxu0 %v156
    %1646 = vmatprep.subr.mxu0 0.0
    %1647 = vmatpush2.msra.mxu0 0.0
    %1648 = vmatprep.subr.mxu0 0.0
    %1649 = vmatpush2.msra.mxu0 0.0
    %1650 = vmatprep.subr.mxu0 0.0
    %1651 = vmatpush2.msra.mxu0 0.0
    %1652 = vmatprep.subr.mxu0 0.0
    %1653 = vmatpush2.msra.mxu0 0.0
    %1654 = vmatprep.subr.mxu0 0.0
    %1655 = vmatpush2.msra.mxu0 0.0
    %1656 = vmatprep.subr.mxu0 0.0
    %1657 = vmatpush2.msra.mxu0 0.0
    %1658 = vmatprep.subr.mxu0 0.0
    %1659 = vmatpush2.msra.mxu0 0.0
    %1660 = vmatprep.subr.mxu0 0.0
    %1661 = vmatpush2.msra.mxu0 0.0
    %1662 = vmatprep.subr.mxu0 0.0
    %1663 = vmatpush2.msra.mxu0 0.0
    %1664 = vmatprep.subr.mxu0 0.0
    %1665 = vmatpush2.msra.mxu0 0.0
    %1666 = vmatprep.subr.mxu0 0.0
    %1667 = vmatpush2.msra.mxu0 0.0
    %1668 = vmatprep.subr.mxu0 0.0
    %1669 = vmatpush2.msra.mxu0 0.0
    %1670 = vmatprep.subr.mxu0 0.0
    %1671 = vmatpush2.msra.mxu0 0.0
    %1672 = vmatprep.subr.mxu0 0.0
    %1673 = vmatpush2.msra.mxu0 0.0
    %1674 = vmatprep.subr.mxu0 0.0
    %1675 = vmatpush2.msra.mxu0 0.0
    %1676 = vmatprep.subr.mxu0 0.0
    %1677 = vmatpush2.msra.mxu0 0.0
    %1678 = vmatprep.mubr.f32.mxu0 0.0
    %1679 = vmatmul.mubr.f32.gmra.mxu0 %v1542
    %v1680 = vpop.f32.mrf.mxu0
    %v1681 = vadd.f32 0.0, %v1680
    %v1682 = vpop.f32.mrf.mxu0
    %1683 = vdwg.mxu0
    %v1685 = vrot.slane %v1611, 6
    %v1687 = vadd.f32 %v252, %v1685
    %v1688 = vsub.f32 0.0, %v1687
    %v1689 = vmul.f32 %v1688, 1.442695
    %v1690 = vpow.pop %v1689
    %v1691 = vadd.f32 %v1690, 1.0
    %v1692 = vrcp.pop %v1691
    %v1693 = vmul.f32 1.0, %v1692
    %v1695 = vrot.slane %v1681, 6
    %1696 = vrot.lane.b32.xlu0 %v1695, 32
    %v1697 = vpop.permute.xlu0 %1696
    %v1699 = vadd.f32 %v252, %v1697
    %v1700 = vsub.f32 0.0, %v1699
    %v1701 = vmul.f32 %v1700, 1.442695
    %v1702 = vpow.pop %v1701
    %v1703 = vadd.f32 %v1702, 1.0
    %v1704 = vrcp.pop %v1703
    %v1705 = vmul.f32 1.0, %v1704
    %1706 = vmatprep.subr.mxu0 0.0
    %1707 = vmatpush1.msra.mxu0 0.0
    %1708 = vmatprep.subr.mxu0 0.0
    %1709 = vmatpush1.msra.mxu0 0.0
    %1710 = vmatprep.subr.mxu0 0.0
    %1711 = vmatpush1.msra.mxu0 0.0
    %1712 = vmatprep.subr.mxu0 0.0
    %1713 = vmatpush1.msra.mxu0 0.0
    %1714 = vmatprep.subr.mxu0 0.0
    %1715 = vmatpush1.msra.mxu0 0.0
    %1716 = vmatprep.subr.mxu0 0.0
    %1717 = vmatpush1.msra.mxu0 0.0
    %1718 = vmatprep.subr.mxu0 0.0
    %1719 = vmatpush1.msra.mxu0 0.0
    %1720 = vmatprep.subr.mxu0 0.0
    %1721 = vmatpush1.msra.mxu0 0.0
    %1722 = vmatprep.subr.mxu0 0.0
    %1723 = vmatpush1.msra.mxu0 0.0
    %1724 = vmatprep.subr.mxu0 0.0
    %1725 = vmatpush1.msra.mxu0 0.0
    %1726 = vmatprep.subr.mxu0 0.0
    %1727 = vmatpush1.msra.mxu0 0.0
    %1728 = vmatprep.subr.mxu0 0.0
    %1729 = vmatpush1.msra.mxu0 0.0
    %1730 = vmatprep.subr.mxu0 0.0
    %1731 = vmatpush1.msra.mxu0 %v163
    %1732 = vmatprep.subr.mxu0 0.0
    %1733 = vmatpush1.msra.mxu0 %v162
    %1734 = vmatprep.subr.mxu0 0.0
    %1735 = vmatpush1.msra.mxu0 %v161
    %1736 = vmatprep.subr.mxu0 0.0
    %1737 = vmatpush1.msra.mxu0 %v160
    %1738 = vmatprep.subr.mxu0 0.0
    %1739 = vmatpush2.msra.mxu0 0.0
    %1740 = vmatprep.subr.mxu0 0.0
    %1741 = vmatpush2.msra.mxu0 0.0
    %1742 = vmatprep.subr.mxu0 0.0
    %1743 = vmatpush2.msra.mxu0 0.0
    %1744 = vmatprep.subr.mxu0 0.0
    %1745 = vmatpush2.msra.mxu0 0.0
    %1746 = vmatprep.subr.mxu0 0.0
    %1747 = vmatpush2.msra.mxu0 0.0
    %1748 = vmatprep.subr.mxu0 0.0
    %1749 = vmatpush2.msra.mxu0 0.0
    %1750 = vmatprep.subr.mxu0 0.0
    %1751 = vmatpush2.msra.mxu0 0.0
    %1752 = vmatprep.subr.mxu0 0.0
    %1753 = vmatpush2.msra.mxu0 0.0
    %1754 = vmatprep.subr.mxu0 0.0
    %1755 = vmatpush2.msra.mxu0 0.0
    %1756 = vmatprep.subr.mxu0 0.0
    %1757 = vmatpush2.msra.mxu0 0.0
    %1758 = vmatprep.subr.mxu0 0.0
    %1759 = vmatpush2.msra.mxu0 0.0
    %1760 = vmatprep.subr.mxu0 0.0
    %1761 = vmatpush2.msra.mxu0 0.0
    %1762 = vmatprep.subr.mxu0 0.0
    %1763 = vmatpush2.msra.mxu0 0.0
    %1764 = vmatprep.subr.mxu0 0.0
    %1765 = vmatpush2.msra.mxu0 0.0
    %1766 = vmatprep.subr.mxu0 0.0
    %1767 = vmatpush2.msra.mxu0 0.0
    %1768 = vmatprep.subr.mxu0 0.0
    %1769 = vmatpush2.msra.mxu0 0.0
    %1770 = vmatprep.mubr.f32.mxu0 0.0
    %1771 = vmatmul.mubr.f32.gmra.mxu0 %v1542
    %v1772 = vpop.f32.mrf.mxu0
    %v1773 = vadd.f32 %v269, %v1772
    %v1774 = vpop.f32.mrf.mxu0
    %1775 = vdwg.mxu0
    %v1777 = vrot.slane %v1773, 6
    %v1779 = vmul.f32 %v1693, %v1777
    %1781 = vrot.lane.b32.xlu0 %v1779, 64
    %v1782 = vpop.permute.xlu0 %1781
    %v1784 = vadd.f32 %v252, %v1782
    %v1785 = vtanh.pop %v1784
    %v1786 = vsub.f32 1.0, %v1705
    %1788 = vrot.lane.b32.xlu0 %v1785, 96
    %v1789 = vpop.permute.xlu0 %1788
    %v1791 = vmul.f32 %v1786, %v1789
    %v1792 = vrot.slane %v1538, 6
    %v1794 = vmul.f32 %v1705, %v1792
    %v1795 = vadd.f32 %v1791, %v1794
    %v1797 = vrot.slane %v1795, 2
    %1798 = vrot.lane.b32.xlu0 %v1797, 96
    %v1799 = vpop.permute.xlu0 %1798
    %v1800 = vsel %vm44, %v1799, 0
    %1802 = vmatprep.subr.mxu0 0.0
    %1803 = vmatpush1.msra.mxu0 0.0
    %1804 = vmatprep.subr.mxu0 0.0
    %1805 = vmatpush1.msra.mxu0 0.0
    %1806 = vmatprep.subr.mxu0 0.0
    %1807 = vmatpush1.msra.mxu0 0.0
    %1808 = vmatprep.subr.mxu0 0.0
    %1809 = vmatpush1.msra.mxu0 0.0
    %1810 = vmatprep.subr.mxu0 0.0
    %1811 = vmatpush1.msra.mxu0 0.0
    %1812 = vmatprep.subr.mxu0 0.0
    %1813 = vmatpush1.msra.mxu0 0.0
    %1814 = vmatprep.subr.mxu0 0.0
    %1815 = vmatpush1.msra.mxu0 0.0
    %1816 = vmatprep.subr.mxu0 0.0
    %1817 = vmatpush1.msra.mxu0 0.0
    %1818 = vmatprep.subr.mxu0 0.0
    %1819 = vmatpush1.msra.mxu0 0.0
    %1820 = vmatprep.subr.mxu0 0.0
    %1821 = vmatpush1.msra.mxu0 0.0
    %1822 = vmatprep.subr.mxu0 0.0
    %1823 = vmatpush1.msra.mxu0 0.0
    %1824 = vmatprep.subr.mxu0 0.0
    %1825 = vmatpush1.msra.mxu0 0.0
    %1826 = vmatprep.subr.mxu0 0.0
    %1827 = vmatpush1.msra.mxu0 %v155
    %1828 = vmatprep.subr.mxu0 0.0
    %1829 = vmatpush1.msra.mxu0 %v154
    %1830 = vmatprep.subr.mxu0 0.0
    %1831 = vmatpush1.msra.mxu0 %v153
    %1832 = vmatprep.subr.mxu0 0.0
    %1833 = vmatpush1.msra.mxu0 %v152
    %1834 = vmatprep.subr.mxu0 0.0
    %1835 = vmatpush2.msra.mxu0 0.0
    %1836 = vmatprep.subr.mxu0 0.0
    %1837 = vmatpush2.msra.mxu0 0.0
    %1838 = vmatprep.subr.mxu0 0.0
    %1839 = vmatpush2.msra.mxu0 0.0
    %1840 = vmatprep.subr.mxu0 0.0
    %1841 = vmatpush2.msra.mxu0 0.0
    %1842 = vmatprep.subr.mxu0 0.0
    %1843 = vmatpush2.msra.mxu0 0.0
    %1844 = vmatprep.subr.mxu0 0.0
    %1845 = vmatpush2.msra.mxu0 0.0
    %1846 = vmatprep.subr.mxu0 0.0
    %1847 = vmatpush2.msra.mxu0 0.0
    %1848 = vmatprep.subr.mxu0 0.0
    %1849 = vmatpush2.msra.mxu0 0.0
    %1850 = vmatprep.subr.mxu0 0.0
    %1851 = vmatpush2.msra.mxu0 0.0
    %1852 = vmatprep.subr.mxu0 0.0
    %1853 = vmatpush2.msra.mxu0 0.0
    %1854 = vmatprep.subr.mxu0 0.0
    %1855 = vmatpush2.msra.mxu0 0.0
    %1856 = vmatprep.subr.mxu0 0.0
    %1857 = vmatpush2.msra.mxu0 0.0
    %1858 = vmatprep.subr.mxu0 0.0
    %1859 = vmatpush2.msra.mxu0 0.0
    %1860 = vmatprep.subr.mxu0 0.0
    %1861 = vmatpush2.msra.mxu0 0.0
    %1862 = vmatprep.subr.mxu0 0.0
    %1863 = vmatpush2.msra.mxu0 0.0
    %1864 = vmatprep.subr.mxu0 0.0
    %1865 = vmatpush2.msra.mxu0 0.0
    %1866 = vmatprep.mubr.f32.mxu0 0.0
    %1867 = vmatmul.mubr.f32.gmra.mxu0 %v1800
    %v1868 = vpop.f32.mrf.mxu0
    %v1869 = vadd.f32 0.0, %v1868
    %v1870 = vpop.f32.mrf.mxu0
    %1871 = vdwg.mxu0
    %1872 = vmatprep.subr.mxu0 0.0
    %1873 = vmatpush1.msra.mxu0 0.0
    %1874 = vmatprep.subr.mxu0 0.0
    %1875 = vmatpush1.msra.mxu0 0.0
    %1876 = vmatprep.subr.mxu0 0.0
    %1877 = vmatpush1.msra.mxu0 0.0
    %1878 = vmatprep.subr.mxu0 0.0
    %1879 = vmatpush1.msra.mxu0 0.0
    %1880 = vmatprep.subr.mxu0 0.0
    %1881 = vmatpush1.msra.mxu0 0.0
    %1882 = vmatprep.subr.mxu0 0.0
    %1883 = vmatpush1.msra.mxu0 0.0
    %1884 = vmatprep.subr.mxu0 0.0
    %1885 = vmatpush1.msra.mxu0 0.0
    %1886 = vmatprep.subr.mxu0 0.0
    %1887 = vmatpush1.msra.mxu0 0.0
    %1888 = vmatprep.subr.mxu0 0.0
    %1889 = vmatpush1.msra.mxu0 0.0
    %1890 = vmatprep.subr.mxu0 0.0
    %1891 = vmatpush1.msra.mxu0 0.0
    %1892 = vmatprep.subr.mxu0 0.0
    %1893 = vmatpush1.msra.mxu0 0.0
    %1894 = vmatprep.subr.mxu0 0.0
    %1895 = vmatpush1.msra.mxu0 0.0
    %1896 = vmatprep.subr.mxu0 0.0
    %1897 = vmatpush1.msra.mxu0 %v159
    %1898 = vmatprep.subr.mxu0 0.0
    %1899 = vmatpush1.msra.mxu0 %v158
    %1900 = vmatprep.subr.mxu0 0.0
    %1901 = vmatpush1.msra.mxu0 %v157
    %1902 = vmatprep.subr.mxu0 0.0
    %1903 = vmatpush1.msra.mxu0 %v156
    %1904 = vmatprep.subr.mxu0 0.0
    %1905 = vmatpush2.msra.mxu0 0.0
    %1906 = vmatprep.subr.mxu0 0.0
    %1907 = vmatpush2.msra.mxu0 0.0
    %1908 = vmatprep.subr.mxu0 0.0
    %1909 = vmatpush2.msra.mxu0 0.0
    %1910 = vmatprep.subr.mxu0 0.0
    %1911 = vmatpush2.msra.mxu0 0.0
    %1912 = vmatprep.subr.mxu0 0.0
    %1913 = vmatpush2.msra.mxu0 0.0
    %1914 = vmatprep.subr.mxu0 0.0
    %1915 = vmatpush2.msra.mxu0 0.0
    %1916 = vmatprep.subr.mxu0 0.0
    %1917 = vmatpush2.msra.mxu0 0.0
    %1918 = vmatprep.subr.mxu0 0.0
    %1919 = vmatpush2.msra.mxu0 0.0
    %1920 = vmatprep.subr.mxu0 0.0
    %1921 = vmatpush2.msra.mxu0 0.0
    %1922 = vmatprep.subr.mxu0 0.0
    %1923 = vmatpush2.msra.mxu0 0.0
    %1924 = vmatprep.subr.mxu0 0.0
    %1925 = vmatpush2.msra.mxu0 0.0
    %1926 = vmatprep.subr.mxu0 0.0
    %1927 = vmatpush2.msra.mxu0 0.0
    %1928 = vmatprep.subr.mxu0 0.0
    %1929 = vmatpush2.msra.mxu0 0.0
    %1930 = vmatprep.subr.mxu0 0.0
    %1931 = vmatpush2.msra.mxu0 0.0
    %1932 = vmatprep.subr.mxu0 0.0
    %1933 = vmatpush2.msra.mxu0 0.0
    %1934 = vmatprep.subr.mxu0 0.0
    %1935 = vmatpush2.msra.mxu0 0.0
    %1936 = vmatprep.mubr.f32.mxu0 0.0
    %1937 = vmatmul.mubr.f32.gmra.mxu0 %v1800
    %v1938 = vpop.f32.mrf.mxu0
    %v1939 = vadd.f32 0.0, %v1938
    %v1940 = vpop.f32.mrf.mxu0
    %1941 = vdwg.mxu0
    %v1943 = vrot.slane %v1869, 4
    %v1945 = vadd.f32 %v252, %v1943
    %v1946 = vsub.f32 0.0, %v1945
    %v1947 = vmul.f32 %v1946, 1.442695
    %v1948 = vpow.pop %v1947
    %v1949 = vadd.f32 %v1948, 1.0
    %v1950 = vrcp.pop %v1949
    %v1951 = vmul.f32 1.0, %v1950
    %v1953 = vrot.slane %v1939, 4
    %1954 = vrot.lane.b32.xlu0 %v1953, 32
    %v1955 = vpop.permute.xlu0 %1954
    %v1957 = vadd.f32 %v252, %v1955
    %v1958 = vsub.f32 0.0, %v1957
    %v1959 = vmul.f32 %v1958, 1.442695
    %v1960 = vpow.pop %v1959
    %v1961 = vadd.f32 %v1960, 1.0
    %v1962 = vrcp.pop %v1961
    %v1963 = vmul.f32 1.0, %v1962
    %1964 = vmatprep.subr.mxu0 0.0
    %1965 = vmatpush1.msra.mxu0 0.0
    %1966 = vmatprep.subr.mxu0 0.0
    %1967 = vmatpush1.msra.mxu0 0.0
    %1968 = vmatprep.subr.mxu0 0.0
    %1969 = vmatpush1.msra.mxu0 0.0
    %1970 = vmatprep.subr.mxu0 0.0
    %1971 = vmatpush1.msra.mxu0 0.0
    %1972 = vmatprep.subr.mxu0 0.0
    %1973 = vmatpush1.msra.mxu0 0.0
    %1974 = vmatprep.subr.mxu0 0.0
    %1975 = vmatpush1.msra.mxu0 0.0
    %1976 = vmatprep.subr.mxu0 0.0
    %1977 = vmatpush1.msra.mxu0 0.0
    %1978 = vmatprep.subr.mxu0 0.0
    %1979 = vmatpush1.msra.mxu0 0.0
    %1980 = vmatprep.subr.mxu0 0.0
    %1981 = vmatpush1.msra.mxu0 0.0
    %1982 = vmatprep.subr.mxu0 0.0
    %1983 = vmatpush1.msra.mxu0 0.0
    %1984 = vmatprep.subr.mxu0 0.0
    %1985 = vmatpush1.msra.mxu0 0.0
    %1986 = vmatprep.subr.mxu0 0.0
    %1987 = vmatpush1.msra.mxu0 0.0
    %1988 = vmatprep.subr.mxu0 0.0
    %1989 = vmatpush1.msra.mxu0 %v163
    %1990 = vmatprep.subr.mxu0 0.0
    %1991 = vmatpush1.msra.mxu0 %v162
    %1992 = vmatprep.subr.mxu0 0.0
    %1993 = vmatpush1.msra.mxu0 %v161
    %1994 = vmatprep.subr.mxu0 0.0
    %1995 = vmatpush1.msra.mxu0 %v160
    %1996 = vmatprep.subr.mxu0 0.0
    %1997 = vmatpush2.msra.mxu0 0.0
    %1998 = vmatprep.subr.mxu0 0.0
    %1999 = vmatpush2.msra.mxu0 0.0
    %2000 = vmatprep.subr.mxu0 0.0
    %2001 = vmatpush2.msra.mxu0 0.0
    %2002 = vmatprep.subr.mxu0 0.0
    %2003 = vmatpush2.msra.mxu0 0.0
    %2004 = vmatprep.subr.mxu0 0.0
    %2005 = vmatpush2.msra.mxu0 0.0
    %2006 = vmatprep.subr.mxu0 0.0
    %2007 = vmatpush2.msra.mxu0 0.0
    %2008 = vmatprep.subr.mxu0 0.0
    %2009 = vmatpush2.msra.mxu0 0.0
    %2010 = vmatprep.subr.mxu0 0.0
    %2011 = vmatpush2.msra.mxu0 0.0
    %2012 = vmatprep.subr.mxu0 0.0
    %2013 = vmatpush2.msra.mxu0 0.0
    %2014 = vmatprep.subr.mxu0 0.0
    %2015 = vmatpush2.msra.mxu0 0.0
    %2016 = vmatprep.subr.mxu0 0.0
    %2017 = vmatpush2.msra.mxu0 0.0
    %2018 = vmatprep.subr.mxu0 0.0
    %2019 = vmatpush2.msra.mxu0 0.0
    %2020 = vmatprep.subr.mxu0 0.0
    %2021 = vmatpush2.msra.mxu0 0.0
    %2022 = vmatprep.subr.mxu0 0.0
    %2023 = vmatpush2.msra.mxu0 0.0
    %2024 = vmatprep.subr.mxu0 0.0
    %2025 = vmatpush2.msra.mxu0 0.0
    %2026 = vmatprep.subr.mxu0 0.0
    %2027 = vmatpush2.msra.mxu0 0.0
    %2028 = vmatprep.mubr.f32.mxu0 0.0
    %2029 = vmatmul.mubr.f32.gmra.mxu0 %v1800
    %v2030 = vpop.f32.mrf.mxu0
    %v2031 = vadd.f32 %v269, %v2030
    %v2032 = vpop.f32.mrf.mxu0
    %2033 = vdwg.mxu0
    %v2035 = vrot.slane %v2031, 4
    %v2037 = vmul.f32 %v1951, %v2035
    %2039 = vrot.lane.b32.xlu0 %v2037, 64
    %v2040 = vpop.permute.xlu0 %2039
    %v2042 = vadd.f32 %v252, %v2040
    %v2043 = vtanh.pop %v2042
    %v2044 = vsub.f32 1.0, %v1963
    %2046 = vrot.lane.b32.xlu0 %v2043, 96
    %v2047 = vpop.permute.xlu0 %2046
    %v2049 = vmul.f32 %v2044, %v2047
    %v2050 = vrot.slane %v1795, 6
    %v2052 = vmul.f32 %v1963, %v2050
    %v2053 = vadd.f32 %v2049, %v2052
    %v2055 = vrot.slane %v2053, 4
    %2056 = vrot.lane.b32.xlu0 %v2055, 96
    %v2057 = vpop.permute.xlu0 %2056
    %v2058 = vsel %vm44, %v2057, 0
    %2060 = vmatprep.subr.mxu0 0.0
    %2061 = vmatpush1.msra.mxu0 0.0
    %2062 = vmatprep.subr.mxu0 0.0
    %2063 = vmatpush1.msra.mxu0 0.0
    %2064 = vmatprep.subr.mxu0 0.0
    %2065 = vmatpush1.msra.mxu0 0.0
    %2066 = vmatprep.subr.mxu0 0.0
    %2067 = vmatpush1.msra.mxu0 0.0
    %2068 = vmatprep.subr.mxu0 0.0
    %2069 = vmatpush1.msra.mxu0 0.0
    %2070 = vmatprep.subr.mxu0 0.0
    %2071 = vmatpush1.msra.mxu0 0.0
    %2072 = vmatprep.subr.mxu0 0.0
    %2073 = vmatpush1.msra.mxu0 0.0
    %2074 = vmatprep.subr.mxu0 0.0
    %2075 = vmatpush1.msra.mxu0 0.0
    %2076 = vmatprep.subr.mxu0 0.0
    %2077 = vmatpush1.msra.mxu0 0.0
    %2078 = vmatprep.subr.mxu0 0.0
    %2079 = vmatpush1.msra.mxu0 0.0
    %2080 = vmatprep.subr.mxu0 0.0
    %2081 = vmatpush1.msra.mxu0 0.0
    %2082 = vmatprep.subr.mxu0 0.0
    %2083 = vmatpush1.msra.mxu0 0.0
    %2084 = vmatprep.subr.mxu0 0.0
    %2085 = vmatpush1.msra.mxu0 %v155
    %2086 = vmatprep.subr.mxu0 0.0
    %2087 = vmatpush1.msra.mxu0 %v154
    %2088 = vmatprep.subr.mxu0 0.0
    %2089 = vmatpush1.msra.mxu0 %v153
    %2090 = vmatprep.subr.mxu0 0.0
    %2091 = vmatpush1.msra.mxu0 %v152
    %2092 = vmatprep.subr.mxu0 0.0
    %2093 = vmatpush2.msra.mxu0 0.0
    %2094 = vmatprep.subr.mxu0 0.0
    %2095 = vmatpush2.msra.mxu0 0.0
    %2096 = vmatprep.subr.mxu0 0.0
    %2097 = vmatpush2.msra.mxu0 0.0
    %2098 = vmatprep.subr.mxu0 0.0
    %2099 = vmatpush2.msra.mxu0 0.0
    %2100 = vmatprep.subr.mxu0 0.0
    %2101 = vmatpush2.msra.mxu0 0.0
    %2102 = vmatprep.subr.mxu0 0.0
    %2103 = vmatpush2.msra.mxu0 0.0
    %2104 = vmatprep.subr.mxu0 0.0
    %2105 = vmatpush2.msra.mxu0 0.0
    %2106 = vmatprep.subr.mxu0 0.0
    %2107 = vmatpush2.msra.mxu0 0.0
    %2108 = vmatprep.subr.mxu0 0.0
    %2109 = vmatpush2.msra.mxu0 0.0
    %2110 = vmatprep.subr.mxu0 0.0
    %2111 = vmatpush2.msra.mxu0 0.0
    %2112 = vmatprep.subr.mxu0 0.0
    %2113 = vmatpush2.msra.mxu0 0.0
    %2114 = vmatprep.subr.mxu0 0.0
    %2115 = vmatpush2.msra.mxu0 0.0
    %2116 = vmatprep.subr.mxu0 0.0
    %2117 = vmatpush2.msra.mxu0 0.0
    %2118 = vmatprep.subr.mxu0 0.0
    %2119 = vmatpush2.msra.mxu0 0.0
    %2120 = vmatprep.subr.mxu0 0.0
    %2121 = vmatpush2.msra.mxu0 0.0
    %2122 = vmatprep.subr.mxu0 0.0
    %2123 = vmatpush2.msra.mxu0 0.0
    %2124 = vmatprep.mubr.f32.mxu0 0.0
    %2125 = vmatmul.mubr.f32.gmra.mxu0 %v2058
    %v2126 = vpop.f32.mrf.mxu0
    %v2127 = vadd.f32 0.0, %v2126
    %v2128 = vpop.f32.mrf.mxu0
    %2129 = vdwg.mxu0
    %2130 = vmatprep.subr.mxu0 0.0
    %2131 = vmatpush1.msra.mxu0 0.0
    %2132 = vmatprep.subr.mxu0 0.0
    %2133 = vmatpush1.msra.mxu0 0.0
    %2134 = vmatprep.subr.mxu0 0.0
    %2135 = vmatpush1.msra.mxu0 0.0
    %2136 = vmatprep.subr.mxu0 0.0
    %2137 = vmatpush1.msra.mxu0 0.0
    %2138 = vmatprep.subr.mxu0 0.0
    %2139 = vmatpush1.msra.mxu0 0.0
    %2140 = vmatprep.subr.mxu0 0.0
    %2141 = vmatpush1.msra.mxu0 0.0
    %2142 = vmatprep.subr.mxu0 0.0
    %2143 = vmatpush1.msra.mxu0 0.0
    %2144 = vmatprep.subr.mxu0 0.0
    %2145 = vmatpush1.msra.mxu0 0.0
    %2146 = vmatprep.subr.mxu0 0.0
    %2147 = vmatpush1.msra.mxu0 0.0
    %2148 = vmatprep.subr.mxu0 0.0
    %2149 = vmatpush1.msra.mxu0 0.0
    %2150 = vmatprep.subr.mxu0 0.0
    %2151 = vmatpush1.msra.mxu0 0.0
    %2152 = vmatprep.subr.mxu0 0.0
    %2153 = vmatpush1.msra.mxu0 0.0
    %2154 = vmatprep.subr.mxu0 0.0
    %2155 = vmatpush1.msra.mxu0 %v159
    %2156 = vmatprep.subr.mxu0 0.0
    %2157 = vmatpush1.msra.mxu0 %v158
    %2158 = vmatprep.subr.mxu0 0.0
    %2159 = vmatpush1.msra.mxu0 %v157
    %2160 = vmatprep.subr.mxu0 0.0
    %2161 = vmatpush1.msra.mxu0 %v156
    %2162 = vmatprep.subr.mxu0 0.0
    %2163 = vmatpush2.msra.mxu0 0.0
    %2164 = vmatprep.subr.mxu0 0.0
    %2165 = vmatpush2.msra.mxu0 0.0
    %2166 = vmatprep.subr.mxu0 0.0
    %2167 = vmatpush2.msra.mxu0 0.0
    %2168 = vmatprep.subr.mxu0 0.0
    %2169 = vmatpush2.msra.mxu0 0.0
    %2170 = vmatprep.subr.mxu0 0.0
    %2171 = vmatpush2.msra.mxu0 0.0
    %2172 = vmatprep.subr.mxu0 0.0
    %2173 = vmatpush2.msra.mxu0 0.0
    %2174 = vmatprep.subr.mxu0 0.0
    %2175 = vmatpush2.msra.mxu0 0.0
    %2176 = vmatprep.subr.mxu0 0.0
    %2177 = vmatpush2.msra.mxu0 0.0
    %2178 = vmatprep.subr.mxu0 0.0
    %2179 = vmatpush2.msra.mxu0 0.0
    %2180 = vmatprep.subr.mxu0 0.0
    %2181 = vmatpush2.msra.mxu0 0.0
    %2182 = vmatprep.subr.mxu0 0.0
    %2183 = vmatpush2.msra.mxu0 0.0
    %2184 = vmatprep.subr.mxu0 0.0
    %2185 = vmatpush2.msra.mxu0 0.0
    %2186 = vmatprep.subr.mxu0 0.0
    %2187 = vmatpush2.msra.mxu0 0.0
    %2188 = vmatprep.subr.mxu0 0.0
    %2189 = vmatpush2.msra.mxu0 0.0
    %2190 = vmatprep.subr.mxu0 0.0
    %2191 = vmatpush2.msra.mxu0 0.0
    %2192 = vmatprep.subr.mxu0 0.0
    %2193 = vmatpush2.msra.mxu0 0.0
    %2194 = vmatprep.mubr.f32.mxu0 0.0
    %2195 = vmatmul.mubr.f32.gmra.mxu0 %v2058
    %v2196 = vpop.f32.mrf.mxu0
    %v2197 = vadd.f32 0.0, %v2196
    %v2198 = vpop.f32.mrf.mxu0
    %2199 = vdwg.mxu0
    %v2201 = vrot.slane %v2127, 2
    %v2203 = vadd.f32 %v252, %v2201
    %v2204 = vsub.f32 0.0, %v2203
    %v2205 = vmul.f32 %v2204, 1.442695
    %v2206 = vpow.pop %v2205
    %v2207 = vadd.f32 %v2206, 1.0
    %v2208 = vrcp.pop %v2207
    %v2209 = vmul.f32 1.0, %v2208
    %v2211 = vrot.slane %v2197, 2
    %2212 = vrot.lane.b32.xlu0 %v2211, 32
    %v2213 = vpop.permute.xlu0 %2212
    %v2215 = vadd.f32 %v252, %v2213
    %v2216 = vsub.f32 0.0, %v2215
    %v2217 = vmul.f32 %v2216, 1.442695
    %v2218 = vpow.pop %v2217
    %v2219 = vadd.f32 %v2218, 1.0
    %v2220 = vrcp.pop %v2219
    %v2221 = vmul.f32 1.0, %v2220
    %2222 = vmatprep.subr.mxu0 0.0
    %2223 = vmatpush1.msra.mxu0 0.0
    %2224 = vmatprep.subr.mxu0 0.0
    %2225 = vmatpush1.msra.mxu0 0.0
    %2226 = vmatprep.subr.mxu0 0.0
    %2227 = vmatpush1.msra.mxu0 0.0
    %2228 = vmatprep.subr.mxu0 0.0
    %2229 = vmatpush1.msra.mxu0 0.0
    %2230 = vmatprep.subr.mxu0 0.0
    %2231 = vmatpush1.msra.mxu0 0.0
    %2232 = vmatprep.subr.mxu0 0.0
    %2233 = vmatpush1.msra.mxu0 0.0
    %2234 = vmatprep.subr.mxu0 0.0
    %2235 = vmatpush1.msra.mxu0 0.0
    %2236 = vmatprep.subr.mxu0 0.0
    %2237 = vmatpush1.msra.mxu0 0.0
    %2238 = vmatprep.subr.mxu0 0.0
    %2239 = vmatpush1.msra.mxu0 0.0
    %2240 = vmatprep.subr.mxu0 0.0
    %2241 = vmatpush1.msra.mxu0 0.0
    %2242 = vmatprep.subr.mxu0 0.0
    %2243 = vmatpush1.msra.mxu0 0.0
    %2244 = vmatprep.subr.mxu0 0.0
    %2245 = vmatpush1.msra.mxu0 0.0
    %2246 = vmatprep.subr.mxu0 0.0
    %2247 = vmatpush1.msra.mxu0 %v163
    %2248 = vmatprep.subr.mxu0 0.0
    %2249 = vmatpush1.msra.mxu0 %v162
    %2250 = vmatprep.subr.mxu0 0.0
    %2251 = vmatpush1.msra.mxu0 %v161
    %2252 = vmatprep.subr.mxu0 0.0
    %2253 = vmatpush1.msra.mxu0 %v160
    %2254 = vmatprep.subr.mxu0 0.0
    %2255 = vmatpush2.msra.mxu0 0.0
    %2256 = vmatprep.subr.mxu0 0.0
    %2257 = vmatpush2.msra.mxu0 0.0
    %2258 = vmatprep.subr.mxu0 0.0
    %2259 = vmatpush2.msra.mxu0 0.0
    %2260 = vmatprep.subr.mxu0 0.0
    %2261 = vmatpush2.msra.mxu0 0.0
    %2262 = vmatprep.subr.mxu0 0.0
    %2263 = vmatpush2.msra.mxu0 0.0
    %2264 = vmatprep.subr.mxu0 0.0
    %2265 = vmatpush2.msra.mxu0 0.0
    %2266 = vmatprep.subr.mxu0 0.0
    %2267 = vmatpush2.msra.mxu0 0.0
    %2268 = vmatprep.subr.mxu0 0.0
    %2269 = vmatpush2.msra.mxu0 0.0
    %2270 = vmatprep.subr.mxu0 0.0
    %2271 = vmatpush2.msra.mxu0 0.0
    %2272 = vmatprep.subr.mxu0 0.0
    %2273 = vmatpush2.msra.mxu0 0.0
    %2274 = vmatprep.subr.mxu0 0.0
    %2275 = vmatpush2.msra.mxu0 0.0
    %2276 = vmatprep.subr.mxu0 0.0
    %2277 = vmatpush2.msra.mxu0 0.0
    %2278 = vmatprep.subr.mxu0 0.0
    %2279 = vmatpush2.msra.mxu0 0.0
    %2280 = vmatprep.subr.mxu0 0.0
    %2281 = vmatpush2.msra.mxu0 0.0
    %2282 = vmatprep.subr.mxu0 0.0
    %2283 = vmatpush2.msra.mxu0 0.0
    %2284 = vmatprep.subr.mxu0 0.0
    %2285 = vmatpush2.msra.mxu0 0.0
    %2286 = vmatprep.mubr.f32.mxu0 0.0
    %2287 = vmatmul.mubr.f32.gmra.mxu0 %v2058
    %v2288 = vpop.f32.mrf.mxu0
    %v2289 = vadd.f32 %v269, %v2288
    %v2290 = vpop.f32.mrf.mxu0
    %2291 = vdwg.mxu0
    %v2293 = vrot.slane %v2289, 2
    %v2295 = vmul.f32 %v2209, %v2293
    %2297 = vrot.lane.b32.xlu0 %v2295, 64
    %v2298 = vpop.permute.xlu0 %2297
    %v2300 = vadd.f32 %v252, %v2298
    %v2301 = vtanh.pop %v2300
    %v2302 = vsub.f32 1.0, %v2221
    %2304 = vrot.lane.b32.xlu0 %v2301, 96
    %v2305 = vpop.permute.xlu0 %2304
    %v2307 = vmul.f32 %v2302, %v2305
    %v2308 = vrot.slane %v2053, 6
    %v2310 = vmul.f32 %v2221, %v2308
    %v2311 = vadd.f32 %v2307, %v2310
    %v2313 = vrot.slane %v2311, 6
    %2314 = vrot.lane.b32.xlu0 %v2313, 96
    %v2315 = vpop.permute.xlu0 %2314
    %v2316 = vsel %vm44, %v2315, 0
    %2318 = vmatprep.subr.mxu0 0.0
    %2319 = vmatpush1.msra.mxu0 0.0
    %2320 = vmatprep.subr.mxu0 0.0
    %2321 = vmatpush1.msra.mxu0 0.0
    %2322 = vmatprep.subr.mxu0 0.0
    %2323 = vmatpush1.msra.mxu0 0.0
    %2324 = vmatprep.subr.mxu0 0.0
    %2325 = vmatpush1.msra.mxu0 0.0
    %2326 = vmatprep.subr.mxu0 0.0
    %2327 = vmatpush1.msra.mxu0 0.0
    %2328 = vmatprep.subr.mxu0 0.0
    %2329 = vmatpush1.msra.mxu0 0.0
    %2330 = vmatprep.subr.mxu0 0.0
    %2331 = vmatpush1.msra.mxu0 0.0
    %2332 = vmatprep.subr.mxu0 0.0
    %2333 = vmatpush1.msra.mxu0 0.0
    %2334 = vmatprep.subr.mxu0 0.0
    %2335 = vmatpush1.msra.mxu0 0.0
    %2336 = vmatprep.subr.mxu0 0.0
    %2337 = vmatpush1.msra.mxu0 0.0
    %2338 = vmatprep.subr.mxu0 0.0
    %2339 = vmatpush1.msra.mxu0 0.0
    %2340 = vmatprep.subr.mxu0 0.0
    %2341 = vmatpush1.msra.mxu0 0.0
    %2342 = vmatprep.subr.mxu0 0.0
    %2343 = vmatpush1.msra.mxu0 %v155
    %2344 = vmatprep.subr.mxu0 0.0
    %2345 = vmatpush1.msra.mxu0 %v154
    %2346 = vmatprep.subr.mxu0 0.0
    %2347 = vmatpush1.msra.mxu0 %v153
    %2348 = vmatprep.subr.mxu0 0.0
    %2349 = vmatpush1.msra.mxu0 %v152
    %2350 = vmatprep.subr.mxu0 0.0
    %2351 = vmatpush2.msra.mxu0 0.0
    %2352 = vmatprep.subr.mxu0 0.0
    %2353 = vmatpush2.msra.mxu0 0.0
    %2354 = vmatprep.subr.mxu0 0.0
    %2355 = vmatpush2.msra.mxu0 0.0
    %2356 = vmatprep.subr.mxu0 0.0
    %2357 = vmatpush2.msra.mxu0 0.0
    %2358 = vmatprep.subr.mxu0 0.0
    %2359 = vmatpush2.msra.mxu0 0.0
    %2360 = vmatprep.subr.mxu0 0.0
    %2361 = vmatpush2.msra.mxu0 0.0
    %2362 = vmatprep.subr.mxu0 0.0
    %2363 = vmatpush2.msra.mxu0 0.0
    %2364 = vmatprep.subr.mxu0 0.0
    %2365 = vmatpush2.msra.mxu0 0.0
    %2366 = vmatprep.subr.mxu0 0.0
    %2367 = vmatpush2.msra.mxu0 0.0
    %2368 = vmatprep.subr.mxu0 0.0
    %2369 = vmatpush2.msra.mxu0 0.0
    %2370 = vmatprep.subr.mxu0 0.0
    %2371 = vmatpush2.msra.mxu0 0.0
    %2372 = vmatprep.subr.mxu0 0.0
    %2373 = vmatpush2.msra.mxu0 0.0
    %2374 = vmatprep.subr.mxu0 0.0
    %2375 = vmatpush2.msra.mxu0 0.0
    %2376 = vmatprep.subr.mxu0 0.0
    %2377 = vmatpush2.msra.mxu0 0.0
    %2378 = vmatprep.subr.mxu0 0.0
    %2379 = vmatpush2.msra.mxu0 0.0
    %2380 = vmatprep.subr.mxu0 0.0
    %2381 = vmatpush2.msra.mxu0 0.0
    %2382 = vmatprep.mubr.f32.mxu0 0.0
    %2383 = vmatmul.mubr.f32.gmra.mxu0 %v2316
    %v2384 = vpop.f32.mrf.mxu0
    %v2385 = vadd.f32 0.0, %v2384
    %v2386 = vpop.f32.mrf.mxu0
    %2387 = vdwg.mxu0
    %2388 = vmatprep.subr.mxu0 0.0
    %2389 = vmatpush1.msra.mxu0 0.0
    %2390 = vmatprep.subr.mxu0 0.0
    %2391 = vmatpush1.msra.mxu0 0.0
    %2392 = vmatprep.subr.mxu0 0.0
    %2393 = vmatpush1.msra.mxu0 0.0
    %2394 = vmatprep.subr.mxu0 0.0
    %2395 = vmatpush1.msra.mxu0 0.0
    %2396 = vmatprep.subr.mxu0 0.0
    %2397 = vmatpush1.msra.mxu0 0.0
    %2398 = vmatprep.subr.mxu0 0.0
    %2399 = vmatpush1.msra.mxu0 0.0
    %2400 = vmatprep.subr.mxu0 0.0
    %2401 = vmatpush1.msra.mxu0 0.0
    %2402 = vmatprep.subr.mxu0 0.0
    %2403 = vmatpush1.msra.mxu0 0.0
    %2404 = vmatprep.subr.mxu0 0.0
    %2405 = vmatpush1.msra.mxu0 0.0
    %2406 = vmatprep.subr.mxu0 0.0
    %2407 = vmatpush1.msra.mxu0 0.0
    %2408 = vmatprep.subr.mxu0 0.0
    %2409 = vmatpush1.msra.mxu0 0.0
    %2410 = vmatprep.subr.mxu0 0.0
    %2411 = vmatpush1.msra.mxu0 0.0
    %2412 = vmatprep.subr.mxu0 0.0
    %2413 = vmatpush1.msra.mxu0 %v159
    %2414 = vmatprep.subr.mxu0 0.0
    %2415 = vmatpush1.msra.mxu0 %v158
    %2416 = vmatprep.subr.mxu0 0.0
    %2417 = vmatpush1.msra.mxu0 %v157
    %2418 = vmatprep.subr.mxu0 0.0
    %2419 = vmatpush1.msra.mxu0 %v156
    %2420 = vmatprep.subr.mxu0 0.0
    %2421 = vmatpush2.msra.mxu0 0.0
    %2422 = vmatprep.subr.mxu0 0.0
    %2423 = vmatpush2.msra.mxu0 0.0
    %2424 = vmatprep.subr.mxu0 0.0
    %2425 = vmatpush2.msra.mxu0 0.0
    %2426 = vmatprep.subr.mxu0 0.0
    %2427 = vmatpush2.msra.mxu0 0.0
    %2428 = vmatprep.subr.mxu0 0.0
    %2429 = vmatpush2.msra.mxu0 0.0
    %2430 = vmatprep.subr.mxu0 0.0
    %2431 = vmatpush2.msra.mxu0 0.0
    %2432 = vmatprep.subr.mxu0 0.0
    %2433 = vmatpush2.msra.mxu0 0.0
    %2434 = vmatprep.subr.mxu0 0.0
    %2435 = vmatpush2.msra.mxu0 0.0
    %2436 = vmatprep.subr.mxu0 0.0
    %2437 = vmatpush2.msra.mxu0 0.0
    %2438 = vmatprep.subr.mxu0 0.0
    %2439 = vmatpush2.msra.mxu0 0.0
    %2440 = vmatprep.subr.mxu0 0.0
    %2441 = vmatpush2.msra.mxu0 0.0
    %2442 = vmatprep.subr.mxu0 0.0
    %2443 = vmatpush2.msra.mxu0 0.0
    %2444 = vmatprep.subr.mxu0 0.0
    %2445 = vmatpush2.msra.mxu0 0.0
    %2446 = vmatprep.subr.mxu0 0.0
    %2447 = vmatpush2.msra.mxu0 0.0
    %2448 = vmatprep.subr.mxu0 0.0
    %2449 = vmatpush2.msra.mxu0 0.0
    %2450 = vmatprep.subr.mxu0 0.0
    %2451 = vmatpush2.msra.mxu0 0.0
    %2452 = vmatprep.mubr.f32.mxu0 0.0
    %2453 = vmatmul.mubr.f32.gmra.mxu0 %v2316
    %v2454 = vpop.f32.mrf.mxu0
    %v2455 = vadd.f32 0.0, %v2454
    %v2456 = vpop.f32.mrf.mxu0
    %2457 = vdwg.mxu0
    %v2458 = vadd.f32 %v257, %v2385
    %v2459 = vsub.f32 0.0, %v2458
    %v2460 = vmul.f32 %v2459, 1.442695
    %v2461 = vpow.pop %v2460
    %v2462 = vadd.f32 %v2461, 1.0
    %v2463 = vrcp.pop %v2462
    %v2464 = vmul.f32 1.0, %v2463
    %2466 = vrot.lane.b32.xlu0 %v2455, 32
    %v2467 = vpop.permute.xlu0 %2466
    %v2469 = vadd.f32 %v257, %v2467
    %v2470 = vsub.f32 0.0, %v2469
    %v2471 = vmul.f32 %v2470, 1.442695
    %v2472 = vpow.pop %v2471
    %v2473 = vadd.f32 %v2472, 1.0
    %v2474 = vrcp.pop %v2473
    %v2475 = vmul.f32 1.0, %v2474
    %2476 = vmatprep.subr.mxu0 0.0
    %2477 = vmatpush1.msra.mxu0 0.0
    %2478 = vmatprep.subr.mxu0 0.0
    %2479 = vmatpush1.msra.mxu0 0.0
    %2480 = vmatprep.subr.mxu0 0.0
    %2481 = vmatpush1.msra.mxu0 0.0
    %2482 = vmatprep.subr.mxu0 0.0
    %2483 = vmatpush1.msra.mxu0 0.0
    %2484 = vmatprep.subr.mxu0 0.0
    %2485 = vmatpush1.msra.mxu0 0.0
    %2486 = vmatprep.subr.mxu0 0.0
    %2487 = vmatpush1.msra.mxu0 0.0
    %2488 = vmatprep.subr.mxu0 0.0
    %2489 = vmatpush1.msra.mxu0 0.0
    %2490 = vmatprep.subr.mxu0 0.0
    %2491 = vmatpush1.msra.mxu0 0.0
    %2492 = vmatprep.subr.mxu0 0.0
    %2493 = vmatpush1.msra.mxu0 0.0
    %2494 = vmatprep.subr.mxu0 0.0
    %2495 = vmatpush1.msra.mxu0 0.0
    %2496 = vmatprep.subr.mxu0 0.0
    %2497 = vmatpush1.msra.mxu0 0.0
    %2498 = vmatprep.subr.mxu0 0.0
    %2499 = vmatpush1.msra.mxu0 0.0
    %2500 = vmatprep.subr.mxu0 0.0
    %2501 = vmatpush1.msra.mxu0 %v163
    %2502 = vmatprep.subr.mxu0 0.0
    %2503 = vmatpush1.msra.mxu0 %v162
    %2504 = vmatprep.subr.mxu0 0.0
    %2505 = vmatpush1.msra.mxu0 %v161
    %2506 = vmatprep.subr.mxu0 0.0
    %2507 = vmatpush1.msra.mxu0 %v160
    %2508 = vmatprep.subr.mxu0 0.0
    %2509 = vmatpush2.msra.mxu0 0.0
    %2510 = vmatprep.subr.mxu0 0.0
    %2511 = vmatpush2.msra.mxu0 0.0
    %2512 = vmatprep.subr.mxu0 0.0
    %2513 = vmatpush2.msra.mxu0 0.0
    %2514 = vmatprep.subr.mxu0 0.0
    %2515 = vmatpush2.msra.mxu0 0.0
    %2516 = vmatprep.subr.mxu0 0.0
    %2517 = vmatpush2.msra.mxu0 0.0
    %2518 = vmatprep.subr.mxu0 0.0
    %2519 = vmatpush2.msra.mxu0 0.0
    %2520 = vmatprep.subr.mxu0 0.0
    %2521 = vmatpush2.msra.mxu0 0.0
    %2522 = vmatprep.subr.mxu0 0.0
    %2523 = vmatpush2.msra.mxu0 0.0
    %2524 = vmatprep.subr.mxu0 0.0
    %2525 = vmatpush2.msra.mxu0 0.0
    %2526 = vmatprep.subr.mxu0 0.0
    %2527 = vmatpush2.msra.mxu0 0.0
    %2528 = vmatprep.subr.mxu0 0.0
    %2529 = vmatpush2.msra.mxu0 0.0
    %2530 = vmatprep.subr.mxu0 0.0
    %2531 = vmatpush2.msra.mxu0 0.0
    %2532 = vmatprep.subr.mxu0 0.0
    %2533 = vmatpush2.msra.mxu0 0.0
    %2534 = vmatprep.subr.mxu0 0.0
    %2535 = vmatpush2.msra.mxu0 0.0
    %2536 = vmatprep.subr.mxu0 0.0
    %2537 = vmatpush2.msra.mxu0 0.0
    %2538 = vmatprep.subr.mxu0 0.0
    %2539 = vmatpush2.msra.mxu0 0.0
    %2540 = vmatprep.mubr.f32.mxu0 0.0
    %2541 = vmatmul.mubr.f32.gmra.mxu0 %v2316
    %v2542 = vpop.f32.mrf.mxu0
    %v2543 = vadd.f32 %v269, %v2542
    %v2544 = vpop.f32.mrf.mxu0
    %2545 = vdwg.mxu0
    %v2546 = vmul.f32 %v2464, %v2543
    %2548 = vrot.lane.b32.xlu0 %v2546, 64
    %v2549 = vpop.permute.xlu0 %2548
    %v2551 = vadd.f32 %v257, %v2549
    %v2552 = vtanh.pop %v2551
    %v2553 = vsub.f32 1.0, %v2475
    %2555 = vrot.lane.b32.xlu0 %v2552, 96
    %v2556 = vpop.permute.xlu0 %2555
    %v2558 = vmul.f32 %v2553, %v2556
    %v2560 = vmul.f32 %v2475, %v2313
    %v2561 = vadd.f32 %v2558, %v2560
    %2563 = vrot.lane.b32.xlu0 %v2561, 96
    %v2564 = vpop.permute.xlu0 %2563
    %v2565 = vsel %vm44, %v2564, 0
    %2567 = vmatprep.subr.mxu0 0.0
    %2568 = vmatpush1.msra.mxu0 0.0
    %2569 = vmatprep.subr.mxu0 0.0
    %2570 = vmatpush1.msra.mxu0 0.0
    %2571 = vmatprep.subr.mxu0 0.0
    %2572 = vmatpush1.msra.mxu0 0.0
    %2573 = vmatprep.subr.mxu0 0.0
    %2574 = vmatpush1.msra.mxu0 0.0
    %2575 = vmatprep.subr.mxu0 0.0
    %2576 = vmatpush1.msra.mxu0 0.0
    %2577 = vmatprep.subr.mxu0 0.0
    %2578 = vmatpush1.msra.mxu0 0.0
    %2579 = vmatprep.subr.mxu0 0.0
    %2580 = vmatpush1.msra.mxu0 0.0
    %2581 = vmatprep.subr.mxu0 0.0
    %2582 = vmatpush1.msra.mxu0 0.0
    %2583 = vmatprep.subr.mxu0 0.0
    %2584 = vmatpush1.msra.mxu0 0.0
    %2585 = vmatprep.subr.mxu0 0.0
    %2586 = vmatpush1.msra.mxu0 0.0
    %2587 = vmatprep.subr.mxu0 0.0
    %2588 = vmatpush1.msra.mxu0 0.0
    %2589 = vmatprep.subr.mxu0 0.0
    %2590 = vmatpush1.msra.mxu0 0.0
    %2591 = vmatprep.subr.mxu0 0.0
    %2592 = vmatpush1.msra.mxu0 %v155
    %2593 = vmatprep.subr.mxu0 0.0
    %2594 = vmatpush1.msra.mxu0 %v154
    %2595 = vmatprep.subr.mxu0 0.0
    %2596 = vmatpush1.msra.mxu0 %v153
    %2597 = vmatprep.subr.mxu0 0.0
    %2598 = vmatpush1.msra.mxu0 %v152
    %2599 = vmatprep.subr.mxu0 0.0
    %2600 = vmatpush2.msra.mxu0 0.0
    %2601 = vmatprep.subr.mxu0 0.0
    %2602 = vmatpush2.msra.mxu0 0.0
    %2603 = vmatprep.subr.mxu0 0.0
    %2604 = vmatpush2.msra.mxu0 0.0
    %2605 = vmatprep.subr.mxu0 0.0
    %2606 = vmatpush2.msra.mxu0 0.0
    %2607 = vmatprep.subr.mxu0 0.0
    %2608 = vmatpush2.msra.mxu0 0.0
    %2609 = vmatprep.subr.mxu0 0.0
    %2610 = vmatpush2.msra.mxu0 0.0
    %2611 = vmatprep.subr.mxu0 0.0
    %2612 = vmatpush2.msra.mxu0 0.0
    %2613 = vmatprep.subr.mxu0 0.0
    %2614 = vmatpush2.msra.mxu0 0.0
    %2615 = vmatprep.subr.mxu0 0.0
    %2616 = vmatpush2.msra.mxu0 0.0
    %2617 = vmatprep.subr.mxu0 0.0
    %2618 = vmatpush2.msra.mxu0 0.0
    %2619 = vmatprep.subr.mxu0 0.0
    %2620 = vmatpush2.msra.mxu0 0.0
    %2621 = vmatprep.subr.mxu0 0.0
    %2622 = vmatpush2.msra.mxu0 0.0
    %2623 = vmatprep.subr.mxu0 0.0
    %2624 = vmatpush2.msra.mxu0 0.0
    %2625 = vmatprep.subr.mxu0 0.0
    %2626 = vmatpush2.msra.mxu0 0.0
    %2627 = vmatprep.subr.mxu0 0.0
    %2628 = vmatpush2.msra.mxu0 0.0
    %2629 = vmatprep.subr.mxu0 0.0
    %2630 = vmatpush2.msra.mxu0 0.0
    %2631 = vmatprep.mubr.f32.mxu0 0.0
    %2632 = vmatmul.mubr.f32.gmra.mxu0 %v2565
    %v2633 = vpop.f32.mrf.mxu0
    %v2634 = vadd.f32 0.0, %v2633
    %v2635 = vpop.f32.mrf.mxu0
    %2636 = vdwg.mxu0
    %2637 = vmatprep.subr.mxu0 0.0
    %2638 = vmatpush1.msra.mxu0 0.0
    %2639 = vmatprep.subr.mxu0 0.0
    %2640 = vmatpush1.msra.mxu0 0.0
    %2641 = vmatprep.subr.mxu0 0.0
    %2642 = vmatpush1.msra.mxu0 0.0
    %2643 = vmatprep.subr.mxu0 0.0
    %2644 = vmatpush1.msra.mxu0 0.0
    %2645 = vmatprep.subr.mxu0 0.0
    %2646 = vmatpush1.msra.mxu0 0.0
    %2647 = vmatprep.subr.mxu0 0.0
    %2648 = vmatpush1.msra.mxu0 0.0
    %2649 = vmatprep.subr.mxu0 0.0
    %2650 = vmatpush1.msra.mxu0 0.0
    %2651 = vmatprep.subr.mxu0 0.0
    %2652 = vmatpush1.msra.mxu0 0.0
    %2653 = vmatprep.subr.mxu0 0.0
    %2654 = vmatpush1.msra.mxu0 0.0
    %2655 = vmatprep.subr.mxu0 0.0
    %2656 = vmatpush1.msra.mxu0 0.0
    %2657 = vmatprep.subr.mxu0 0.0
    %2658 = vmatpush1.msra.mxu0 0.0
    %2659 = vmatprep.subr.mxu0 0.0
    %2660 = vmatpush1.msra.mxu0 0.0
    %2661 = vmatprep.subr.mxu0 0.0
    %2662 = vmatpush1.msra.mxu0 %v159
    %2663 = vmatprep.subr.mxu0 0.0
    %2664 = vmatpush1.msra.mxu0 %v158
    %2665 = vmatprep.subr.mxu0 0.0
    %2666 = vmatpush1.msra.mxu0 %v157
    %2667 = vmatprep.subr.mxu0 0.0
    %2668 = vmatpush1.msra.mxu0 %v156
    %2669 = vmatprep.subr.mxu0 0.0
    %2670 = vmatpush2.msra.mxu0 0.0
    %2671 = vmatprep.subr.mxu0 0.0
    %2672 = vmatpush2.msra.mxu0 0.0
    %2673 = vmatprep.subr.mxu0 0.0
    %2674 = vmatpush2.msra.mxu0 0.0
    %2675 = vmatprep.subr.mxu0 0.0
    %2676 = vmatpush2.msra.mxu0 0.0
    %2677 = vmatprep.subr.mxu0 0.0
    %2678 = vmatpush2.msra.mxu0 0.0
    %2679 = vmatprep.subr.mxu0 0.0
    %2680 = vmatpush2.msra.mxu0 0.0
    %2681 = vmatprep.subr.mxu0 0.0
    %2682 = vmatpush2.msra.mxu0 0.0
    %2683 = vmatprep.subr.mxu0 0.0
    %2684 = vmatpush2.msra.mxu0 0.0
    %2685 = vmatprep.subr.mxu0 0.0
    %2686 = vmatpush2.msra.mxu0 0.0
    %2687 = vmatprep.subr.mxu0 0.0
    %2688 = vmatpush2.msra.mxu0 0.0
    %2689 = vmatprep.subr.mxu0 0.0
    %2690 = vmatpush2.msra.mxu0 0.0
    %2691 = vmatprep.subr.mxu0 0.0
    %2692 = vmatpush2.msra.mxu0 0.0
    %2693 = vmatprep.subr.mxu0 0.0
    %2694 = vmatpush2.msra.mxu0 0.0
    %2695 = vmatprep.subr.mxu0 0.0
    %2696 = vmatpush2.msra.mxu0 0.0
    %2697 = vmatprep.subr.mxu0 0.0
    %2698 = vmatpush2.msra.mxu0 0.0
    %2699 = vmatprep.subr.mxu0 0.0
    %2700 = vmatpush2.msra.mxu0 0.0
    %2701 = vmatprep.mubr.f32.mxu0 0.0
    %2702 = vmatmul.mubr.f32.gmra.mxu0 %v2565
    %v2703 = vpop.f32.mrf.mxu0
    %v2704 = vadd.f32 0.0, %v2703
    %v2705 = vpop.f32.mrf.mxu0
    %2706 = vdwg.mxu0
    %v2708 = vrot.slane %v2634, 6
    %v2710 = vadd.f32 %v257, %v2708
    %v2711 = vsub.f32 0.0, %v2710
    %v2712 = vmul.f32 %v2711, 1.442695
    %v2713 = vpow.pop %v2712
    %v2714 = vadd.f32 %v2713, 1.0
    %v2715 = vrcp.pop %v2714
    %v2716 = vmul.f32 1.0, %v2715
    %v2718 = vrot.slane %v2704, 6
    %2719 = vrot.lane.b32.xlu0 %v2718, 32
    %v2720 = vpop.permute.xlu0 %2719
    %v2722 = vadd.f32 %v257, %v2720
    %v2723 = vsub.f32 0.0, %v2722
    %v2724 = vmul.f32 %v2723, 1.442695
    %v2725 = vpow.pop %v2724
    %v2726 = vadd.f32 %v2725, 1.0
    %v2727 = vrcp.pop %v2726
    %v2728 = vmul.f32 1.0, %v2727
    %2729 = vmatprep.subr.mxu0 0.0
    %2730 = vmatpush1.msra.mxu0 0.0
    %2731 = vmatprep.subr.mxu0 0.0
    %2732 = vmatpush1.msra.mxu0 0.0
    %2733 = vmatprep.subr.mxu0 0.0
    %2734 = vmatpush1.msra.mxu0 0.0
    %2735 = vmatprep.subr.mxu0 0.0
    %2736 = vmatpush1.msra.mxu0 0.0
    %2737 = vmatprep.subr.mxu0 0.0
    %2738 = vmatpush1.msra.mxu0 0.0
    %2739 = vmatprep.subr.mxu0 0.0
    %2740 = vmatpush1.msra.mxu0 0.0
    %2741 = vmatprep.subr.mxu0 0.0
    %2742 = vmatpush1.msra.mxu0 0.0
    %2743 = vmatprep.subr.mxu0 0.0
    %2744 = vmatpush1.msra.mxu0 0.0
    %2745 = vmatprep.subr.mxu0 0.0
    %2746 = vmatpush1.msra.mxu0 0.0
    %2747 = vmatprep.subr.mxu0 0.0
    %2748 = vmatpush1.msra.mxu0 0.0
    %2749 = vmatprep.subr.mxu0 0.0
    %2750 = vmatpush1.msra.mxu0 0.0
    %2751 = vmatprep.subr.mxu0 0.0
    %2752 = vmatpush1.msra.mxu0 0.0
    %2753 = vmatprep.subr.mxu0 0.0
    %2754 = vmatpush1.msra.mxu0 %v163
    %2755 = vmatprep.subr.mxu0 0.0
    %2756 = vmatpush1.msra.mxu0 %v162
    %2757 = vmatprep.subr.mxu0 0.0
    %2758 = vmatpush1.msra.mxu0 %v161
    %2759 = vmatprep.subr.mxu0 0.0
    %2760 = vmatpush1.msra.mxu0 %v160
    %2761 = vmatprep.subr.mxu0 0.0
    %2762 = vmatpush2.msra.mxu0 0.0
    %2763 = vmatprep.subr.mxu0 0.0
    %2764 = vmatpush2.msra.mxu0 0.0
    %2765 = vmatprep.subr.mxu0 0.0
    %2766 = vmatpush2.msra.mxu0 0.0
    %2767 = vmatprep.subr.mxu0 0.0
    %2768 = vmatpush2.msra.mxu0 0.0
    %2769 = vmatprep.subr.mxu0 0.0
    %2770 = vmatpush2.msra.mxu0 0.0
    %2771 = vmatprep.subr.mxu0 0.0
    %2772 = vmatpush2.msra.mxu0 0.0
    %2773 = vmatprep.subr.mxu0 0.0
    %2774 = vmatpush2.msra.mxu0 0.0
    %2775 = vmatprep.subr.mxu0 0.0
    %2776 = vmatpush2.msra.mxu0 0.0
    %2777 = vmatprep.subr.mxu0 0.0
    %2778 = vmatpush2.msra.mxu0 0.0
    %2779 = vmatprep.subr.mxu0 0.0
    %2780 = vmatpush2.msra.mxu0 0.0
    %2781 = vmatprep.subr.mxu0 0.0
    %2782 = vmatpush2.msra.mxu0 0.0
    %2783 = vmatprep.subr.mxu0 0.0
    %2784 = vmatpush2.msra.mxu0 0.0
    %2785 = vmatprep.subr.mxu0 0.0
    %2786 = vmatpush2.msra.mxu0 0.0
    %2787 = vmatprep.subr.mxu0 0.0
    %2788 = vmatpush2.msra.mxu0 0.0
    %2789 = vmatprep.subr.mxu0 0.0
    %2790 = vmatpush2.msra.mxu0 0.0
    %2791 = vmatprep.subr.mxu0 0.0
    %2792 = vmatpush2.msra.mxu0 0.0
    %2793 = vmatprep.mubr.f32.mxu0 0.0
    %2794 = vmatmul.mubr.f32.gmra.mxu0 %v2565
    %v2795 = vpop.f32.mrf.mxu0
    %v2796 = vadd.f32 %v269, %v2795
    %v2797 = vpop.f32.mrf.mxu0
    %2798 = vdwg.mxu0
    %v2800 = vrot.slane %v2796, 6
    %v2802 = vmul.f32 %v2716, %v2800
    %2804 = vrot.lane.b32.xlu0 %v2802, 64
    %v2805 = vpop.permute.xlu0 %2804
    %v2807 = vadd.f32 %v257, %v2805
    %v2808 = vtanh.pop %v2807
    %v2809 = vsub.f32 1.0, %v2728
    %2811 = vrot.lane.b32.xlu0 %v2808, 96
    %v2812 = vpop.permute.xlu0 %2811
    %v2814 = vmul.f32 %v2809, %v2812
    %v2815 = vrot.slane %v2561, 6
    %v2817 = vmul.f32 %v2728, %v2815
    %v2818 = vadd.f32 %v2814, %v2817
    %v2820 = vrot.slane %v2818, 2
    %2821 = vrot.lane.b32.xlu0 %v2820, 96
    %v2822 = vpop.permute.xlu0 %2821
    %v2823 = vsel %vm44, %v2822, 0
    %2825 = vmatprep.subr.mxu0 0.0
    %2826 = vmatpush1.msra.mxu0 0.0
    %2827 = vmatprep.subr.mxu0 0.0
    %2828 = vmatpush1.msra.mxu0 0.0
    %2829 = vmatprep.subr.mxu0 0.0
    %2830 = vmatpush1.msra.mxu0 0.0
    %2831 = vmatprep.subr.mxu0 0.0
    %2832 = vmatpush1.msra.mxu0 0.0
    %2833 = vmatprep.subr.mxu0 0.0
    %2834 = vmatpush1.msra.mxu0 0.0
    %2835 = vmatprep.subr.mxu0 0.0
    %2836 = vmatpush1.msra.mxu0 0.0
    %2837 = vmatprep.subr.mxu0 0.0
    %2838 = vmatpush1.msra.mxu0 0.0
    %2839 = vmatprep.subr.mxu0 0.0
    %2840 = vmatpush1.msra.mxu0 0.0
    %2841 = vmatprep.subr.mxu0 0.0
    %2842 = vmatpush1.msra.mxu0 0.0
    %2843 = vmatprep.subr.mxu0 0.0
    %2844 = vmatpush1.msra.mxu0 0.0
    %2845 = vmatprep.subr.mxu0 0.0
    %2846 = vmatpush1.msra.mxu0 0.0
    %2847 = vmatprep.subr.mxu0 0.0
    %2848 = vmatpush1.msra.mxu0 0.0
    %2849 = vmatprep.subr.mxu0 0.0
    %2850 = vmatpush1.msra.mxu0 %v155
    %2851 = vmatprep.subr.mxu0 0.0
    %2852 = vmatpush1.msra.mxu0 %v154
    %2853 = vmatprep.subr.mxu0 0.0
    %2854 = vmatpush1.msra.mxu0 %v153
    %2855 = vmatprep.subr.mxu0 0.0
    %2856 = vmatpush1.msra.mxu0 %v152
    %2857 = vmatprep.subr.mxu0 0.0
    %2858 = vmatpush2.msra.mxu0 0.0
    %2859 = vmatprep.subr.mxu0 0.0
    %2860 = vmatpush2.msra.mxu0 0.0
    %2861 = vmatprep.subr.mxu0 0.0
    %2862 = vmatpush2.msra.mxu0 0.0
    %2863 = vmatprep.subr.mxu0 0.0
    %2864 = vmatpush2.msra.mxu0 0.0
    %2865 = vmatprep.subr.mxu0 0.0
    %2866 = vmatpush2.msra.mxu0 0.0
    %2867 = vmatprep.subr.mxu0 0.0
    %2868 = vmatpush2.msra.mxu0 0.0
    %2869 = vmatprep.subr.mxu0 0.0
    %2870 = vmatpush2.msra.mxu0 0.0
    %2871 = vmatprep.subr.mxu0 0.0
    %2872 = vmatpush2.msra.mxu0 0.0
    %2873 = vmatprep.subr.mxu0 0.0
    %2874 = vmatpush2.msra.mxu0 0.0
    %2875 = vmatprep.subr.mxu0 0.0
    %2876 = vmatpush2.msra.mxu0 0.0
    %2877 = vmatprep.subr.mxu0 0.0
    %2878 = vmatpush2.msra.mxu0 0.0
    %2879 = vmatprep.subr.mxu0 0.0
    %2880 = vmatpush2.msra.mxu0 0.0
    %2881 = vmatprep.subr.mxu0 0.0
    %2882 = vmatpush2.msra.mxu0 0.0
    %2883 = vmatprep.subr.mxu0 0.0
    %2884 = vmatpush2.msra.mxu0 0.0
    %2885 = vmatprep.subr.mxu0 0.0
    %2886 = vmatpush2.msra.mxu0 0.0
    %2887 = vmatprep.subr.mxu0 0.0
    %2888 = vmatpush2.msra.mxu0 0.0
    %2889 = vmatprep.mubr.f32.mxu0 0.0
    %2890 = vmatmul.mubr.f32.gmra.mxu0 %v2823
    %v2891 = vpop.f32.mrf.mxu0
    %v2892 = vadd.f32 0.0, %v2891
    %v2893 = vpop.f32.mrf.mxu0
    %2894 = vdwg.mxu0
    %2895 = vmatprep.subr.mxu0 0.0
    %2896 = vmatpush1.msra.mxu0 0.0
    %2897 = vmatprep.subr.mxu0 0.0
    %2898 = vmatpush1.msra.mxu0 0.0
    %2899 = vmatprep.subr.mxu0 0.0
    %2900 = vmatpush1.msra.mxu0 0.0
    %2901 = vmatprep.subr.mxu0 0.0
    %2902 = vmatpush1.msra.mxu0 0.0
    %2903 = vmatprep.subr.mxu0 0.0
    %2904 = vmatpush1.msra.mxu0 0.0
    %2905 = vmatprep.subr.mxu0 0.0
    %2906 = vmatpush1.msra.mxu0 0.0
    %2907 = vmatprep.subr.mxu0 0.0
    %2908 = vmatpush1.msra.mxu0 0.0
    %2909 = vmatprep.subr.mxu0 0.0
    %2910 = vmatpush1.msra.mxu0 0.0
    %2911 = vmatprep.subr.mxu0 0.0
    %2912 = vmatpush1.msra.mxu0 0.0
    %2913 = vmatprep.subr.mxu0 0.0
    %2914 = vmatpush1.msra.mxu0 0.0
    %2915 = vmatprep.subr.mxu0 0.0
    %2916 = vmatpush1.msra.mxu0 0.0
    %2917 = vmatprep.subr.mxu0 0.0
    %2918 = vmatpush1.msra.mxu0 0.0
    %2919 = vmatprep.subr.mxu0 0.0
    %2920 = vmatpush1.msra.mxu0 %v159
    %2921 = vmatprep.subr.mxu0 0.0
    %2922 = vmatpush1.msra.mxu0 %v158
    %2923 = vmatprep.subr.mxu0 0.0
    %2924 = vmatpush1.msra.mxu0 %v157
    %2925 = vmatprep.subr.mxu0 0.0
    %2926 = vmatpush1.msra.mxu0 %v156
    %2927 = vmatprep.subr.mxu0 0.0
    %2928 = vmatpush2.msra.mxu0 0.0
    %2929 = vmatprep.subr.mxu0 0.0
    %2930 = vmatpush2.msra.mxu0 0.0
    %2931 = vmatprep.subr.mxu0 0.0
    %2932 = vmatpush2.msra.mxu0 0.0
    %2933 = vmatprep.subr.mxu0 0.0
    %2934 = vmatpush2.msra.mxu0 0.0
    %2935 = vmatprep.subr.mxu0 0.0
    %2936 = vmatpush2.msra.mxu0 0.0
    %2937 = vmatprep.subr.mxu0 0.0
    %2938 = vmatpush2.msra.mxu0 0.0
    %2939 = vmatprep.subr.mxu0 0.0
    %2940 = vmatpush2.msra.mxu0 0.0
    %2941 = vmatprep.subr.mxu0 0.0
    %2942 = vmatpush2.msra.mxu0 0.0
    %2943 = vmatprep.subr.mxu0 0.0
    %2944 = vmatpush2.msra.mxu0 0.0
    %2945 = vmatprep.subr.mxu0 0.0
    %2946 = vmatpush2.msra.mxu0 0.0
    %2947 = vmatprep.subr.mxu0 0.0
    %2948 = vmatpush2.msra.mxu0 0.0
    %2949 = vmatprep.subr.mxu0 0.0
    %2950 = vmatpush2.msra.mxu0 0.0
    %2951 = vmatprep.subr.mxu0 0.0
    %2952 = vmatpush2.msra.mxu0 0.0
    %2953 = vmatprep.subr.mxu0 0.0
    %2954 = vmatpush2.msra.mxu0 0.0
    %2955 = vmatprep.subr.mxu0 0.0
    %2956 = vmatpush2.msra.mxu0 0.0
    %2957 = vmatprep.subr.mxu0 0.0
    %2958 = vmatpush2.msra.mxu0 0.0
    %2959 = vmatprep.mubr.f32.mxu0 0.0
    %2960 = vmatmul.mubr.f32.gmra.mxu0 %v2823
    %v2961 = vpop.f32.mrf.mxu0
    %v2962 = vadd.f32 0.0, %v2961
    %v2963 = vpop.f32.mrf.mxu0
    %2964 = vdwg.mxu0
    %v2966 = vrot.slane %v2892, 4
    %v2968 = vadd.f32 %v257, %v2966
    %v2969 = vsub.f32 0.0, %v2968
    %v2970 = vmul.f32 %v2969, 1.442695
    %v2971 = vpow.pop %v2970
    %v2972 = vadd.f32 %v2971, 1.0
    %v2973 = vrcp.pop %v2972
    %v2974 = vmul.f32 1.0, %v2973
    %v2976 = vrot.slane %v2962, 4
    %2977 = vrot.lane.b32.xlu0 %v2976, 32
    %v2978 = vpop.permute.xlu0 %2977
    %v2980 = vadd.f32 %v257, %v2978
    %v2981 = vsub.f32 0.0, %v2980
    %v2982 = vmul.f32 %v2981, 1.442695
    %v2983 = vpow.pop %v2982
    %v2984 = vadd.f32 %v2983, 1.0
    %v2985 = vrcp.pop %v2984
    %v2986 = vmul.f32 1.0, %v2985
    %2987 = vmatprep.subr.mxu0 0.0
    %2988 = vmatpush1.msra.mxu0 0.0
    %2989 = vmatprep.subr.mxu0 0.0
    %2990 = vmatpush1.msra.mxu0 0.0
    %2991 = vmatprep.subr.mxu0 0.0
    %2992 = vmatpush1.msra.mxu0 0.0
    %2993 = vmatprep.subr.mxu0 0.0
    %2994 = vmatpush1.msra.mxu0 0.0
    %2995 = vmatprep.subr.mxu0 0.0
    %2996 = vmatpush1.msra.mxu0 0.0
    %2997 = vmatprep.subr.mxu0 0.0
    %2998 = vmatpush1.msra.mxu0 0.0
    %2999 = vmatprep.subr.mxu0 0.0
    %3000 = vmatpush1.msra.mxu0 0.0
    %3001 = vmatprep.subr.mxu0 0.0
    %3002 = vmatpush1.msra.mxu0 0.0
    %3003 = vmatprep.subr.mxu0 0.0
    %3004 = vmatpush1.msra.mxu0 0.0
    %3005 = vmatprep.subr.mxu0 0.0
    %3006 = vmatpush1.msra.mxu0 0.0
    %3007 = vmatprep.subr.mxu0 0.0
    %3008 = vmatpush1.msra.mxu0 0.0
    %3009 = vmatprep.subr.mxu0 0.0
    %3010 = vmatpush1.msra.mxu0 0.0
    %3011 = vmatprep.subr.mxu0 0.0
    %3012 = vmatpush1.msra.mxu0 %v163
    %3013 = vmatprep.subr.mxu0 0.0
    %3014 = vmatpush1.msra.mxu0 %v162
    %3015 = vmatprep.subr.mxu0 0.0
    %3016 = vmatpush1.msra.mxu0 %v161
    %3017 = vmatprep.subr.mxu0 0.0
    %3018 = vmatpush1.msra.mxu0 %v160
    %3019 = vmatprep.subr.mxu0 0.0
    %3020 = vmatpush2.msra.mxu0 0.0
    %3021 = vmatprep.subr.mxu0 0.0
    %3022 = vmatpush2.msra.mxu0 0.0
    %3023 = vmatprep.subr.mxu0 0.0
    %3024 = vmatpush2.msra.mxu0 0.0
    %3025 = vmatprep.subr.mxu0 0.0
    %3026 = vmatpush2.msra.mxu0 0.0
    %3027 = vmatprep.subr.mxu0 0.0
    %3028 = vmatpush2.msra.mxu0 0.0
    %3029 = vmatprep.subr.mxu0 0.0
    %3030 = vmatpush2.msra.mxu0 0.0
    %3031 = vmatprep.subr.mxu0 0.0
    %3032 = vmatpush2.msra.mxu0 0.0
    %3033 = vmatprep.subr.mxu0 0.0
    %3034 = vmatpush2.msra.mxu0 0.0
    %3035 = vmatprep.subr.mxu0 0.0
    %3036 = vmatpush2.msra.mxu0 0.0
    %3037 = vmatprep.subr.mxu0 0.0
    %3038 = vmatpush2.msra.mxu0 0.0
    %3039 = vmatprep.subr.mxu0 0.0
    %3040 = vmatpush2.msra.mxu0 0.0
    %3041 = vmatprep.subr.mxu0 0.0
    %3042 = vmatpush2.msra.mxu0 0.0
    %3043 = vmatprep.subr.mxu0 0.0
    %3044 = vmatpush2.msra.mxu0 0.0
    %3045 = vmatprep.subr.mxu0 0.0
    %3046 = vmatpush2.msra.mxu0 0.0
    %3047 = vmatprep.subr.mxu0 0.0
    %3048 = vmatpush2.msra.mxu0 0.0
    %3049 = vmatprep.subr.mxu0 0.0
    %3050 = vmatpush2.msra.mxu0 0.0
    %3051 = vmatprep.mubr.f32.mxu0 0.0
    %3052 = vmatmul.mubr.f32.gmra.mxu0 %v2823
    %v3053 = vpop.f32.mrf.mxu0
    %v3054 = vadd.f32 %v269, %v3053
    %v3055 = vpop.f32.mrf.mxu0
    %3056 = vdwg.mxu0
    %v3058 = vrot.slane %v3054, 4
    %v3060 = vmul.f32 %v2974, %v3058
    %3062 = vrot.lane.b32.xlu0 %v3060, 64
    %v3063 = vpop.permute.xlu0 %3062
    %v3065 = vadd.f32 %v257, %v3063
    %v3066 = vtanh.pop %v3065
    %v3067 = vsub.f32 1.0, %v2986
    %3069 = vrot.lane.b32.xlu0 %v3066, 96
    %v3070 = vpop.permute.xlu0 %3069
    %v3072 = vmul.f32 %v3067, %v3070
    %v3073 = vrot.slane %v2818, 6
    %v3075 = vmul.f32 %v2986, %v3073
    %v3076 = vadd.f32 %v3072, %v3075
    %v3078 = vrot.slane %v3076, 4
    %3079 = vrot.lane.b32.xlu0 %v3078, 96
    %v3080 = vpop.permute.xlu0 %3079
    %v3081 = vsel %vm44, %v3080, 0
    %3083 = vmatprep.subr.mxu0 0.0
    %3084 = vmatpush1.msra.mxu0 0.0
    %3085 = vmatprep.subr.mxu0 0.0
    %3086 = vmatpush1.msra.mxu0 0.0
    %3087 = vmatprep.subr.mxu0 0.0
    %3088 = vmatpush1.msra.mxu0 0.0
    %3089 = vmatprep.subr.mxu0 0.0
    %3090 = vmatpush1.msra.mxu0 0.0
    %3091 = vmatprep.subr.mxu0 0.0
    %3092 = vmatpush1.msra.mxu0 0.0
    %3093 = vmatprep.subr.mxu0 0.0
    %3094 = vmatpush1.msra.mxu0 0.0
    %3095 = vmatprep.subr.mxu0 0.0
    %3096 = vmatpush1.msra.mxu0 0.0
    %3097 = vmatprep.subr.mxu0 0.0
    %3098 = vmatpush1.msra.mxu0 0.0
    %3099 = vmatprep.subr.mxu0 0.0
    %3100 = vmatpush1.msra.mxu0 0.0
    %3101 = vmatprep.subr.mxu0 0.0
    %3102 = vmatpush1.msra.mxu0 0.0
    %3103 = vmatprep.subr.mxu0 0.0
    %3104 = vmatpush1.msra.mxu0 0.0
    %3105 = vmatprep.subr.mxu0 0.0
    %3106 = vmatpush1.msra.mxu0 0.0
    %3107 = vmatprep.subr.mxu0 0.0
    %3108 = vmatpush1.msra.mxu0 %v155
    %3109 = vmatprep.subr.mxu0 0.0
    %3110 = vmatpush1.msra.mxu0 %v154
    %3111 = vmatprep.subr.mxu0 0.0
    %3112 = vmatpush1.msra.mxu0 %v153
    %3113 = vmatprep.subr.mxu0 0.0
    %3114 = vmatpush1.msra.mxu0 %v152
    %3115 = vmatprep.subr.mxu0 0.0
    %3116 = vmatpush2.msra.mxu0 0.0
    %3117 = vmatprep.subr.mxu0 0.0
    %3118 = vmatpush2.msra.mxu0 0.0
    %3119 = vmatprep.subr.mxu0 0.0
    %3120 = vmatpush2.msra.mxu0 0.0
    %3121 = vmatprep.subr.mxu0 0.0
    %3122 = vmatpush2.msra.mxu0 0.0
    %3123 = vmatprep.subr.mxu0 0.0
    %3124 = vmatpush2.msra.mxu0 0.0
    %3125 = vmatprep.subr.mxu0 0.0
    %3126 = vmatpush2.msra.mxu0 0.0
    %3127 = vmatprep.subr.mxu0 0.0
    %3128 = vmatpush2.msra.mxu0 0.0
    %3129 = vmatprep.subr.mxu0 0.0
    %3130 = vmatpush2.msra.mxu0 0.0
    %3131 = vmatprep.subr.mxu0 0.0
    %3132 = vmatpush2.msra.mxu0 0.0
    %3133 = vmatprep.subr.mxu0 0.0
    %3134 = vmatpush2.msra.mxu0 0.0
    %3135 = vmatprep.subr.mxu0 0.0
    %3136 = vmatpush2.msra.mxu0 0.0
    %3137 = vmatprep.subr.mxu0 0.0
    %3138 = vmatpush2.msra.mxu0 0.0
    %3139 = vmatprep.subr.mxu0 0.0
    %3140 = vmatpush2.msra.mxu0 0.0
    %3141 = vmatprep.subr.mxu0 0.0
    %3142 = vmatpush2.msra.mxu0 0.0
    %3143 = vmatprep.subr.mxu0 0.0
    %3144 = vmatpush2.msra.mxu0 0.0
    %3145 = vmatprep.subr.mxu0 0.0
    %3146 = vmatpush2.msra.mxu0 0.0
    %3147 = vmatprep.mubr.f32.mxu0 0.0
    %3148 = vmatmul.mubr.f32.gmra.mxu0 %v3081
    %v3149 = vpop.f32.mrf.mxu0
    %v3150 = vadd.f32 0.0, %v3149
    %v3151 = vpop.f32.mrf.mxu0
    %3152 = vdwg.mxu0
    %3153 = vmatprep.subr.mxu0 0.0
    %3154 = vmatpush1.msra.mxu0 0.0
    %3155 = vmatprep.subr.mxu0 0.0
    %3156 = vmatpush1.msra.mxu0 0.0
    %3157 = vmatprep.subr.mxu0 0.0
    %3158 = vmatpush1.msra.mxu0 0.0
    %3159 = vmatprep.subr.mxu0 0.0
    %3160 = vmatpush1.msra.mxu0 0.0
    %3161 = vmatprep.subr.mxu0 0.0
    %3162 = vmatpush1.msra.mxu0 0.0
    %3163 = vmatprep.subr.mxu0 0.0
    %3164 = vmatpush1.msra.mxu0 0.0
    %3165 = vmatprep.subr.mxu0 0.0
    %3166 = vmatpush1.msra.mxu0 0.0
    %3167 = vmatprep.subr.mxu0 0.0
    %3168 = vmatpush1.msra.mxu0 0.0
    %3169 = vmatprep.subr.mxu0 0.0
    %3170 = vmatpush1.msra.mxu0 0.0
    %3171 = vmatprep.subr.mxu0 0.0
    %3172 = vmatpush1.msra.mxu0 0.0
    %3173 = vmatprep.subr.mxu0 0.0
    %3174 = vmatpush1.msra.mxu0 0.0
    %3175 = vmatprep.subr.mxu0 0.0
    %3176 = vmatpush1.msra.mxu0 0.0
    %3177 = vmatprep.subr.mxu0 0.0
    %3178 = vmatpush1.msra.mxu0 %v159
    %3179 = vmatprep.subr.mxu0 0.0
    %3180 = vmatpush1.msra.mxu0 %v158
    %3181 = vmatprep.subr.mxu0 0.0
    %3182 = vmatpush1.msra.mxu0 %v157
    %3183 = vmatprep.subr.mxu0 0.0
    %3184 = vmatpush1.msra.mxu0 %v156
    %3185 = vmatprep.subr.mxu0 0.0
    %3186 = vmatpush2.msra.mxu0 0.0
    %3187 = vmatprep.subr.mxu0 0.0
    %3188 = vmatpush2.msra.mxu0 0.0
    %3189 = vmatprep.subr.mxu0 0.0
    %3190 = vmatpush2.msra.mxu0 0.0
    %3191 = vmatprep.subr.mxu0 0.0
    %3192 = vmatpush2.msra.mxu0 0.0
    %3193 = vmatprep.subr.mxu0 0.0
    %3194 = vmatpush2.msra.mxu0 0.0
    %3195 = vmatprep.subr.mxu0 0.0
    %3196 = vmatpush2.msra.mxu0 0.0
    %3197 = vmatprep.subr.mxu0 0.0
    %3198 = vmatpush2.msra.mxu0 0.0
    %3199 = vmatprep.subr.mxu0 0.0
    %3200 = vmatpush2.msra.mxu0 0.0
    %3201 = vmatprep.subr.mxu0 0.0
    %3202 = vmatpush2.msra.mxu0 0.0
    %3203 = vmatprep.subr.mxu0 0.0
    %3204 = vmatpush2.msra.mxu0 0.0
    %3205 = vmatprep.subr.mxu0 0.0
    %3206 = vmatpush2.msra.mxu0 0.0
    %3207 = vmatprep.subr.mxu0 0.0
    %3208 = vmatpush2.msra.mxu0 0.0
    %3209 = vmatprep.subr.mxu0 0.0
    %3210 = vmatpush2.msra.mxu0 0.0
    %3211 = vmatprep.subr.mxu0 0.0
    %3212 = vmatpush2.msra.mxu0 0.0
    %3213 = vmatprep.subr.mxu0 0.0
    %3214 = vmatpush2.msra.mxu0 0.0
    %3215 = vmatprep.subr.mxu0 0.0
    %3216 = vmatpush2.msra.mxu0 0.0
    %3217 = vmatprep.mubr.f32.mxu0 0.0
    %3218 = vmatmul.mubr.f32.gmra.mxu0 %v3081
    %v3219 = vpop.f32.mrf.mxu0
    %v3220 = vadd.f32 0.0, %v3219
    %v3221 = vpop.f32.mrf.mxu0
    %3222 = vdwg.mxu0
    %v3224 = vrot.slane %v3150, 2
    %v3226 = vadd.f32 %v257, %v3224
    %v3227 = vsub.f32 0.0, %v3226
    %v3228 = vmul.f32 %v3227, 1.442695
    %v3229 = vpow.pop %v3228
    %v3230 = vadd.f32 %v3229, 1.0
    %v3231 = vrcp.pop %v3230
    %v3232 = vmul.f32 1.0, %v3231
    %v3234 = vrot.slane %v3220, 2
    %3235 = vrot.lane.b32.xlu0 %v3234, 32
    %v3236 = vpop.permute.xlu0 %3235
    %v3238 = vadd.f32 %v257, %v3236
    %v3239 = vsub.f32 0.0, %v3238
    %v3240 = vmul.f32 %v3239, 1.442695
    %v3241 = vpow.pop %v3240
    %v3242 = vadd.f32 %v3241, 1.0
    %v3243 = vrcp.pop %v3242
    %v3244 = vmul.f32 1.0, %v3243
    %3245 = vmatprep.subr.mxu0 0.0
    %3246 = vmatpush1.msra.mxu0 0.0
    %3247 = vmatprep.subr.mxu0 0.0
    %3248 = vmatpush1.msra.mxu0 0.0
    %3249 = vmatprep.subr.mxu0 0.0
    %3250 = vmatpush1.msra.mxu0 0.0
    %3251 = vmatprep.subr.mxu0 0.0
    %3252 = vmatpush1.msra.mxu0 0.0
    %3253 = vmatprep.subr.mxu0 0.0
    %3254 = vmatpush1.msra.mxu0 0.0
    %3255 = vmatprep.subr.mxu0 0.0
    %3256 = vmatpush1.msra.mxu0 0.0
    %3257 = vmatprep.subr.mxu0 0.0
    %3258 = vmatpush1.msra.mxu0 0.0
    %3259 = vmatprep.subr.mxu0 0.0
    %3260 = vmatpush1.msra.mxu0 0.0
    %3261 = vmatprep.subr.mxu0 0.0
    %3262 = vmatpush1.msra.mxu0 0.0
    %3263 = vmatprep.subr.mxu0 0.0
    %3264 = vmatpush1.msra.mxu0 0.0
    %3265 = vmatprep.subr.mxu0 0.0
    %3266 = vmatpush1.msra.mxu0 0.0
    %3267 = vmatprep.subr.mxu0 0.0
    %3268 = vmatpush1.msra.mxu0 0.0
    %3269 = vmatprep.subr.mxu0 0.0
    %3270 = vmatpush1.msra.mxu0 %v163
    %3271 = vmatprep.subr.mxu0 0.0
    %3272 = vmatpush1.msra.mxu0 %v162
    %3273 = vmatprep.subr.mxu0 0.0
    %3274 = vmatpush1.msra.mxu0 %v161
    %3275 = vmatprep.subr.mxu0 0.0
    %3276 = vmatpush1.msra.mxu0 %v160
    %3277 = vmatprep.subr.mxu0 0.0
    %3278 = vmatpush2.msra.mxu0 0.0
    %3279 = vmatprep.subr.mxu0 0.0
    %3280 = vmatpush2.msra.mxu0 0.0
    %3281 = vmatprep.subr.mxu0 0.0
    %3282 = vmatpush2.msra.mxu0 0.0
    %3283 = vmatprep.subr.mxu0 0.0
    %3284 = vmatpush2.msra.mxu0 0.0
    %3285 = vmatprep.subr.mxu0 0.0
    %3286 = vmatpush2.msra.mxu0 0.0
    %3287 = vmatprep.subr.mxu0 0.0
    %3288 = vmatpush2.msra.mxu0 0.0
    %3289 = vmatprep.subr.mxu0 0.0
    %3290 = vmatpush2.msra.mxu0 0.0
    %3291 = vmatprep.subr.mxu0 0.0
    %3292 = vmatpush2.msra.mxu0 0.0
    %3293 = vmatprep.subr.mxu0 0.0
    %3294 = vmatpush2.msra.mxu0 0.0
    %3295 = vmatprep.subr.mxu0 0.0
    %3296 = vmatpush2.msra.mxu0 0.0
    %3297 = vmatprep.subr.mxu0 0.0
    %3298 = vmatpush2.msra.mxu0 0.0
    %3299 = vmatprep.subr.mxu0 0.0
    %3300 = vmatpush2.msra.mxu0 0.0
    %3301 = vmatprep.subr.mxu0 0.0
    %3302 = vmatpush2.msra.mxu0 0.0
    %3303 = vmatprep.subr.mxu0 0.0
    %3304 = vmatpush2.msra.mxu0 0.0
    %3305 = vmatprep.subr.mxu0 0.0
    %3306 = vmatpush2.msra.mxu0 0.0
    %3307 = vmatprep.subr.mxu0 0.0
    %3308 = vmatpush2.msra.mxu0 0.0
    %3309 = vmatprep.mubr.f32.mxu0 0.0
    %3310 = vmatmul.mubr.f32.gmra.mxu0 %v3081
    %v3311 = vpop.f32.mrf.mxu0
    %v3312 = vadd.f32 %v269, %v3311
    %v3313 = vpop.f32.mrf.mxu0
    %3314 = vdwg.mxu0
    %v3316 = vrot.slane %v3312, 2
    %v3318 = vmul.f32 %v3232, %v3316
    %3320 = vrot.lane.b32.xlu0 %v3318, 64
    %v3321 = vpop.permute.xlu0 %3320
    %v3323 = vadd.f32 %v257, %v3321
    %v3324 = vtanh.pop %v3323
    %v3325 = vsub.f32 1.0, %v3244
    %3327 = vrot.lane.b32.xlu0 %v3324, 96
    %v3328 = vpop.permute.xlu0 %3327
    %v3330 = vmul.f32 %v3325, %v3328
    %v3331 = vrot.slane %v3076, 6
    %v3333 = vmul.f32 %v3244, %v3331
    %v3334 = vadd.f32 %v3330, %v3333
    %v3336 = vrot.slane %v3334, 6
    %3337 = vrot.lane.b32.xlu0 %v3336, 96
    %v3338 = vpop.permute.xlu0 %3337
    %v3339 = vsel %vm44, %v3338, 0
    %3341 = vmatprep.subr.mxu0 0.0
    %3342 = vmatpush1.msra.mxu0 0.0
    %3343 = vmatprep.subr.mxu0 0.0
    %3344 = vmatpush1.msra.mxu0 0.0
    %3345 = vmatprep.subr.mxu0 0.0
    %3346 = vmatpush1.msra.mxu0 0.0
    %3347 = vmatprep.subr.mxu0 0.0
    %3348 = vmatpush1.msra.mxu0 0.0
    %3349 = vmatprep.subr.mxu0 0.0
    %3350 = vmatpush1.msra.mxu0 0.0
    %3351 = vmatprep.subr.mxu0 0.0
    %3352 = vmatpush1.msra.mxu0 0.0
    %3353 = vmatprep.subr.mxu0 0.0
    %3354 = vmatpush1.msra.mxu0 0.0
    %3355 = vmatprep.subr.mxu0 0.0
    %3356 = vmatpush1.msra.mxu0 0.0
    %3357 = vmatprep.subr.mxu0 0.0
    %3358 = vmatpush1.msra.mxu0 0.0
    %3359 = vmatprep.subr.mxu0 0.0
    %3360 = vmatpush1.msra.mxu0 0.0
    %3361 = vmatprep.subr.mxu0 0.0
    %3362 = vmatpush1.msra.mxu0 0.0
    %3363 = vmatprep.subr.mxu0 0.0
    %3364 = vmatpush1.msra.mxu0 0.0
    %3365 = vmatprep.subr.mxu0 0.0
    %3366 = vmatpush1.msra.mxu0 %v155
    %3367 = vmatprep.subr.mxu0 0.0
    %3368 = vmatpush1.msra.mxu0 %v154
    %3369 = vmatprep.subr.mxu0 0.0
    %3370 = vmatpush1.msra.mxu0 %v153
    %3371 = vmatprep.subr.mxu0 0.0
    %3372 = vmatpush1.msra.mxu0 %v152
    %3373 = vmatprep.subr.mxu0 0.0
    %3374 = vmatpush2.msra.mxu0 0.0
    %3375 = vmatprep.subr.mxu0 0.0
    %3376 = vmatpush2.msra.mxu0 0.0
    %3377 = vmatprep.subr.mxu0 0.0
    %3378 = vmatpush2.msra.mxu0 0.0
    %3379 = vmatprep.subr.mxu0 0.0
    %3380 = vmatpush2.msra.mxu0 0.0
    %3381 = vmatprep.subr.mxu0 0.0
    %3382 = vmatpush2.msra.mxu0 0.0
    %3383 = vmatprep.subr.mxu0 0.0
    %3384 = vmatpush2.msra.mxu0 0.0
    %3385 = vmatprep.subr.mxu0 0.0
    %3386 = vmatpush2.msra.mxu0 0.0
    %3387 = vmatprep.subr.mxu0 0.0
    %3388 = vmatpush2.msra.mxu0 0.0
    %3389 = vmatprep.subr.mxu0 0.0
    %3390 = vmatpush2.msra.mxu0 0.0
    %3391 = vmatprep.subr.mxu0 0.0
    %3392 = vmatpush2.msra.mxu0 0.0
    %3393 = vmatprep.subr.mxu0 0.0
    %3394 = vmatpush2.msra.mxu0 0.0
    %3395 = vmatprep.subr.mxu0 0.0
    %3396 = vmatpush2.msra.mxu0 0.0
    %3397 = vmatprep.subr.mxu0 0.0
    %3398 = vmatpush2.msra.mxu0 0.0
    %3399 = vmatprep.subr.mxu0 0.0
    %3400 = vmatpush2.msra.mxu0 0.0
    %3401 = vmatprep.subr.mxu0 0.0
    %3402 = vmatpush2.msra.mxu0 0.0
    %3403 = vmatprep.subr.mxu0 0.0
    %3404 = vmatpush2.msra.mxu0 0.0
    %3405 = vmatprep.mubr.f32.mxu0 0.0
    %3406 = vmatmul.mubr.f32.gmra.mxu0 %v3339
    %v3407 = vpop.f32.mrf.mxu0
    %v3408 = vadd.f32 0.0, %v3407
    %v3409 = vpop.f32.mrf.mxu0
    %3410 = vdwg.mxu0
    %3411 = vmatprep.subr.mxu0 0.0
    %3412 = vmatpush1.msra.mxu0 0.0
    %3413 = vmatprep.subr.mxu0 0.0
    %3414 = vmatpush1.msra.mxu0 0.0
    %3415 = vmatprep.subr.mxu0 0.0
    %3416 = vmatpush1.msra.mxu0 0.0
    %3417 = vmatprep.subr.mxu0 0.0
    %3418 = vmatpush1.msra.mxu0 0.0
    %3419 = vmatprep.subr.mxu0 0.0
    %3420 = vmatpush1.msra.mxu0 0.0
    %3421 = vmatprep.subr.mxu0 0.0
    %3422 = vmatpush1.msra.mxu0 0.0
    %3423 = vmatprep.subr.mxu0 0.0
    %3424 = vmatpush1.msra.mxu0 0.0
    %3425 = vmatprep.subr.mxu0 0.0
    %3426 = vmatpush1.msra.mxu0 0.0
    %3427 = vmatprep.subr.mxu0 0.0
    %3428 = vmatpush1.msra.mxu0 0.0
    %3429 = vmatprep.subr.mxu0 0.0
    %3430 = vmatpush1.msra.mxu0 0.0
    %3431 = vmatprep.subr.mxu0 0.0
    %3432 = vmatpush1.msra.mxu0 0.0
    %3433 = vmatprep.subr.mxu0 0.0
    %3434 = vmatpush1.msra.mxu0 0.0
    %3435 = vmatprep.subr.mxu0 0.0
    %3436 = vmatpush1.msra.mxu0 %v159
    %3437 = vmatprep.subr.mxu0 0.0
    %3438 = vmatpush1.msra.mxu0 %v158
    %3439 = vmatprep.subr.mxu0 0.0
    %3440 = vmatpush1.msra.mxu0 %v157
    %3441 = vmatprep.subr.mxu0 0.0
    %3442 = vmatpush1.msra.mxu0 %v156
    %3443 = vmatprep.subr.mxu0 0.0
    %3444 = vmatpush2.msra.mxu0 0.0
    %3445 = vmatprep.subr.mxu0 0.0
    %3446 = vmatpush2.msra.mxu0 0.0
    %3447 = vmatprep.subr.mxu0 0.0
    %3448 = vmatpush2.msra.mxu0 0.0
    %3449 = vmatprep.subr.mxu0 0.0
    %3450 = vmatpush2.msra.mxu0 0.0
    %3451 = vmatprep.subr.mxu0 0.0
    %3452 = vmatpush2.msra.mxu0 0.0
    %3453 = vmatprep.subr.mxu0 0.0
    %3454 = vmatpush2.msra.mxu0 0.0
    %3455 = vmatprep.subr.mxu0 0.0
    %3456 = vmatpush2.msra.mxu0 0.0
    %3457 = vmatprep.subr.mxu0 0.0
    %3458 = vmatpush2.msra.mxu0 0.0
    %3459 = vmatprep.subr.mxu0 0.0
    %3460 = vmatpush2.msra.mxu0 0.0
    %3461 = vmatprep.subr.mxu0 0.0
    %3462 = vmatpush2.msra.mxu0 0.0
    %3463 = vmatprep.subr.mxu0 0.0
    %3464 = vmatpush2.msra.mxu0 0.0
    %3465 = vmatprep.subr.mxu0 0.0
    %3466 = vmatpush2.msra.mxu0 0.0
    %3467 = vmatprep.subr.mxu0 0.0
    %3468 = vmatpush2.msra.mxu0 0.0
    %3469 = vmatprep.subr.mxu0 0.0
    %3470 = vmatpush2.msra.mxu0 0.0
    %3471 = vmatprep.subr.mxu0 0.0
    %3472 = vmatpush2.msra.mxu0 0.0
    %3473 = vmatprep.subr.mxu0 0.0
    %3474 = vmatpush2.msra.mxu0 0.0
    %3475 = vmatprep.mubr.f32.mxu0 0.0
    %3476 = vmatmul.mubr.f32.gmra.mxu0 %v3339
    %v3477 = vpop.f32.mrf.mxu0
    %v3478 = vadd.f32 0.0, %v3477
    %v3479 = vpop.f32.mrf.mxu0
    %3480 = vdwg.mxu0
    %v3481 = vadd.f32 %v262, %v3408
    %v3482 = vsub.f32 0.0, %v3481
    %v3483 = vmul.f32 %v3482, 1.442695
    %v3484 = vpow.pop %v3483
    %v3485 = vadd.f32 %v3484, 1.0
    %v3486 = vrcp.pop %v3485
    %v3487 = vmul.f32 1.0, %v3486
    %3489 = vrot.lane.b32.xlu0 %v3478, 32
    %v3490 = vpop.permute.xlu0 %3489
    %v3492 = vadd.f32 %v262, %v3490
    %v3493 = vsub.f32 0.0, %v3492
    %v3494 = vmul.f32 %v3493, 1.442695
    %v3495 = vpow.pop %v3494
    %v3496 = vadd.f32 %v3495, 1.0
    %v3497 = vrcp.pop %v3496
    %v3498 = vmul.f32 1.0, %v3497
    %3499 = vmatprep.subr.mxu0 0.0
    %3500 = vmatpush1.msra.mxu0 0.0
    %3501 = vmatprep.subr.mxu0 0.0
    %3502 = vmatpush1.msra.mxu0 0.0
    %3503 = vmatprep.subr.mxu0 0.0
    %3504 = vmatpush1.msra.mxu0 0.0
    %3505 = vmatprep.subr.mxu0 0.0
    %3506 = vmatpush1.msra.mxu0 0.0
    %3507 = vmatprep.subr.mxu0 0.0
    %3508 = vmatpush1.msra.mxu0 0.0
    %3509 = vmatprep.subr.mxu0 0.0
    %3510 = vmatpush1.msra.mxu0 0.0
    %3511 = vmatprep.subr.mxu0 0.0
    %3512 = vmatpush1.msra.mxu0 0.0
    %3513 = vmatprep.subr.mxu0 0.0
    %3514 = vmatpush1.msra.mxu0 0.0
    %3515 = vmatprep.subr.mxu0 0.0
    %3516 = vmatpush1.msra.mxu0 0.0
    %3517 = vmatprep.subr.mxu0 0.0
    %3518 = vmatpush1.msra.mxu0 0.0
    %3519 = vmatprep.subr.mxu0 0.0
    %3520 = vmatpush1.msra.mxu0 0.0
    %3521 = vmatprep.subr.mxu0 0.0
    %3522 = vmatpush1.msra.mxu0 0.0
    %3523 = vmatprep.subr.mxu0 0.0
    %3524 = vmatpush1.msra.mxu0 %v163
    %3525 = vmatprep.subr.mxu0 0.0
    %3526 = vmatpush1.msra.mxu0 %v162
    %3527 = vmatprep.subr.mxu0 0.0
    %3528 = vmatpush1.msra.mxu0 %v161
    %3529 = vmatprep.subr.mxu0 0.0
    %3530 = vmatpush1.msra.mxu0 %v160
    %3531 = vmatprep.subr.mxu0 0.0
    %3532 = vmatpush2.msra.mxu0 0.0
    %3533 = vmatprep.subr.mxu0 0.0
    %3534 = vmatpush2.msra.mxu0 0.0
    %3535 = vmatprep.subr.mxu0 0.0
    %3536 = vmatpush2.msra.mxu0 0.0
    %3537 = vmatprep.subr.mxu0 0.0
    %3538 = vmatpush2.msra.mxu0 0.0
    %3539 = vmatprep.subr.mxu0 0.0
    %3540 = vmatpush2.msra.mxu0 0.0
    %3541 = vmatprep.subr.mxu0 0.0
    %3542 = vmatpush2.msra.mxu0 0.0
    %3543 = vmatprep.subr.mxu0 0.0
    %3544 = vmatpush2.msra.mxu0 0.0
    %3545 = vmatprep.subr.mxu0 0.0
    %3546 = vmatpush2.msra.mxu0 0.0
    %3547 = vmatprep.subr.mxu0 0.0
    %3548 = vmatpush2.msra.mxu0 0.0
    %3549 = vmatprep.subr.mxu0 0.0
    %3550 = vmatpush2.msra.mxu0 0.0
    %3551 = vmatprep.subr.mxu0 0.0
    %3552 = vmatpush2.msra.mxu0 0.0
    %3553 = vmatprep.subr.mxu0 0.0
    %3554 = vmatpush2.msra.mxu0 0.0
    %3555 = vmatprep.subr.mxu0 0.0
    %3556 = vmatpush2.msra.mxu0 0.0
    %3557 = vmatprep.subr.mxu0 0.0
    %3558 = vmatpush2.msra.mxu0 0.0
    %3559 = vmatprep.subr.mxu0 0.0
    %3560 = vmatpush2.msra.mxu0 0.0
    %3561 = vmatprep.subr.mxu0 0.0
    %3562 = vmatpush2.msra.mxu0 0.0
    %3563 = vmatprep.mubr.f32.mxu0 0.0
    %3564 = vmatmul.mubr.f32.gmra.mxu0 %v3339
    %v3565 = vpop.f32.mrf.mxu0
    %v3566 = vadd.f32 %v269, %v3565
    %v3567 = vpop.f32.mrf.mxu0
    %3568 = vdwg.mxu0
    %v3569 = vmul.f32 %v3487, %v3566
    %3571 = vrot.lane.b32.xlu0 %v3569, 64
    %v3572 = vpop.permute.xlu0 %3571
    %v3574 = vadd.f32 %v262, %v3572
    %v3575 = vtanh.pop %v3574
    %v3576 = vsub.f32 1.0, %v3498
    %3578 = vrot.lane.b32.xlu0 %v3575, 96
    %v3579 = vpop.permute.xlu0 %3578
    %v3581 = vmul.f32 %v3576, %v3579
    %v3583 = vmul.f32 %v3498, %v3336
    %v3584 = vadd.f32 %v3581, %v3583
    %v3585 = vld [vmem:[%s2 + $0x118] sm:$0xff]
    %v3586 = vld [vmem:[%s2 + $0x120] sm:$0xff]
    %v3587 = vld [vmem:[%s2 + $0x128] sm:$0xff]
    %v3588 = vld [vmem:[%s2 + $0x130] sm:$0xff]
    %v3589 = vld [vmem:[%s2 + $0x138] sm:$0xff]
    %v3590 = vld [vmem:[%s2 + $0x140] sm:$0xff]
    %v3591 = vld [vmem:[%s2 + $0x148] sm:$0xff]
    %v3592 = vld [vmem:[%s2 + $0x150] sm:$0xff]
    %v3593 = vld [vmem:[%s2 + $0x158] sm:$0x1]
    %v3594 = vlaneseq
    %v3595 = vshrl.u32 %v3594, 7
    %v3596 = vsub.s32 0, %v3595
    %v3597 = vrot.slane %v3593, %v3596
    %3599 = vrot.lane.b32.xlu0 %v3584, 96
    %v3600 = vpop.permute.xlu0 %3599
    %v3601 = vsel %vm44, %v3600, 0
    %3603 = vmatprep.subr.mxu0 0.0
    %3604 = vmatpush1.msra.mxu0 0.0
    %3605 = vmatprep.subr.mxu0 0.0
    %3606 = vmatpush1.msra.mxu0 0.0
    %3607 = vmatprep.subr.mxu0 0.0
    %3608 = vmatpush1.msra.mxu0 0.0
    %3609 = vmatprep.subr.mxu0 0.0
    %3610 = vmatpush1.msra.mxu0 0.0
    %3611 = vmatprep.subr.mxu0 0.0
    %3612 = vmatpush1.msra.mxu0 0.0
    %3613 = vmatprep.subr.mxu0 0.0
    %3614 = vmatpush1.msra.mxu0 0.0
    %3615 = vmatprep.subr.mxu0 0.0
    %3616 = vmatpush1.msra.mxu0 0.0
    %3617 = vmatprep.subr.mxu0 0.0
    %3618 = vmatpush1.msra.mxu0 0.0
    %3619 = vmatprep.subr.mxu0 0.0
    %3620 = vmatpush1.msra.mxu0 0.0
    %3621 = vmatprep.subr.mxu0 0.0
    %3622 = vmatpush1.msra.mxu0 0.0
    %3623 = vmatprep.subr.mxu0 0.0
    %3624 = vmatpush1.msra.mxu0 0.0
    %3625 = vmatprep.subr.mxu0 0.0
    %3626 = vmatpush1.msra.mxu0 0.0
    %3627 = vmatprep.subr.mxu0 0.0
    %3628 = vmatpush1.msra.mxu0 %v3588
    %3629 = vmatprep.subr.mxu0 0.0
    %3630 = vmatpush1.msra.mxu0 %v3587
    %3631 = vmatprep.subr.mxu0 0.0
    %3632 = vmatpush1.msra.mxu0 %v3586
    %3633 = vmatprep.subr.mxu0 0.0
    %3634 = vmatpush1.msra.mxu0 %v3585
    %3635 = vmatprep.subr.mxu0 0.0
    %3636 = vmatpush2.msra.mxu0 0.0
    %3637 = vmatprep.subr.mxu0 0.0
    %3638 = vmatpush2.msra.mxu0 0.0
    %3639 = vmatprep.subr.mxu0 0.0
    %3640 = vmatpush2.msra.mxu0 0.0
    %3641 = vmatprep.subr.mxu0 0.0
    %3642 = vmatpush2.msra.mxu0 0.0
    %3643 = vmatprep.subr.mxu0 0.0
    %3644 = vmatpush2.msra.mxu0 0.0
    %3645 = vmatprep.subr.mxu0 0.0
    %3646 = vmatpush2.msra.mxu0 0.0
    %3647 = vmatprep.subr.mxu0 0.0
    %3648 = vmatpush2.msra.mxu0 0.0
    %3649 = vmatprep.subr.mxu0 0.0
    %3650 = vmatpush2.msra.mxu0 0.0
    %3651 = vmatprep.subr.mxu0 0.0
    %3652 = vmatpush2.msra.mxu0 0.0
    %3653 = vmatprep.subr.mxu0 0.0
    %3654 = vmatpush2.msra.mxu0 0.0
    %3655 = vmatprep.subr.mxu0 0.0
    %3656 = vmatpush2.msra.mxu0 0.0
    %3657 = vmatprep.subr.mxu0 0.0
    %3658 = vmatpush2.msra.mxu0 0.0
    %3659 = vmatprep.subr.mxu0 0.0
    %3660 = vmatpush2.msra.mxu0 0.0
    %3661 = vmatprep.subr.mxu0 0.0
    %3662 = vmatpush2.msra.mxu0 0.0
    %3663 = vmatprep.subr.mxu0 0.0
    %3664 = vmatpush2.msra.mxu0 0.0
    %3665 = vmatprep.subr.mxu0 0.0
    %3666 = vmatpush2.msra.mxu0 0.0
    %3667 = vmatprep.mubr.f32.mxu0 0.0
    %3668 = vmatmul.mubr.f32.gmra.mxu0 %v3601
    %v3669 = vpop.f32.mrf.mxu0
    %v3670 = vadd.f32 %v3597, %v3669
    %v3671 = vpop.f32.mrf.mxu0
    %3672 = vdwg.mxu0
    %v3673 = vld [vmem:[%s2 + $0xb8] sm:$0xff]
    %v3674 = vld [vmem:[%s2 + $0xc0] sm:$0xff]
    %v3675 = vld [vmem:[%s2 + $0xc8] sm:$0xff]
    %v3676 = vld [vmem:[%s2 + $0xd0] sm:$0xff]
    %v3677 = vld [vmem:[%s2 + $0xd8] sm:$0x1]
    %v3678 = vld [vmem:[%s2 + $0xe0] sm:$0x1]
    %v3679 = vld [vmem:[%s2 + $0xe8] sm:$0xff]
    %v3680 = vld [vmem:[%s2 + $0xf0] sm:$0xff]
    %v3681 = vld [vmem:[%s2 + $0xf8] sm:$0xff]
    %v3682 = vld [vmem:[%s2 + $0x100] sm:$0xff]
    %v3683 = vld [vmem:[%s2 + $0x108] sm:$0xff]
    %v3684 = vld [vmem:[%s2 + $0x110] sm:$0xff]
    %v3685 = vlaneseq
    %v3686 = vshrl.u32 %v3685, 7
    %v3687 = vsub.s32 0, %v3686
    %v3688 = vrot.slane %v3677, %v3687
    %vm3689 = vcmask 1045504
    %v3690 = vrot.slane %v143, 2
    %v3691 = vrot.slane %v144, 2
    %v3692 = vsel %vm3689, %v3690, %v3691
    %v3693 = vrot.slane %v145, 2
    %v3694 = vsel %vm3689, %v3691, %v3693
    %v3695 = vsel %vm44, %v3692, 0
    %v3697 = vsel %vm44, %v3694, 0
    %3699 = vmatprep.subr.mxu0 0.0
    %3700 = vmatpush1.msra.mxu0 0.0
    %3701 = vmatprep.subr.mxu0 0.0
    %3702 = vmatpush1.msra.mxu0 0.0
    %3703 = vmatprep.subr.mxu0 0.0
    %3704 = vmatpush1.msra.mxu0 0.0
    %3705 = vmatprep.subr.mxu0 0.0
    %3706 = vmatpush1.msra.mxu0 0.0
    %3707 = vmatprep.subr.mxu0 0.0
    %3708 = vmatpush1.msra.mxu0 0.0
    %3709 = vmatprep.subr.mxu0 0.0
    %3710 = vmatpush1.msra.mxu0 0.0
    %3711 = vmatprep.subr.mxu0 0.0
    %3712 = vmatpush1.msra.mxu0 0.0
    %3713 = vmatprep.subr.mxu0 0.0
    %3714 = vmatpush1.msra.mxu0 0.0
    %3715 = vmatprep.subr.mxu0 0.0
    %3716 = vmatpush1.msra.mxu0 0.0
    %3717 = vmatprep.subr.mxu0 0.0
    %3718 = vmatpush1.msra.mxu0 0.0
    %3719 = vmatprep.subr.mxu0 0.0
    %3720 = vmatpush1.msra.mxu0 0.0
    %3721 = vmatprep.subr.mxu0 0.0
    %3722 = vmatpush1.msra.mxu0 0.0
    %3723 = vmatprep.subr.mxu0 0.0
    %3724 = vmatpush1.msra.mxu0 %v3676
    %3725 = vmatprep.subr.mxu0 0.0
    %3726 = vmatpush1.msra.mxu0 %v3675
    %3727 = vmatprep.subr.mxu0 0.0
    %3728 = vmatpush1.msra.mxu0 %v3674
    %3729 = vmatprep.subr.mxu0 0.0
    %3730 = vmatpush1.msra.mxu0 %v3673
    %3731 = vmatprep.subr.mxu0 0.0
    %3732 = vmatpush2.msra.mxu0 0.0
    %3733 = vmatprep.subr.mxu0 0.0
    %3734 = vmatpush2.msra.mxu0 0.0
    %3735 = vmatprep.subr.mxu0 0.0
    %3736 = vmatpush2.msra.mxu0 0.0
    %3737 = vmatprep.subr.mxu0 0.0
    %3738 = vmatpush2.msra.mxu0 0.0
    %3739 = vmatprep.subr.mxu0 0.0
    %3740 = vmatpush2.msra.mxu0 0.0
    %3741 = vmatprep.subr.mxu0 0.0
    %3742 = vmatpush2.msra.mxu0 0.0
    %3743 = vmatprep.subr.mxu0 0.0
    %3744 = vmatpush2.msra.mxu0 0.0
    %3745 = vmatprep.subr.mxu0 0.0
    %3746 = vmatpush2.msra.mxu0 0.0
    %3747 = vmatprep.subr.mxu0 0.0
    %3748 = vmatpush2.msra.mxu0 0.0
    %3749 = vmatprep.subr.mxu0 0.0
    %3750 = vmatpush2.msra.mxu0 0.0
    %3751 = vmatprep.subr.mxu0 0.0
    %3752 = vmatpush2.msra.mxu0 0.0
    %3753 = vmatprep.subr.mxu0 0.0
    %3754 = vmatpush2.msra.mxu0 0.0
    %3755 = vmatprep.subr.mxu0 0.0
    %3756 = vmatpush2.msra.mxu0 0.0
    %3757 = vmatprep.subr.mxu0 0.0
    %3758 = vmatpush2.msra.mxu0 0.0
    %3759 = vmatprep.subr.mxu0 0.0
    %3760 = vmatpush2.msra.mxu0 0.0
    %3761 = vmatprep.subr.mxu0 0.0
    %3762 = vmatpush2.msra.mxu0 0.0
    %3763 = vmatprep.mubr.f32.mxu0 0.0
    %3764 = vmatmul.mubr.f32.gmra.mxu0 %v3695
    %v3765 = vpop.f32.mrf.mxu0
    %v3766 = vadd.f32 %v3688, %v3765
    %v3767 = vpop.f32.mrf.mxu0
    %3768 = vmatprep.mubr.f32.mxu0 0.0
    %3769 = vmatmul.mubr.f32.gmra.mxu0 %v3697
    %v3770 = vpop.f32.mrf.mxu0
    %v3771 = vadd.f32 %v3688, %v3770
    %v3772 = vpop.f32.mrf.mxu0
    %3773 = vdwg.mxu0
    %v3774 = vlaneseq
    %v3775 = vshrl.u32 %v3774, 7
    %v3776 = vsub.s32 0, %v3775
    %v3777 = vrot.slane %v3678, %v3776
    %v3778 = vadd.f32 %v3777, 0.0
    %vm3779 = vcmask 130048
    %v3780 = vsel %vm3779, 0.0, 0
    %3782 = vmatprep.subr.mxu0 0.0
    %3783 = vmatpush1.msra.mxu0 0.0
    %3784 = vmatprep.subr.mxu0 0.0
    %3785 = vmatpush1.msra.mxu0 0.0
    %3786 = vmatprep.subr.mxu0 0.0
    %3787 = vmatpush1.msra.mxu0 0.0
    %3788 = vmatprep.subr.mxu0 0.0
    %3789 = vmatpush1.msra.mxu0 0.0
    %3790 = vmatprep.subr.mxu0 0.0
    %3791 = vmatpush1.msra.mxu0 0.0
    %3792 = vmatprep.subr.mxu0 0.0
    %3793 = vmatpush1.msra.mxu0 0.0
    %3794 = vmatprep.subr.mxu0 0.0
    %3795 = vmatpush1.msra.mxu0 0.0
    %3796 = vmatprep.subr.mxu0 0.0
    %3797 = vmatpush1.msra.mxu0 0.0
    %3798 = vmatprep.subr.mxu0 0.0
    %3799 = vmatpush1.msra.mxu0 0.0
    %3800 = vmatprep.subr.mxu0 0.0
    %3801 = vmatpush1.msra.mxu0 0.0
    %3802 = vmatprep.subr.mxu0 0.0
    %3803 = vmatpush1.msra.mxu0 0.0
    %3804 = vmatprep.subr.mxu0 0.0
    %3805 = vmatpush1.msra.mxu0 0.0
    %3806 = vmatprep.subr.mxu0 0.0
    %3807 = vmatpush1.msra.mxu0 0.0
    %3808 = vmatprep.subr.mxu0 0.0
    %3809 = vmatpush1.msra.mxu0 0.0
    %3810 = vmatprep.subr.mxu0 0.0
    %3811 = vmatpush1.msra.mxu0 %v3680
    %3812 = vmatprep.subr.mxu0 0.0
    %3813 = vmatpush1.msra.mxu0 %v3679
    %3814 = vmatprep.subr.mxu0 0.0
    %3815 = vmatpush2.msra.mxu0 0.0
    %3816 = vmatprep.subr.mxu0 0.0
    %3817 = vmatpush2.msra.mxu0 0.0
    %3818 = vmatprep.subr.mxu0 0.0
    %3819 = vmatpush2.msra.mxu0 0.0
    %3820 = vmatprep.subr.mxu0 0.0
    %3821 = vmatpush2.msra.mxu0 0.0
    %3822 = vmatprep.subr.mxu0 0.0
    %3823 = vmatpush2.msra.mxu0 0.0
    %3824 = vmatprep.subr.mxu0 0.0
    %3825 = vmatpush2.msra.mxu0 0.0
    %3826 = vmatprep.subr.mxu0 0.0
    %3827 = vmatpush2.msra.mxu0 0.0
    %3828 = vmatprep.subr.mxu0 0.0
    %3829 = vmatpush2.msra.mxu0 0.0
    %3830 = vmatprep.subr.mxu0 0.0
    %3831 = vmatpush2.msra.mxu0 0.0
    %3832 = vmatprep.subr.mxu0 0.0
    %3833 = vmatpush2.msra.mxu0 0.0
    %3834 = vmatprep.subr.mxu0 0.0
    %3835 = vmatpush2.msra.mxu0 0.0
    %3836 = vmatprep.subr.mxu0 0.0
    %3837 = vmatpush2.msra.mxu0 0.0
    %3838 = vmatprep.subr.mxu0 0.0
    %3839 = vmatpush2.msra.mxu0 0.0
    %3840 = vmatprep.subr.mxu0 0.0
    %3841 = vmatpush2.msra.mxu0 0.0
    %3842 = vmatprep.subr.mxu0 0.0
    %3843 = vmatpush2.msra.mxu0 0.0
    %3844 = vmatprep.subr.mxu0 0.0
    %3845 = vmatpush2.msra.mxu0 0.0
    %3846 = vmatprep.mubr.f32.mxu0 0.0
    %3847 = vmatmul.mubr.f32.gmra.mxu0 %v3780
    %v3848 = vpop.f32.mrf.mxu0
    %v3849 = vadd.f32 0.0, %v3848
    %v3850 = vpop.f32.mrf.mxu0
    %3851 = vdwg.mxu0
    %3852 = vmatprep.subr.mxu0 0.0
    %3853 = vmatpush1.msra.mxu0 0.0
    %3854 = vmatprep.subr.mxu0 0.0
    %3855 = vmatpush1.msra.mxu0 0.0
    %3856 = vmatprep.subr.mxu0 0.0
    %3857 = vmatpush1.msra.mxu0 0.0
    %3858 = vmatprep.subr.mxu0 0.0
    %3859 = vmatpush1.msra.mxu0 0.0
    %3860 = vmatprep.subr.mxu0 0.0
    %3861 = vmatpush1.msra.mxu0 0.0
    %3862 = vmatprep.subr.mxu0 0.0
    %3863 = vmatpush1.msra.mxu0 0.0
    %3864 = vmatprep.subr.mxu0 0.0
    %3865 = vmatpush1.msra.mxu0 0.0
    %3866 = vmatprep.subr.mxu0 0.0
    %3867 = vmatpush1.msra.mxu0 0.0
    %3868 = vmatprep.subr.mxu0 0.0
    %3869 = vmatpush1.msra.mxu0 0.0
    %3870 = vmatprep.subr.mxu0 0.0
    %3871 = vmatpush1.msra.mxu0 0.0
    %3872 = vmatprep.subr.mxu0 0.0
    %3873 = vmatpush1.msra.mxu0 0.0
    %3874 = vmatprep.subr.mxu0 0.0
    %3875 = vmatpush1.msra.mxu0 0.0
    %3876 = vmatprep.subr.mxu0 0.0
    %3877 = vmatpush1.msra.mxu0 0.0
    %3878 = vmatprep.subr.mxu0 0.0
    %3879 = vmatpush1.msra.mxu0 0.0
    %3880 = vmatprep.subr.mxu0 0.0
    %3881 = vmatpush1.msra.mxu0 %v3682
    %3882 = vmatprep.subr.mxu0 0.0
    %3883 = vmatpush1.msra.mxu0 %v3681
    %3884 = vmatprep.subr.mxu0 0.0
    %3885 = vmatpush2.msra.mxu0 0.0
    %3886 = vmatprep.subr.mxu0 0.0
    %3887 = vmatpush2.msra.mxu0 0.0
    %3888 = vmatprep.subr.mxu0 0.0
    %3889 = vmatpush2.msra.mxu0 0.0
    %3890 = vmatprep.subr.mxu0 0.0
    %3891 = vmatpush2.msra.mxu0 0.0
    %3892 = vmatprep.subr.mxu0 0.0
    %3893 = vmatpush2.msra.mxu0 0.0
    %3894 = vmatprep.subr.mxu0 0.0
    %3895 = vmatpush2.msra.mxu0 0.0
    %3896 = vmatprep.subr.mxu0 0.0
    %3897 = vmatpush2.msra.mxu0 0.0
    %3898 = vmatprep.subr.mxu0 0.0
    %3899 = vmatpush2.msra.mxu0 0.0
    %3900 = vmatprep.subr.mxu0 0.0
    %3901 = vmatpush2.msra.mxu0 0.0
    %3902 = vmatprep.subr.mxu0 0.0
    %3903 = vmatpush2.msra.mxu0 0.0
    %3904 = vmatprep.subr.mxu0 0.0
    %3905 = vmatpush2.msra.mxu0 0.0
    %3906 = vmatprep.subr.mxu0 0.0
    %3907 = vmatpush2.msra.mxu0 0.0
    %3908 = vmatprep.subr.mxu0 0.0
    %3909 = vmatpush2.msra.mxu0 0.0
    %3910 = vmatprep.subr.mxu0 0.0
    %3911 = vmatpush2.msra.mxu0 0.0
    %3912 = vmatprep.subr.mxu0 0.0
    %3913 = vmatpush2.msra.mxu0 0.0
    %3914 = vmatprep.subr.mxu0 0.0
    %3915 = vmatpush2.msra.mxu0 0.0
    %3916 = vmatprep.mubr.f32.mxu0 0.0
    %3917 = vmatmul.mubr.f32.gmra.mxu0 %v3780
    %v3918 = vpop.f32.mrf.mxu0
    %v3919 = vadd.f32 0.0, %v3918
    %v3920 = vpop.f32.mrf.mxu0
    %3921 = vdwg.mxu0
    %v3922 = vadd.f32 %v3766, %v3849
    %v3923 = vsub.f32 0.0, %v3922
    %v3924 = vmul.f32 %v3923, 1.442695
    %v3925 = vpow.pop %v3924
    %v3926 = vadd.f32 %v3925, 1.0
    %v3927 = vrcp.pop %v3926
    %v3928 = vmul.f32 1.0, %v3927
    %3930 = vrot.lane.b32.xlu0 %v3919, 16
    %v3931 = vpop.permute.xlu0 %3930
    %v3933 = vadd.f32 %v3766, %v3931
    %v3934 = vsub.f32 0.0, %v3933
    %v3935 = vmul.f32 %v3934, 1.442695
    %v3936 = vpow.pop %v3935
    %v3937 = vadd.f32 %v3936, 1.0
    %v3938 = vrcp.pop %v3937
    %v3939 = vmul.f32 1.0, %v3938
    %3940 = vmatprep.subr.mxu0 0.0
    %3941 = vmatpush1.msra.mxu0 0.0
    %3942 = vmatprep.subr.mxu0 0.0
    %3943 = vmatpush1.msra.mxu0 0.0
    %3944 = vmatprep.subr.mxu0 0.0
    %3945 = vmatpush1.msra.mxu0 0.0
    %3946 = vmatprep.subr.mxu0 0.0
    %3947 = vmatpush1.msra.mxu0 0.0
    %3948 = vmatprep.subr.mxu0 0.0
    %3949 = vmatpush1.msra.mxu0 0.0
    %3950 = vmatprep.subr.mxu0 0.0
    %3951 = vmatpush1.msra.mxu0 0.0
    %3952 = vmatprep.subr.mxu0 0.0
    %3953 = vmatpush1.msra.mxu0 0.0
    %3954 = vmatprep.subr.mxu0 0.0
    %3955 = vmatpush1.msra.mxu0 0.0
    %3956 = vmatprep.subr.mxu0 0.0
    %3957 = vmatpush1.msra.mxu0 0.0
    %3958 = vmatprep.subr.mxu0 0.0
    %3959 = vmatpush1.msra.mxu0 0.0
    %3960 = vmatprep.subr.mxu0 0.0
    %3961 = vmatpush1.msra.mxu0 0.0
    %3962 = vmatprep.subr.mxu0 0.0
    %3963 = vmatpush1.msra.mxu0 0.0
    %3964 = vmatprep.subr.mxu0 0.0
    %3965 = vmatpush1.msra.mxu0 0.0
    %3966 = vmatprep.subr.mxu0 0.0
    %3967 = vmatpush1.msra.mxu0 0.0
    %3968 = vmatprep.subr.mxu0 0.0
    %3969 = vmatpush1.msra.mxu0 %v3684
    %3970 = vmatprep.subr.mxu0 0.0
    %3971 = vmatpush1.msra.mxu0 %v3683
    %3972 = vmatprep.subr.mxu0 0.0
    %3973 = vmatpush2.msra.mxu0 0.0
    %3974 = vmatprep.subr.mxu0 0.0
    %3975 = vmatpush2.msra.mxu0 0.0
    %3976 = vmatprep.subr.mxu0 0.0
    %3977 = vmatpush2.msra.mxu0 0.0
    %3978 = vmatprep.subr.mxu0 0.0
    %3979 = vmatpush2.msra.mxu0 0.0
    %3980 = vmatprep.subr.mxu0 0.0
    %3981 = vmatpush2.msra.mxu0 0.0
    %3982 = vmatprep.subr.mxu0 0.0
    %3983 = vmatpush2.msra.mxu0 0.0
    %3984 = vmatprep.subr.mxu0 0.0
    %3985 = vmatpush2.msra.mxu0 0.0
    %3986 = vmatprep.subr.mxu0 0.0
    %3987 = vmatpush2.msra.mxu0 0.0
    %3988 = vmatprep.subr.mxu0 0.0
    %3989 = vmatpush2.msra.mxu0 0.0
    %3990 = vmatprep.subr.mxu0 0.0
    %3991 = vmatpush2.msra.mxu0 0.0
    %3992 = vmatprep.subr.mxu0 0.0
    %3993 = vmatpush2.msra.mxu0 0.0
    %3994 = vmatprep.subr.mxu0 0.0
    %3995 = vmatpush2.msra.mxu0 0.0
    %3996 = vmatprep.subr.mxu0 0.0
    %3997 = vmatpush2.msra.mxu0 0.0
    %3998 = vmatprep.subr.mxu0 0.0
    %3999 = vmatpush2.msra.mxu0 0.0
    %4000 = vmatprep.subr.mxu0 0.0
    %4001 = vmatpush2.msra.mxu0 0.0
    %4002 = vmatprep.subr.mxu0 0.0
    %4003 = vmatpush2.msra.mxu0 0.0
    %4004 = vmatprep.mubr.f32.mxu0 0.0
    %4005 = vmatmul.mubr.f32.gmra.mxu0 %v3780
    %v4006 = vpop.f32.mrf.mxu0
    %v4007 = vadd.f32 %v3778, %v4006
    %v4008 = vpop.f32.mrf.mxu0
    %4009 = vdwg.mxu0
    %v4010 = vmul.f32 %v3928, %v4007
    %4012 = vrot.lane.b32.xlu0 %v4010, 32
    %v4013 = vpop.permute.xlu0 %4012
    %v4015 = vadd.f32 %v3766, %v4013
    %v4016 = vtanh.pop %v4015
    %v4017 = vsub.f32 1.0, %v3939
    %4019 = vrot.lane.b32.xlu0 %v4016, 112
    %v4020 = vpop.permute.xlu0 %4019
    %v4022 = vmul.f32 %v4017, %v4020
    %v4023 = vmul.f32 %v3939, 0.0
    %v4024 = vadd.f32 %v4022, %v4023
    %4026 = vrot.lane.b32.xlu0 %v4024, 112
    %v4027 = vpop.permute.xlu0 %4026
    %v4028 = vsel %vm3779, %v4027, 0
    %4030 = vmatprep.subr.mxu0 0.0
    %4031 = vmatpush1.msra.mxu0 0.0
    %4032 = vmatprep.subr.mxu0 0.0
    %4033 = vmatpush1.msra.mxu0 0.0
    %4034 = vmatprep.subr.mxu0 0.0
    %4035 = vmatpush1.msra.mxu0 0.0
    %4036 = vmatprep.subr.mxu0 0.0
    %4037 = vmatpush1.msra.mxu0 0.0
    %4038 = vmatprep.subr.mxu0 0.0
    %4039 = vmatpush1.msra.mxu0 0.0
    %4040 = vmatprep.subr.mxu0 0.0
    %4041 = vmatpush1.msra.mxu0 0.0
    %4042 = vmatprep.subr.mxu0 0.0
    %4043 = vmatpush1.msra.mxu0 0.0
    %4044 = vmatprep.subr.mxu0 0.0
    %4045 = vmatpush1.msra.mxu0 0.0
    %4046 = vmatprep.subr.mxu0 0.0
    %4047 = vmatpush1.msra.mxu0 0.0
    %4048 = vmatprep.subr.mxu0 0.0
    %4049 = vmatpush1.msra.mxu0 0.0
    %4050 = vmatprep.subr.mxu0 0.0
    %4051 = vmatpush1.msra.mxu0 0.0
    %4052 = vmatprep.subr.mxu0 0.0
    %4053 = vmatpush1.msra.mxu0 0.0
    %4054 = vmatprep.subr.mxu0 0.0
    %4055 = vmatpush1.msra.mxu0 0.0
    %4056 = vmatprep.subr.mxu0 0.0
    %4057 = vmatpush1.msra.mxu0 0.0
    %4058 = vmatprep.subr.mxu0 0.0
    %4059 = vmatpush1.msra.mxu0 %v3680
    %4060 = vmatprep.subr.mxu0 0.0
    %4061 = vmatpush1.msra.mxu0 %v3679
    %4062 = vmatprep.subr.mxu0 0.0
    %4063 = vmatpush2.msra.mxu0 0.0
    %4064 = vmatprep.subr.mxu0 0.0
    %4065 = vmatpush2.msra.mxu0 0.0
    %4066 = vmatprep.subr.mxu0 0.0
    %4067 = vmatpush2.msra.mxu0 0.0
    %4068 = vmatprep.subr.mxu0 0.0
    %4069 = vmatpush2.msra.mxu0 0.0
    %4070 = vmatprep.subr.mxu0 0.0
    %4071 = vmatpush2.msra.mxu0 0.0
    %4072 = vmatprep.subr.mxu0 0.0
    %4073 = vmatpush2.msra.mxu0 0.0
    %4074 = vmatprep.subr.mxu0 0.0
    %4075 = vmatpush2.msra.mxu0 0.0
    %4076 = vmatprep.subr.mxu0 0.0
    %4077 = vmatpush2.msra.mxu0 0.0
    %4078 = vmatprep.subr.mxu0 0.0
    %4079 = vmatpush2.msra.mxu0 0.0
    %4080 = vmatprep.subr.mxu0 0.0
    %4081 = vmatpush2.msra.mxu0 0.0
    %4082 = vmatprep.subr.mxu0 0.0
    %4083 = vmatpush2.msra.mxu0 0.0
    %4084 = vmatprep.subr.mxu0 0.0
    %4085 = vmatpush2.msra.mxu0 0.0
    %4086 = vmatprep.subr.mxu0 0.0
    %4087 = vmatpush2.msra.mxu0 0.0
    %4088 = vmatprep.subr.mxu0 0.0
    %4089 = vmatpush2.msra.mxu0 0.0
    %4090 = vmatprep.subr.mxu0 0.0
    %4091 = vmatpush2.msra.mxu0 0.0
    %4092 = vmatprep.subr.mxu0 0.0
    %4093 = vmatpush2.msra.mxu0 0.0
    %4094 = vmatprep.mubr.f32.mxu0 0.0
    %4095 = vmatmul.mubr.f32.gmra.mxu0 %v4028
    %v4096 = vpop.f32.mrf.mxu0
    %v4097 = vadd.f32 0.0, %v4096
    %v4098 = vpop.f32.mrf.mxu0
    %4099 = vdwg.mxu0
    %4100 = vmatprep.subr.mxu0 0.0
    %4101 = vmatpush1.msra.mxu0 0.0
    %4102 = vmatprep.subr.mxu0 0.0
    %4103 = vmatpush1.msra.mxu0 0.0
    %4104 = vmatprep.subr.mxu0 0.0
    %4105 = vmatpush1.msra.mxu0 0.0
    %4106 = vmatprep.subr.mxu0 0.0
    %4107 = vmatpush1.msra.mxu0 0.0
    %4108 = vmatprep.subr.mxu0 0.0
    %4109 = vmatpush1.msra.mxu0 0.0
    %4110 = vmatprep.subr.mxu0 0.0
    %4111 = vmatpush1.msra.mxu0 0.0
    %4112 = vmatprep.subr.mxu0 0.0
    %4113 = vmatpush1.msra.mxu0 0.0
    %4114 = vmatprep.subr.mxu0 0.0
    %4115 = vmatpush1.msra.mxu0 0.0
    %4116 = vmatprep.subr.mxu0 0.0
    %4117 = vmatpush1.msra.mxu0 0.0
    %4118 = vmatprep.subr.mxu0 0.0
    %4119 = vmatpush1.msra.mxu0 0.0
    %4120 = vmatprep.subr.mxu0 0.0
    %4121 = vmatpush1.msra.mxu0 0.0
    %4122 = vmatprep.subr.mxu0 0.0
    %4123 = vmatpush1.msra.mxu0 0.0
    %4124 = vmatprep.subr.mxu0 0.0
    %4125 = vmatpush1.msra.mxu0 0.0
    %4126 = vmatprep.subr.mxu0 0.0
    %4127 = vmatpush1.msra.mxu0 0.0
    %4128 = vmatprep.subr.mxu0 0.0
    %4129 = vmatpush1.msra.mxu0 %v3682
    %4130 = vmatprep.subr.mxu0 0.0
    %4131 = vmatpush1.msra.mxu0 %v3681
    %4132 = vmatprep.subr.mxu0 0.0
    %4133 = vmatpush2.msra.mxu0 0.0
    %4134 = vmatprep.subr.mxu0 0.0
    %4135 = vmatpush2.msra.mxu0 0.0
    %4136 = vmatprep.subr.mxu0 0.0
    %4137 = vmatpush2.msra.mxu0 0.0
    %4138 = vmatprep.subr.mxu0 0.0
    %4139 = vmatpush2.msra.mxu0 0.0
    %4140 = vmatprep.subr.mxu0 0.0
    %4141 = vmatpush2.msra.mxu0 0.0
    %4142 = vmatprep.subr.mxu0 0.0
    %4143 = vmatpush2.msra.mxu0 0.0
    %4144 = vmatprep.subr.mxu0 0.0
    %4145 = vmatpush2.msra.mxu0 0.0
    %4146 = vmatprep.subr.mxu0 0.0
    %4147 = vmatpush2.msra.mxu0 0.0
    %4148 = vmatprep.subr.mxu0 0.0
    %4149 = vmatpush2.msra.mxu0 0.0
    %4150 = vmatprep.subr.mxu0 0.0
    %4151 = vmatpush2.msra.mxu0 0.0
    %4152 = vmatprep.subr.mxu0 0.0
    %4153 = vmatpush2.msra.mxu0 0.0
    %4154 = vmatprep.subr.mxu0 0.0
    %4155 = vmatpush2.msra.mxu0 0.0
    %4156 = vmatprep.subr.mxu0 0.0
    %4157 = vmatpush2.msra.mxu0 0.0
    %4158 = vmatprep.subr.mxu0 0.0
    %4159 = vmatpush2.msra.mxu0 0.0
    %4160 = vmatprep.subr.mxu0 0.0
    %4161 = vmatpush2.msra.mxu0 0.0
    %4162 = vmatprep.subr.mxu0 0.0
    %4163 = vmatpush2.msra.mxu0 0.0
    %4164 = vmatprep.mubr.f32.mxu0 0.0
    %4165 = vmatmul.mubr.f32.gmra.mxu0 %v4028
    %v4166 = vpop.f32.mrf.mxu0
    %v4167 = vadd.f32 0.0, %v4166
    %v4168 = vpop.f32.mrf.mxu0
    %4169 = vdwg.mxu0
    %v4171 = vrot.slane %v4097, 4
    %v4173 = vadd.f32 %v3766, %v4171
    %v4174 = vsub.f32 0.0, %v4173
    %v4175 = vmul.f32 %v4174, 1.442695
    %v4176 = vpow.pop %v4175
    %v4177 = vadd.f32 %v4176, 1.0
    %v4178 = vrcp.pop %v4177
    %v4179 = vmul.f32 1.0, %v4178
    %v4181 = vrot.slane %v4167, 4
    %4182 = vrot.lane.b32.xlu0 %v4181, 16
    %v4183 = vpop.permute.xlu0 %4182
    %v4185 = vadd.f32 %v3766, %v4183
    %v4186 = vsub.f32 0.0, %v4185
    %v4187 = vmul.f32 %v4186, 1.442695
    %v4188 = vpow.pop %v4187
    %v4189 = vadd.f32 %v4188, 1.0
    %v4190 = vrcp.pop %v4189
    %v4191 = vmul.f32 1.0, %v4190
    %4192 = vmatprep.subr.mxu0 0.0
    %4193 = vmatpush1.msra.mxu0 0.0
    %4194 = vmatprep.subr.mxu0 0.0
    %4195 = vmatpush1.msra.mxu0 0.0
    %4196 = vmatprep.subr.mxu0 0.0
    %4197 = vmatpush1.msra.mxu0 0.0
    %4198 = vmatprep.subr.mxu0 0.0
    %4199 = vmatpush1.msra.mxu0 0.0
    %4200 = vmatprep.subr.mxu0 0.0
    %4201 = vmatpush1.msra.mxu0 0.0
    %4202 = vmatprep.subr.mxu0 0.0
    %4203 = vmatpush1.msra.mxu0 0.0
    %4204 = vmatprep.subr.mxu0 0.0
    %4205 = vmatpush1.msra.mxu0 0.0
    %4206 = vmatprep.subr.mxu0 0.0
    %4207 = vmatpush1.msra.mxu0 0.0
    %4208 = vmatprep.subr.mxu0 0.0
    %4209 = vmatpush1.msra.mxu0 0.0
    %4210 = vmatprep.subr.mxu0 0.0
    %4211 = vmatpush1.msra.mxu0 0.0
    %4212 = vmatprep.subr.mxu0 0.0
    %4213 = vmatpush1.msra.mxu0 0.0
    %4214 = vmatprep.subr.mxu0 0.0
    %4215 = vmatpush1.msra.mxu0 0.0
    %4216 = vmatprep.subr.mxu0 0.0
    %4217 = vmatpush1.msra.mxu0 0.0
    %4218 = vmatprep.subr.mxu0 0.0
    %4219 = vmatpush1.msra.mxu0 0.0
    %4220 = vmatprep.subr.mxu0 0.0
    %4221 = vmatpush1.msra.mxu0 %v3684
    %4222 = vmatprep.subr.mxu0 0.0
    %4223 = vmatpush1.msra.mxu0 %v3683
    %4224 = vmatprep.subr.mxu0 0.0
    %4225 = vmatpush2.msra.mxu0 0.0
    %4226 = vmatprep.subr.mxu0 0.0
    %4227 = vmatpush2.msra.mxu0 0.0
    %4228 = vmatprep.subr.mxu0 0.0
    %4229 = vmatpush2.msra.mxu0 0.0
    %4230 = vmatprep.subr.mxu0 0.0
    %4231 = vmatpush2.msra.mxu0 0.0
    %4232 = vmatprep.subr.mxu0 0.0
    %4233 = vmatpush2.msra.mxu0 0.0
    %4234 = vmatprep.subr.mxu0 0.0
    %4235 = vmatpush2.msra.mxu0 0.0
    %4236 = vmatprep.subr.mxu0 0.0
    %4237 = vmatpush2.msra.mxu0 0.0
    %4238 = vmatprep.subr.mxu0 0.0
    %4239 = vmatpush2.msra.mxu0 0.0
    %4240 = vmatprep.subr.mxu0 0.0
    %4241 = vmatpush2.msra.mxu0 0.0
    %4242 = vmatprep.subr.mxu0 0.0
    %4243 = vmatpush2.msra.mxu0 0.0
    %4244 = vmatprep.subr.mxu0 0.0
    %4245 = vmatpush2.msra.mxu0 0.0
    %4246 = vmatprep.subr.mxu0 0.0
    %4247 = vmatpush2.msra.mxu0 0.0
    %4248 = vmatprep.subr.mxu0 0.0
    %4249 = vmatpush2.msra.mxu0 0.0
    %4250 = vmatprep.subr.mxu0 0.0
    %4251 = vmatpush2.msra.mxu0 0.0
    %4252 = vmatprep.subr.mxu0 0.0
    %4253 = vmatpush2.msra.mxu0 0.0
    %4254 = vmatprep.subr.mxu0 0.0
    %4255 = vmatpush2.msra.mxu0 0.0
    %4256 = vmatprep.mubr.f32.mxu0 0.0
    %4257 = vmatmul.mubr.f32.gmra.mxu0 %v4028
    %v4258 = vpop.f32.mrf.mxu0
    %v4259 = vadd.f32 %v3778, %v4258
    %v4260 = vpop.f32.mrf.mxu0
    %4261 = vdwg.mxu0
    %v4263 = vrot.slane %v4259, 4
    %v4265 = vmul.f32 %v4179, %v4263
    %4267 = vrot.lane.b32.xlu0 %v4265, 32
    %v4268 = vpop.permute.xlu0 %4267
    %v4270 = vadd.f32 %v3766, %v4268
    %v4271 = vtanh.pop %v4270
    %v4272 = vsub.f32 1.0, %v4191
    %4274 = vrot.lane.b32.xlu0 %v4271, 112
    %v4275 = vpop.permute.xlu0 %4274
    %v4277 = vmul.f32 %v4272, %v4275
    %v4278 = vrot.slane %v4024, 4
    %v4280 = vmul.f32 %v4191, %v4278
    %v4281 = vadd.f32 %v4277, %v4280
    %v4283 = vrot.slane %v4281, 4
    %4284 = vrot.lane.b32.xlu0 %v4283, 112
    %v4285 = vpop.permute.xlu0 %4284
    %v4286 = vsel %vm3779, %v4285, 0
    %4288 = vmatprep.subr.mxu0 0.0
    %4289 = vmatpush1.msra.mxu0 0.0
    %4290 = vmatprep.subr.mxu0 0.0
    %4291 = vmatpush1.msra.mxu0 0.0
    %4292 = vmatprep.subr.mxu0 0.0
    %4293 = vmatpush1.msra.mxu0 0.0
    %4294 = vmatprep.subr.mxu0 0.0
    %4295 = vmatpush1.msra.mxu0 0.0
    %4296 = vmatprep.subr.mxu0 0.0
    %4297 = vmatpush1.msra.mxu0 0.0
    %4298 = vmatprep.subr.mxu0 0.0
    %4299 = vmatpush1.msra.mxu0 0.0
    %4300 = vmatprep.subr.mxu0 0.0
    %4301 = vmatpush1.msra.mxu0 0.0
    %4302 = vmatprep.subr.mxu0 0.0
    %4303 = vmatpush1.msra.mxu0 0.0
    %4304 = vmatprep.subr.mxu0 0.0
    %4305 = vmatpush1.msra.mxu0 0.0
    %4306 = vmatprep.subr.mxu0 0.0
    %4307 = vmatpush1.msra.mxu0 0.0
    %4308 = vmatprep.subr.mxu0 0.0
    %4309 = vmatpush1.msra.mxu0 0.0
    %4310 = vmatprep.subr.mxu0 0.0
    %4311 = vmatpush1.msra.mxu0 0.0
    %4312 = vmatprep.subr.mxu0 0.0
    %4313 = vmatpush1.msra.mxu0 0.0
    %4314 = vmatprep.subr.mxu0 0.0
    %4315 = vmatpush1.msra.mxu0 0.0
    %4316 = vmatprep.subr.mxu0 0.0
    %4317 = vmatpush1.msra.mxu0 %v3680
    %4318 = vmatprep.subr.mxu0 0.0
    %4319 = vmatpush1.msra.mxu0 %v3679
    %4320 = vmatprep.subr.mxu0 0.0
    %4321 = vmatpush2.msra.mxu0 0.0
    %4322 = vmatprep.subr.mxu0 0.0
    %4323 = vmatpush2.msra.mxu0 0.0
    %4324 = vmatprep.subr.mxu0 0.0
    %4325 = vmatpush2.msra.mxu0 0.0
    %4326 = vmatprep.subr.mxu0 0.0
    %4327 = vmatpush2.msra.mxu0 0.0
    %4328 = vmatprep.subr.mxu0 0.0
    %4329 = vmatpush2.msra.mxu0 0.0
    %4330 = vmatprep.subr.mxu0 0.0
    %4331 = vmatpush2.msra.mxu0 0.0
    %4332 = vmatprep.subr.mxu0 0.0
    %4333 = vmatpush2.msra.mxu0 0.0
    %4334 = vmatprep.subr.mxu0 0.0
    %4335 = vmatpush2.msra.mxu0 0.0
    %4336 = vmatprep.subr.mxu0 0.0
    %4337 = vmatpush2.msra.mxu0 0.0
    %4338 = vmatprep.subr.mxu0 0.0
    %4339 = vmatpush2.msra.mxu0 0.0
    %4340 = vmatprep.subr.mxu0 0.0
    %4341 = vmatpush2.msra.mxu0 0.0
    %4342 = vmatprep.subr.mxu0 0.0
    %4343 = vmatpush2.msra.mxu0 0.0
    %4344 = vmatprep.subr.mxu0 0.0
    %4345 = vmatpush2.msra.mxu0 0.0
    %4346 = vmatprep.subr.mxu0 0.0
    %4347 = vmatpush2.msra.mxu0 0.0
    %4348 = vmatprep.subr.mxu0 0.0
    %4349 = vmatpush2.msra.mxu0 0.0
    %4350 = vmatprep.subr.mxu0 0.0
    %4351 = vmatpush2.msra.mxu0 0.0
    %4352 = vmatprep.mubr.f32.mxu0 0.0
    %4353 = vmatmul.mubr.f32.gmra.mxu0 %v4286
    %v4354 = vpop.f32.mrf.mxu0
    %v4355 = vadd.f32 0.0, %v4354
    %v4356 = vpop.f32.mrf.mxu0
    %4357 = vdwg.mxu0
    %4358 = vmatprep.subr.mxu0 0.0
    %4359 = vmatpush1.msra.mxu0 0.0
    %4360 = vmatprep.subr.mxu0 0.0
    %4361 = vmatpush1.msra.mxu0 0.0
    %4362 = vmatprep.subr.mxu0 0.0
    %4363 = vmatpush1.msra.mxu0 0.0
    %4364 = vmatprep.subr.mxu0 0.0
    %4365 = vmatpush1.msra.mxu0 0.0
    %4366 = vmatprep.subr.mxu0 0.0
    %4367 = vmatpush1.msra.mxu0 0.0
    %4368 = vmatprep.subr.mxu0 0.0
    %4369 = vmatpush1.msra.mxu0 0.0
    %4370 = vmatprep.subr.mxu0 0.0
    %4371 = vmatpush1.msra.mxu0 0.0
    %4372 = vmatprep.subr.mxu0 0.0
    %4373 = vmatpush1.msra.mxu0 0.0
    %4374 = vmatprep.subr.mxu0 0.0
    %4375 = vmatpush1.msra.mxu0 0.0
    %4376 = vmatprep.subr.mxu0 0.0
    %4377 = vmatpush1.msra.mxu0 0.0
    %4378 = vmatprep.subr.mxu0 0.0
    %4379 = vmatpush1.msra.mxu0 0.0
    %4380 = vmatprep.subr.mxu0 0.0
    %4381 = vmatpush1.msra.mxu0 0.0
    %4382 = vmatprep.subr.mxu0 0.0
    %4383 = vmatpush1.msra.mxu0 0.0
    %4384 = vmatprep.subr.mxu0 0.0
    %4385 = vmatpush1.msra.mxu0 0.0
    %4386 = vmatprep.subr.mxu0 0.0
    %4387 = vmatpush1.msra.mxu0 %v3682
    %4388 = vmatprep.subr.mxu0 0.0
    %4389 = vmatpush1.msra.mxu0 %v3681
    %4390 = vmatprep.subr.mxu0 0.0
    %4391 = vmatpush2.msra.mxu0 0.0
    %4392 = vmatprep.subr.mxu0 0.0
    %4393 = vmatpush2.msra.mxu0 0.0
    %4394 = vmatprep.subr.mxu0 0.0
    %4395 = vmatpush2.msra.mxu0 0.0
    %4396 = vmatprep.subr.mxu0 0.0
    %4397 = vmatpush2.msra.mxu0 0.0
    %4398 = vmatprep.subr.mxu0 0.0
    %4399 = vmatpush2.msra.mxu0 0.0
    %4400 = vmatprep.subr.mxu0 0.0
    %4401 = vmatpush2.msra.mxu0 0.0
    %4402 = vmatprep.subr.mxu0 0.0
    %4403 = vmatpush2.msra.mxu0 0.0
    %4404 = vmatprep.subr.mxu0 0.0
    %4405 = vmatpush2.msra.mxu0 0.0
    %4406 = vmatprep.subr.mxu0 0.0
    %4407 = vmatpush2.msra.mxu0 0.0
    %4408 = vmatprep.subr.mxu0 0.0
    %4409 = vmatpush2.msra.mxu0 0.0
    %4410 = vmatprep.subr.mxu0 0.0
    %4411 = vmatpush2.msra.mxu0 0.0
    %4412 = vmatprep.subr.mxu0 0.0
    %4413 = vmatpush2.msra.mxu0 0.0
    %4414 = vmatprep.subr.mxu0 0.0
    %4415 = vmatpush2.msra.mxu0 0.0
    %4416 = vmatprep.subr.mxu0 0.0
    %4417 = vmatpush2.msra.mxu0 0.0
    %4418 = vmatprep.subr.mxu0 0.0
    %4419 = vmatpush2.msra.mxu0 0.0
    %4420 = vmatprep.subr.mxu0 0.0
    %4421 = vmatpush2.msra.mxu0 0.0
    %4422 = vmatprep.mubr.f32.mxu0 0.0
    %4423 = vmatmul.mubr.f32.gmra.mxu0 %v4286
    %v4424 = vpop.f32.mrf.mxu0
    %v4425 = vadd.f32 0.0, %v4424
    %v4426 = vpop.f32.mrf.mxu0
    %4427 = vdwg.mxu0
    %v4428 = vadd.f32 %v3771, %v4355
    %v4429 = vsub.f32 0.0, %v4428
    %v4430 = vmul.f32 %v4429, 1.442695
    %v4431 = vpow.pop %v4430
    %v4432 = vadd.f32 %v4431, 1.0
    %v4433 = vrcp.pop %v4432
    %v4434 = vmul.f32 1.0, %v4433
    %4436 = vrot.lane.b32.xlu0 %v4425, 16
    %v4437 = vpop.permute.xlu0 %4436
    %v4439 = vadd.f32 %v3771, %v4437
    %v4440 = vsub.f32 0.0, %v4439
    %v4441 = vmul.f32 %v4440, 1.442695
    %v4442 = vpow.pop %v4441
    %v4443 = vadd.f32 %v4442, 1.0
    %v4444 = vrcp.pop %v4443
    %v4445 = vmul.f32 1.0, %v4444
    %4446 = vmatprep.subr.mxu0 0.0
    %4447 = vmatpush1.msra.mxu0 0.0
    %4448 = vmatprep.subr.mxu0 0.0
    %4449 = vmatpush1.msra.mxu0 0.0
    %4450 = vmatprep.subr.mxu0 0.0
    %4451 = vmatpush1.msra.mxu0 0.0
    %4452 = vmatprep.subr.mxu0 0.0
    %4453 = vmatpush1.msra.mxu0 0.0
    %4454 = vmatprep.subr.mxu0 0.0
    %4455 = vmatpush1.msra.mxu0 0.0
    %4456 = vmatprep.subr.mxu0 0.0
    %4457 = vmatpush1.msra.mxu0 0.0
    %4458 = vmatprep.subr.mxu0 0.0
    %4459 = vmatpush1.msra.mxu0 0.0
    %4460 = vmatprep.subr.mxu0 0.0
    %4461 = vmatpush1.msra.mxu0 0.0
    %4462 = vmatprep.subr.mxu0 0.0
    %4463 = vmatpush1.msra.mxu0 0.0
    %4464 = vmatprep.subr.mxu0 0.0
    %4465 = vmatpush1.msra.mxu0 0.0
    %4466 = vmatprep.subr.mxu0 0.0
    %4467 = vmatpush1.msra.mxu0 0.0
    %4468 = vmatprep.subr.mxu0 0.0
    %4469 = vmatpush1.msra.mxu0 0.0
    %4470 = vmatprep.subr.mxu0 0.0
    %4471 = vmatpush1.msra.mxu0 0.0
    %4472 = vmatprep.subr.mxu0 0.0
    %4473 = vmatpush1.msra.mxu0 0.0
    %4474 = vmatprep.subr.mxu0 0.0
    %4475 = vmatpush1.msra.mxu0 %v3684
    %4476 = vmatprep.subr.mxu0 0.0
    %4477 = vmatpush1.msra.mxu0 %v3683
    %4478 = vmatprep.subr.mxu0 0.0
    %4479 = vmatpush2.msra.mxu0 0.0
    %4480 = vmatprep.subr.mxu0 0.0
    %4481 = vmatpush2.msra.mxu0 0.0
    %4482 = vmatprep.subr.mxu0 0.0
    %4483 = vmatpush2.msra.mxu0 0.0
    %4484 = vmatprep.subr.mxu0 0.0
    %4485 = vmatpush2.msra.mxu0 0.0
    %4486 = vmatprep.subr.mxu0 0.0
    %4487 = vmatpush2.msra.mxu0 0.0
    %4488 = vmatprep.subr.mxu0 0.0
    %4489 = vmatpush2.msra.mxu0 0.0
    %4490 = vmatprep.subr.mxu0 0.0
    %4491 = vmatpush2.msra.mxu0 0.0
    %4492 = vmatprep.subr.mxu0 0.0
    %4493 = vmatpush2.msra.mxu0 0.0
    %4494 = vmatprep.subr.mxu0 0.0
    %4495 = vmatpush2.msra.mxu0 0.0
    %4496 = vmatprep.subr.mxu0 0.0
    %4497 = vmatpush2.msra.mxu0 0.0
    %4498 = vmatprep.subr.mxu0 0.0
    %4499 = vmatpush2.msra.mxu0 0.0
    %4500 = vmatprep.subr.mxu0 0.0
    %4501 = vmatpush2.msra.mxu0 0.0
    %4502 = vmatprep.subr.mxu0 0.0
    %4503 = vmatpush2.msra.mxu0 0.0
    %4504 = vmatprep.subr.mxu0 0.0
    %4505 = vmatpush2.msra.mxu0 0.0
    %4506 = vmatprep.subr.mxu0 0.0
    %4507 = vmatpush2.msra.mxu0 0.0
    %4508 = vmatprep.subr.mxu0 0.0
    %4509 = vmatpush2.msra.mxu0 0.0
    %4510 = vmatprep.mubr.f32.mxu0 0.0
    %4511 = vmatmul.mubr.f32.gmra.mxu0 %v4286
    %v4512 = vpop.f32.mrf.mxu0
    %v4513 = vadd.f32 %v3778, %v4512
    %v4514 = vpop.f32.mrf.mxu0
    %4515 = vdwg.mxu0
    %v4516 = vmul.f32 %v4434, %v4513
    %4518 = vrot.lane.b32.xlu0 %v4516, 32
    %v4519 = vpop.permute.xlu0 %4518
    %v4521 = vadd.f32 %v3771, %v4519
    %v4522 = vtanh.pop %v4521
    %v4523 = vsub.f32 1.0, %v4445
    %4525 = vrot.lane.b32.xlu0 %v4522, 112
    %v4526 = vpop.permute.xlu0 %4525
    %v4528 = vmul.f32 %v4523, %v4526
    %v4530 = vmul.f32 %v4445, %v4283
    %v4531 = vadd.f32 %v4528, %v4530
    %4533 = vrot.lane.b32.xlu0 %v4531, 112
    %v4534 = vpop.permute.xlu0 %4533
    %v4535 = vsel %vm3779, %v4534, 0
    %4537 = vmatprep.subr.mxu0 0.0
    %4538 = vmatpush1.msra.mxu0 0.0
    %4539 = vmatprep.subr.mxu0 0.0
    %4540 = vmatpush1.msra.mxu0 0.0
    %4541 = vmatprep.subr.mxu0 0.0
    %4542 = vmatpush1.msra.mxu0 0.0
    %4543 = vmatprep.subr.mxu0 0.0
    %4544 = vmatpush1.msra.mxu0 0.0
    %4545 = vmatprep.subr.mxu0 0.0
    %4546 = vmatpush1.msra.mxu0 0.0
    %4547 = vmatprep.subr.mxu0 0.0
    %4548 = vmatpush1.msra.mxu0 0.0
    %4549 = vmatprep.subr.mxu0 0.0
    %4550 = vmatpush1.msra.mxu0 0.0
    %4551 = vmatprep.subr.mxu0 0.0
    %4552 = vmatpush1.msra.mxu0 0.0
    %4553 = vmatprep.subr.mxu0 0.0
    %4554 = vmatpush1.msra.mxu0 0.0
    %4555 = vmatprep.subr.mxu0 0.0
    %4556 = vmatpush1.msra.mxu0 0.0
    %4557 = vmatprep.subr.mxu0 0.0
    %4558 = vmatpush1.msra.mxu0 0.0
    %4559 = vmatprep.subr.mxu0 0.0
    %4560 = vmatpush1.msra.mxu0 0.0
    %4561 = vmatprep.subr.mxu0 0.0
    %4562 = vmatpush1.msra.mxu0 0.0
    %4563 = vmatprep.subr.mxu0 0.0
    %4564 = vmatpush1.msra.mxu0 0.0
    %4565 = vmatprep.subr.mxu0 0.0
    %4566 = vmatpush1.msra.mxu0 %v3680
    %4567 = vmatprep.subr.mxu0 0.0
    %4568 = vmatpush1.msra.mxu0 %v3679
    %4569 = vmatprep.subr.mxu0 0.0
    %4570 = vmatpush2.msra.mxu0 0.0
    %4571 = vmatprep.subr.mxu0 0.0
    %4572 = vmatpush2.msra.mxu0 0.0
    %4573 = vmatprep.subr.mxu0 0.0
    %4574 = vmatpush2.msra.mxu0 0.0
    %4575 = vmatprep.subr.mxu0 0.0
    %4576 = vmatpush2.msra.mxu0 0.0
    %4577 = vmatprep.subr.mxu0 0.0
    %4578 = vmatpush2.msra.mxu0 0.0
    %4579 = vmatprep.subr.mxu0 0.0
    %4580 = vmatpush2.msra.mxu0 0.0
    %4581 = vmatprep.subr.mxu0 0.0
    %4582 = vmatpush2.msra.mxu0 0.0
    %4583 = vmatprep.subr.mxu0 0.0
    %4584 = vmatpush2.msra.mxu0 0.0
    %4585 = vmatprep.subr.mxu0 0.0
    %4586 = vmatpush2.msra.mxu0 0.0
    %4587 = vmatprep.subr.mxu0 0.0
    %4588 = vmatpush2.msra.mxu0 0.0
    %4589 = vmatprep.subr.mxu0 0.0
    %4590 = vmatpush2.msra.mxu0 0.0
    %4591 = vmatprep.subr.mxu0 0.0
    %4592 = vmatpush2.msra.mxu0 0.0
    %4593 = vmatprep.subr.mxu0 0.0
    %4594 = vmatpush2.msra.mxu0 0.0
    %4595 = vmatprep.subr.mxu0 0.0
    %4596 = vmatpush2.msra.mxu0 0.0
    %4597 = vmatprep.subr.mxu0 0.0
    %4598 = vmatpush2.msra.mxu0 0.0
    %4599 = vmatprep.subr.mxu0 0.0
    %4600 = vmatpush2.msra.mxu0 0.0
    %4601 = vmatprep.mubr.f32.mxu0 0.0
    %4602 = vmatmul.mubr.f32.gmra.mxu0 %v4535
    %v4603 = vpop.f32.mrf.mxu0
    %v4604 = vadd.f32 0.0, %v4603
    %v4605 = vpop.f32.mrf.mxu0
    %4606 = vdwg.mxu0
    %4607 = vmatprep.subr.mxu0 0.0
    %4608 = vmatpush1.msra.mxu0 0.0
    %4609 = vmatprep.subr.mxu0 0.0
    %4610 = vmatpush1.msra.mxu0 0.0
    %4611 = vmatprep.subr.mxu0 0.0
    %4612 = vmatpush1.msra.mxu0 0.0
    %4613 = vmatprep.subr.mxu0 0.0
    %4614 = vmatpush1.msra.mxu0 0.0
    %4615 = vmatprep.subr.mxu0 0.0
    %4616 = vmatpush1.msra.mxu0 0.0
    %4617 = vmatprep.subr.mxu0 0.0
    %4618 = vmatpush1.msra.mxu0 0.0
    %4619 = vmatprep.subr.mxu0 0.0
    %4620 = vmatpush1.msra.mxu0 0.0
    %4621 = vmatprep.subr.mxu0 0.0
    %4622 = vmatpush1.msra.mxu0 0.0
    %4623 = vmatprep.subr.mxu0 0.0
    %4624 = vmatpush1.msra.mxu0 0.0
    %4625 = vmatprep.subr.mxu0 0.0
    %4626 = vmatpush1.msra.mxu0 0.0
    %4627 = vmatprep.subr.mxu0 0.0
    %4628 = vmatpush1.msra.mxu0 0.0
    %4629 = vmatprep.subr.mxu0 0.0
    %4630 = vmatpush1.msra.mxu0 0.0
    %4631 = vmatprep.subr.mxu0 0.0
    %4632 = vmatpush1.msra.mxu0 0.0
    %4633 = vmatprep.subr.mxu0 0.0
    %4634 = vmatpush1.msra.mxu0 0.0
    %4635 = vmatprep.subr.mxu0 0.0
    %4636 = vmatpush1.msra.mxu0 %v3682
    %4637 = vmatprep.subr.mxu0 0.0
    %4638 = vmatpush1.msra.mxu0 %v3681
    %4639 = vmatprep.subr.mxu0 0.0
    %4640 = vmatpush2.msra.mxu0 0.0
    %4641 = vmatprep.subr.mxu0 0.0
    %4642 = vmatpush2.msra.mxu0 0.0
    %4643 = vmatprep.subr.mxu0 0.0
    %4644 = vmatpush2.msra.mxu0 0.0
    %4645 = vmatprep.subr.mxu0 0.0
    %4646 = vmatpush2.msra.mxu0 0.0
    %4647 = vmatprep.subr.mxu0 0.0
    %4648 = vmatpush2.msra.mxu0 0.0
    %4649 = vmatprep.subr.mxu0 0.0
    %4650 = vmatpush2.msra.mxu0 0.0
    %4651 = vmatprep.subr.mxu0 0.0
    %4652 = vmatpush2.msra.mxu0 0.0
    %4653 = vmatprep.subr.mxu0 0.0
    %4654 = vmatpush2.msra.mxu0 0.0
    %4655 = vmatprep.subr.mxu0 0.0
    %4656 = vmatpush2.msra.mxu0 0.0
    %4657 = vmatprep.subr.mxu0 0.0
    %4658 = vmatpush2.msra.mxu0 0.0
    %4659 = vmatprep.subr.mxu0 0.0
    %4660 = vmatpush2.msra.mxu0 0.0
    %4661 = vmatprep.subr.mxu0 0.0
    %4662 = vmatpush2.msra.mxu0 0.0
    %4663 = vmatprep.subr.mxu0 0.0
    %4664 = vmatpush2.msra.mxu0 0.0
    %4665 = vmatprep.subr.mxu0 0.0
    %4666 = vmatpush2.msra.mxu0 0.0
    %4667 = vmatprep.subr.mxu0 0.0
    %4668 = vmatpush2.msra.mxu0 0.0
    %4669 = vmatprep.subr.mxu0 0.0
    %4670 = vmatpush2.msra.mxu0 0.0
    %4671 = vmatprep.mubr.f32.mxu0 0.0
    %4672 = vmatmul.mubr.f32.gmra.mxu0 %v4535
    %v4673 = vpop.f32.mrf.mxu0
    %v4674 = vadd.f32 0.0, %v4673
    %v4675 = vpop.f32.mrf.mxu0
    %4676 = vdwg.mxu0
    %v4678 = vrot.slane %v4604, 4
    %v4680 = vadd.f32 %v3771, %v4678
    %v4681 = vsub.f32 0.0, %v4680
    %v4682 = vmul.f32 %v4681, 1.442695
    %v4683 = vpow.pop %v4682
    %v4684 = vadd.f32 %v4683, 1.0
    %v4685 = vrcp.pop %v4684
    %v4686 = vmul.f32 1.0, %v4685
    %v4688 = vrot.slane %v4674, 4
    %4689 = vrot.lane.b32.xlu0 %v4688, 16
    %v4690 = vpop.permute.xlu0 %4689
    %v4692 = vadd.f32 %v3771, %v4690
    %v4693 = vsub.f32 0.0, %v4692
    %v4694 = vmul.f32 %v4693, 1.442695
    %v4695 = vpow.pop %v4694
    %v4696 = vadd.f32 %v4695, 1.0
    %v4697 = vrcp.pop %v4696
    %v4698 = vmul.f32 1.0, %v4697
    %4699 = vmatprep.subr.mxu0 0.0
    %4700 = vmatpush1.msra.mxu0 0.0
    %4701 = vmatprep.subr.mxu0 0.0
    %4702 = vmatpush1.msra.mxu0 0.0
    %4703 = vmatprep.subr.mxu0 0.0
    %4704 = vmatpush1.msra.mxu0 0.0
    %4705 = vmatprep.subr.mxu0 0.0
    %4706 = vmatpush1.msra.mxu0 0.0
    %4707 = vmatprep.subr.mxu0 0.0
    %4708 = vmatpush1.msra.mxu0 0.0
    %4709 = vmatprep.subr.mxu0 0.0
    %4710 = vmatpush1.msra.mxu0 0.0
    %4711 = vmatprep.subr.mxu0 0.0
    %4712 = vmatpush1.msra.mxu0 0.0
    %4713 = vmatprep.subr.mxu0 0.0
    %4714 = vmatpush1.msra.mxu0 0.0
    %4715 = vmatprep.subr.mxu0 0.0
    %4716 = vmatpush1.msra.mxu0 0.0
    %4717 = vmatprep.subr.mxu0 0.0
    %4718 = vmatpush1.msra.mxu0 0.0
    %4719 = vmatprep.subr.mxu0 0.0
    %4720 = vmatpush1.msra.mxu0 0.0
    %4721 = vmatprep.subr.mxu0 0.0
    %4722 = vmatpush1.msra.mxu0 0.0
    %4723 = vmatprep.subr.mxu0 0.0
    %4724 = vmatpush1.msra.mxu0 0.0
    %4725 = vmatprep.subr.mxu0 0.0
    %4726 = vmatpush1.msra.mxu0 0.0
    %4727 = vmatprep.subr.mxu0 0.0
    %4728 = vmatpush1.msra.mxu0 %v3684
    %4729 = vmatprep.subr.mxu0 0.0
    %4730 = vmatpush1.msra.mxu0 %v3683
    %4731 = vmatprep.subr.mxu0 0.0
    %4732 = vmatpush2.msra.mxu0 0.0
    %4733 = vmatprep.subr.mxu0 0.0
    %4734 = vmatpush2.msra.mxu0 0.0
    %4735 = vmatprep.subr.mxu0 0.0
    %4736 = vmatpush2.msra.mxu0 0.0
    %4737 = vmatprep.subr.mxu0 0.0
    %4738 = vmatpush2.msra.mxu0 0.0
    %4739 = vmatprep.subr.mxu0 0.0
    %4740 = vmatpush2.msra.mxu0 0.0
    %4741 = vmatprep.subr.mxu0 0.0
    %4742 = vmatpush2.msra.mxu0 0.0
    %4743 = vmatprep.subr.mxu0 0.0
    %4744 = vmatpush2.msra.mxu0 0.0
    %4745 = vmatprep.subr.mxu0 0.0
    %4746 = vmatpush2.msra.mxu0 0.0
    %4747 = vmatprep.subr.mxu0 0.0
    %4748 = vmatpush2.msra.mxu0 0.0
    %4749 = vmatprep.subr.mxu0 0.0
    %4750 = vmatpush2.msra.mxu0 0.0
    %4751 = vmatprep.subr.mxu0 0.0
    %4752 = vmatpush2.msra.mxu0 0.0
    %4753 = vmatprep.subr.mxu0 0.0
    %4754 = vmatpush2.msra.mxu0 0.0
    %4755 = vmatprep.subr.mxu0 0.0
    %4756 = vmatpush2.msra.mxu0 0.0
    %4757 = vmatprep.subr.mxu0 0.0
    %4758 = vmatpush2.msra.mxu0 0.0
    %4759 = vmatprep.subr.mxu0 0.0
    %4760 = vmatpush2.msra.mxu0 0.0
    %4761 = vmatprep.subr.mxu0 0.0
    %4762 = vmatpush2.msra.mxu0 0.0
    %4763 = vmatprep.mubr.f32.mxu0 0.0
    %4764 = vmatmul.mubr.f32.gmra.mxu0 %v4535
    %v4765 = vpop.f32.mrf.mxu0
    %v4766 = vadd.f32 %v3778, %v4765
    %v4767 = vpop.f32.mrf.mxu0
    %4768 = vdwg.mxu0
    %v4770 = vrot.slane %v4766, 4
    %v4772 = vmul.f32 %v4686, %v4770
    %4774 = vrot.lane.b32.xlu0 %v4772, 32
    %v4775 = vpop.permute.xlu0 %4774
    %v4777 = vadd.f32 %v3771, %v4775
    %v4778 = vtanh.pop %v4777
    %v4779 = vsub.f32 1.0, %v4698
    %4781 = vrot.lane.b32.xlu0 %v4778, 112
    %v4782 = vpop.permute.xlu0 %4781
    %v4784 = vmul.f32 %v4779, %v4782
    %v4785 = vrot.slane %v4531, 4
    %v4787 = vmul.f32 %v4698, %v4785
    %v4788 = vadd.f32 %v4784, %v4787
    %v4790 = vrot.slane %v4788, 4
    %4791 = vrot.lane.b32.xlu0 %v4790, 112
    %v4792 = vpop.permute.xlu0 %4791
    %v4793 = vsel %vm3779, %v4792, 0
    %4795 = vmatprep.subr.mxu0 0.0
    %4796 = vmatpush1.msra.mxu0 0.0
    %4797 = vmatprep.subr.mxu0 0.0
    %4798 = vmatpush1.msra.mxu0 0.0
    %4799 = vmatprep.subr.mxu0 0.0
    %4800 = vmatpush1.msra.mxu0 0.0
    %4801 = vmatprep.subr.mxu0 0.0
    %4802 = vmatpush1.msra.mxu0 0.0
    %4803 = vmatprep.subr.mxu0 0.0
    %4804 = vmatpush1.msra.mxu0 0.0
    %4805 = vmatprep.subr.mxu0 0.0
    %4806 = vmatpush1.msra.mxu0 0.0
    %4807 = vmatprep.subr.mxu0 0.0
    %4808 = vmatpush1.msra.mxu0 0.0
    %4809 = vmatprep.subr.mxu0 0.0
    %4810 = vmatpush1.msra.mxu0 0.0
    %4811 = vmatprep.subr.mxu0 0.0
    %4812 = vmatpush1.msra.mxu0 0.0
    %4813 = vmatprep.subr.mxu0 0.0
    %4814 = vmatpush1.msra.mxu0 0.0
    %4815 = vmatprep.subr.mxu0 0.0
    %4816 = vmatpush1.msra.mxu0 0.0
    %4817 = vmatprep.subr.mxu0 0.0
    %4818 = vmatpush1.msra.mxu0 0.0
    %4819 = vmatprep.subr.mxu0 0.0
    %4820 = vmatpush1.msra.mxu0 0.0
    %4821 = vmatprep.subr.mxu0 0.0
    %4822 = vmatpush1.msra.mxu0 0.0
    %4823 = vmatprep.subr.mxu0 0.0
    %4824 = vmatpush1.msra.mxu0 %v3590
    %4825 = vmatprep.subr.mxu0 0.0
    %4826 = vmatpush1.msra.mxu0 %v3589
    %4827 = vmatprep.subr.mxu0 0.0
    %4828 = vmatpush2.msra.mxu0 0.0
    %4829 = vmatprep.subr.mxu0 0.0
    %4830 = vmatpush2.msra.mxu0 0.0
    %4831 = vmatprep.subr.mxu0 0.0
    %4832 = vmatpush2.msra.mxu0 0.0
    %4833 = vmatprep.subr.mxu0 0.0
    %4834 = vmatpush2.msra.mxu0 0.0
    %4835 = vmatprep.subr.mxu0 0.0
    %4836 = vmatpush2.msra.mxu0 0.0
    %4837 = vmatprep.subr.mxu0 0.0
    %4838 = vmatpush2.msra.mxu0 0.0
    %4839 = vmatprep.subr.mxu0 0.0
    %4840 = vmatpush2.msra.mxu0 0.0
    %4841 = vmatprep.subr.mxu0 0.0
    %4842 = vmatpush2.msra.mxu0 0.0
    %4843 = vmatprep.subr.mxu0 0.0
    %4844 = vmatpush2.msra.mxu0 0.0
    %4845 = vmatprep.subr.mxu0 0.0
    %4846 = vmatpush2.msra.mxu0 0.0
    %4847 = vmatprep.subr.mxu0 0.0
    %4848 = vmatpush2.msra.mxu0 0.0
    %4849 = vmatprep.subr.mxu0 0.0
    %4850 = vmatpush2.msra.mxu0 0.0
    %4851 = vmatprep.subr.mxu0 0.0
    %4852 = vmatpush2.msra.mxu0 0.0
    %4853 = vmatprep.subr.mxu0 0.0
    %4854 = vmatpush2.msra.mxu0 0.0
    %4855 = vmatprep.subr.mxu0 0.0
    %4856 = vmatpush2.msra.mxu0 0.0
    %4857 = vmatprep.subr.mxu0 0.0
    %4858 = vmatpush2.msra.mxu0 0.0
    %4859 = vmatprep.mubr.f32.mxu0 0.0
    %4860 = vmatmul.mubr.f32.gmra.mxu0 %v4793
    %v4861 = vpop.f32.mrf.mxu0
    %v4862 = vadd.f32 0.0, %v4861
    %v4863 = vpop.f32.mrf.mxu0
    %4864 = vdwg.mxu0
    %v4865 = vadd.f32 %v3670, %v4862
    %v4866 = vrot.slane %v4788, 6
    %4867 = vrot.lane.b32.xlu0 %v4866, 112
    %v4868 = vpop.permute.xlu0 %4867
    %v4869 = vsel %vm3779, %v4868, 0
    %4871 = vmatprep.subr.mxu0 0.0
    %4872 = vmatpush1.msra.mxu0 0.0
    %4873 = vmatprep.subr.mxu0 0.0
    %4874 = vmatpush1.msra.mxu0 0.0
    %4875 = vmatprep.subr.mxu0 0.0
    %4876 = vmatpush1.msra.mxu0 0.0
    %4877 = vmatprep.subr.mxu0 0.0
    %4878 = vmatpush1.msra.mxu0 0.0
    %4879 = vmatprep.subr.mxu0 0.0
    %4880 = vmatpush1.msra.mxu0 0.0
    %4881 = vmatprep.subr.mxu0 0.0
    %4882 = vmatpush1.msra.mxu0 0.0
    %4883 = vmatprep.subr.mxu0 0.0
    %4884 = vmatpush1.msra.mxu0 0.0
    %4885 = vmatprep.subr.mxu0 0.0
    %4886 = vmatpush1.msra.mxu0 0.0
    %4887 = vmatprep.subr.mxu0 0.0
    %4888 = vmatpush1.msra.mxu0 0.0
    %4889 = vmatprep.subr.mxu0 0.0
    %4890 = vmatpush1.msra.mxu0 0.0
    %4891 = vmatprep.subr.mxu0 0.0
    %4892 = vmatpush1.msra.mxu0 0.0
    %4893 = vmatprep.subr.mxu0 0.0
    %4894 = vmatpush1.msra.mxu0 0.0
    %4895 = vmatprep.subr.mxu0 0.0
    %4896 = vmatpush1.msra.mxu0 0.0
    %4897 = vmatprep.subr.mxu0 0.0
    %4898 = vmatpush1.msra.mxu0 0.0
    %4899 = vmatprep.subr.mxu0 0.0
    %4900 = vmatpush1.msra.mxu0 %v3592
    %4901 = vmatprep.subr.mxu0 0.0
    %4902 = vmatpush1.msra.mxu0 %v3591
    %4903 = vmatprep.subr.mxu0 0.0
    %4904 = vmatpush2.msra.mxu0 0.0
    %4905 = vmatprep.subr.mxu0 0.0
    %4906 = vmatpush2.msra.mxu0 0.0
    %4907 = vmatprep.subr.mxu0 0.0
    %4908 = vmatpush2.msra.mxu0 0.0
    %4909 = vmatprep.subr.mxu0 0.0
    %4910 = vmatpush2.msra.mxu0 0.0
    %4911 = vmatprep.subr.mxu0 0.0
    %4912 = vmatpush2.msra.mxu0 0.0
    %4913 = vmatprep.subr.mxu0 0.0
    %4914 = vmatpush2.msra.mxu0 0.0
    %4915 = vmatprep.subr.mxu0 0.0
    %4916 = vmatpush2.msra.mxu0 0.0
    %4917 = vmatprep.subr.mxu0 0.0
    %4918 = vmatpush2.msra.mxu0 0.0
    %4919 = vmatprep.subr.mxu0 0.0
    %4920 = vmatpush2.msra.mxu0 0.0
    %4921 = vmatprep.subr.mxu0 0.0
    %4922 = vmatpush2.msra.mxu0 0.0
    %4923 = vmatprep.subr.mxu0 0.0
    %4924 = vmatpush2.msra.mxu0 0.0
    %4925 = vmatprep.subr.mxu0 0.0
    %4926 = vmatpush2.msra.mxu0 0.0
    %4927 = vmatprep.subr.mxu0 0.0
    %4928 = vmatpush2.msra.mxu0 0.0
    %4929 = vmatprep.subr.mxu0 0.0
    %4930 = vmatpush2.msra.mxu0 0.0
    %4931 = vmatprep.subr.mxu0 0.0
    %4932 = vmatpush2.msra.mxu0 0.0
    %4933 = vmatprep.subr.mxu0 0.0
    %4934 = vmatpush2.msra.mxu0 0.0
    %4935 = vmatprep.mubr.f32.mxu0 0.0
    %4936 = vmatmul.mubr.f32.gmra.mxu0 %v4869
    %v4937 = vpop.f32.mrf.mxu0
    %v4938 = vadd.f32 0.0, %v4937
    %v4939 = vpop.f32.mrf.mxu0
    %4940 = vdwg.mxu0
    %v4941 = vadd.f32 %v4865, %v4938
    %v4942 = vld [vmem:[%s1 + $0x8] sm:$0xff]
    %v4943 = vld [vmem:[%s1 + $0x18] sm:$0xff]
    %s4944 = sld [smem:[#allocation2 + $0x4]]
    %v4945 = vstv %s4944
    %v4946 = vadd.f32 %v4941, %v4945
    %s4947 = sld [smem:[#allocation2]]
    %v4948 = vstv %s4947
    %v4949 = vmul.f32 %v4948, %v4942
    %v4950 = vmul.f32 %v4948, %v4943
    %v4953 = vrot.slane %v4949, 4
    %v4954 = vrot.slane %v4950, 3
    %vm4955 = vcmask 1041409
    %v4956 = vsel %vm4955, %v4954, %v4953
    %v4958 = vadd.f32 %v4946, %v4956
    %s4959 = sld [smem:[#allocation2 + $0x1]]
    %v4960 = vstv %s4959
    %v4961 = vmul.f32 %v4960, %v4942
    %v4962 = vmul.f32 %v4960, %v4943
    %v4965 = vrot.slane %v4961, 5
    %v4966 = vrot.slane %v4962, 4
    %v4967 = vsel %vm4955, %v4966, %v4965
    %v4969 = vadd.f32 %v4958, %v4967
    %s4970 = sld [smem:[#allocation2 + $0x2]]
    %v4971 = vstv %s4970
    %v4972 = vmul.f32 %v4971, %v4942
    %v4973 = vmul.f32 %v4971, %v4943
    %v4976 = vrot.slane %v4972, 6
    %v4977 = vrot.slane %v4973, 5
    %v4978 = vsel %vm4955, %v4977, %v4976
    %v4980 = vadd.f32 %v4969, %v4978
    %s4981 = sld [smem:[#allocation2 + $0x3]]
    %v4982 = vstv %s4981
    %v4983 = vmul.f32 %v4982, %v4942
    %v4984 = vmul.f32 %v4982, %v4943
    %v4987 = vrot.slane %v4983, 7
    %v4988 = vrot.slane %v4984, 6
    %v4989 = vsel %vm4955, %v4988, %v4987
    %v4991 = vadd.f32 %v4980, %v4989
    %v4992 = vsub.f32 0.0, %v4991
    %v4993 = vmul.f32 %v4992, 1.442695
    %v4994 = vpow.pop %v4993
    %v4995 = vadd.f32 %v4994, 1.0
    %v4996 = vrcp.pop %v4995
    %v4997 = vmul.f32 1.0, %v4996
    %vm4998 = vcmask 58368
    %4999 = vst.msk [vmem:[#allocation5] sm:$0x3] %vm4998, %v4997
    // Predicated region
    $region22: #{fwd.1} parent=1 // pred_check
      _
    $region23: #{fwd.1} parent=1 // pred_check_branch
      %5001 = sbr.rel (0) target = $region25
    $region24: #{fwd.1} parent=1 // pred_region
      %s5003 = ssub.s32 32, 32
      %5004 = vsyncadd [#allocation3], %s5003
      %s5006 = sshll.u32 [#allocation5], 4
      %s5007 = int_to_ptr.vmem [resolvable:$true] %s5006
      %5009 = dma.vmem_to_hbm [thread:$0]  %s5007, 32, %s4, [#allocation3]
    $region25: #{fwd.1} parent=1 // pred_fallthru
      _
    // Predicated region
    $region26: #{fwd.1} parent=1 // pred_check
      _
    $region27: #{fwd.1} parent=1 // pred_check_branch
      %5011 = sbr.rel (0) target = $region29
    $region28: #{fwd.1} parent=1 // pred_region
      %5012 = dma.done [#allocation3], 32
    $region29: #{fwd.1} parent=1 // pred_fallthru
      _
    %5013 = vsyncpa [#allocation3], 1
    %5014 = vsyncpa [#allocation4], 1

</llo_original>
